<compile_context>
chip_gen: v5e
topology: v5e:2x2
jax: 0.10.0
libtpu: 0.0.40
codegen_flags: <defaults>
</compile_context>

<pallas_src>
import math

import jax
import jax.numpy as jnp
from jax.experimental import pallas as pl
from jax.experimental.pallas import tpu as pltpu


# ------------------------------ small helpers --------------------------------
def _round_up(x, m):
    return (x + m - 1) // m * m


def _cdiv(a, b):
    return -(-a // b)


# Cephes-style atanf (mul/add/div/abs/where only -> lowers cleanly on Mosaic).
def _atan_pos(z):
    # valid for z >= 0
    t3p8 = 2.414213562373095     # tan(3*pi/8)
    tp8 = 0.4142135623730950     # tan(pi/8)
    big = z > t3p8
    mid = (z > tp8) & jnp.logical_not(big)
    x = jnp.where(big, -1.0 / (z + 1e-30),
                  jnp.where(mid, (z - 1.0) / (z + 1.0), z))
    y0 = jnp.where(big, math.pi / 2.0, jnp.where(mid, math.pi / 4.0, 0.0))
    zz = x * x
    poly = (((8.05374449538e-2 * zz - 1.38776856032e-1) * zz
             + 1.99777106478e-1) * zz - 3.33329491539e-1) * zz * x + x
    return y0 + poly


def _atan(v):
    a = jnp.abs(v)
    r = _atan_pos(a)
    return jnp.where(v < 0, -r, r)


def _stable_sigmoid(v):
    # overflow-free sigmoid; exact division (the approx reciprocal was the
    # source of the previous correctness failure).
    e = jnp.exp(-jnp.abs(v))
    return jnp.where(v >= 0, 1.0, e) / (1.0 + e)


# ------------------------------- the kernel -----------------------------------
def _intersection_kernel(axis_ref, arg_ref,
                         w1_sum_ref, w1_diff_ref, b1_ref,
                         w_ax2_ref, b_ax2_ref,
                         w_ar2_ref, b_ar2_ref,
                         axis_out_ref, arg_out_ref):
    axis = axis_ref[...].astype(jnp.float32)        # (N, TB, D)
    arg = arg_ref[...].astype(jnp.float32)          # (N, TB, D)
    N, TB, D = axis.shape
    Dp = w1_sum_ref.shape[1] // 2                   # per-branch padded hidden width

    # bf16 operands for the MXU, f32 accumulation.
    axis_bf = axis.reshape(N * TB, D).astype(jnp.bfloat16)
    arg_bf = arg.reshape(N * TB, D).astype(jnp.bfloat16)

    # Fused first layer; the [axis-arg, axis+arg] concat is folded into
    # w1_sum / w1_diff; columns [:Dp] = axis branch, [Dp:] = arg branch.
    h = jnp.dot(axis_bf, w1_sum_ref[...], preferred_element_type=jnp.float32)
    h = h + jnp.dot(arg_bf, w1_diff_ref[...], preferred_element_type=jnp.float32)
    h = jnp.maximum(h + b1_ref[...], 0.0)           # (N*TB, 2*Dp) f32

    # Both consumers of h back-to-back so its live range ends before the
    # long elementwise chain (lower VMEM high-water mark).
    h_ax = h[:, :Dp].astype(jnp.bfloat16)           # tile-aligned split
    scores = (jnp.dot(h_ax, w_ax2_ref[...], preferred_element_type=jnp.float32)
              + b_ax2_ref[...]).reshape(N, TB, D)
    h_mean = jnp.mean(h[:, Dp:].reshape(N, TB, Dp), axis=0).astype(jnp.bfloat16)
    g = (jnp.dot(h_mean, w_ar2_ref[...], preferred_element_type=jnp.float32)
         + b_ar2_ref[...])                          # (TB, D)

    # ---- arg branch: DeepSets gate ----
    gate = _stable_sigmoid(g)
    arg_min = jnp.min(arg, axis=0)                  # (TB, D)
    # TODO(synk): nn.Dropout implemented as identity (inference / eval mode).
    arg_out_ref[...] = (arg_min * gate).astype(arg_out_ref.dtype)

    # ---- axis branch: attention over the N conjuncts ----
    ca = jnp.cos(axis)
    sa = jnp.sin(axis)
    if N == 2:
        # softmax over 2 elements == sigmoid of the score difference
        att0 = _stable_sigmoid(scores[0] - scores[1])
        x = ca[1] + att0 * (ca[0] - ca[1])          # 1-mul blend
        y = sa[1] + att0 * (sa[0] - sa[1])
    else:
        m = jnp.max(scores, axis=0, keepdims=True)
        e = jnp.exp(scores - m)
        att = e / jnp.sum(e, axis=0, keepdims=True)
        x = jnp.sum(att * ca, axis=0)
        y = jnp.sum(att * sa, axis=0)

    # avoid nan tangent: x[|x| < 1e-3] = 1e-3 (sign ignored, as in reference)
    x = jnp.where(jnp.abs(x) < 1e-3, 1e-3, x)
    ax = _atan(y / x)
    neg_x = x < 0
    neg_y = y < 0
    ax = jnp.where(neg_x & jnp.logical_not(neg_y), ax + math.pi, ax)
    ax = jnp.where(neg_x & neg_y, ax - math.pi, ax)
    axis_out_ref[...] = ax.astype(axis_out_ref.dtype)


# --------------------------- parameter preparation ----------------------------
def prepare_params(params, compute_dtype=jnp.bfloat16):
    """One-time fold/pad/cast of the module weights (hoisted out of the call path).

    Folds the [axis-arg, axis+arg] concat into the first-layer weights:
       logits @ W == axis @ (W[:D]+W[D:]) + arg @ (W[D:]-W[:D])
    and fuses the two first-layer branches along the (per-branch 128-padded)
    output dim.  Matmul weights are cast to bf16; biases stay f32.
    """
    f32 = jnp.float32
    D = params["w_axis2"].shape[0]
    Dp = _round_up(D, 128)

    w_ax1 = params["w_axis1"].astype(f32)            # (2D, D)
    w_ar1 = params["w_arg1"].astype(f32)             # (2D, D)

    w1_sum = jnp.zeros((D, 2 * Dp), f32)
    w1_sum = w1_sum.at[:, :D].set(w_ax1[:D] + w_ax1[D:])
    w1_sum = w1_sum.at[:, Dp:Dp + D].set(w_ar1[:D] + w_ar1[D:])
    w1_diff = jnp.zeros((D, 2 * Dp), f32)
    w1_diff = w1_diff.at[:, :D].set(w_ax1[D:] - w_ax1[:D])
    w1_diff = w1_diff.at[:, Dp:Dp + D].set(w_ar1[D:] - w_ar1[:D])
    b1 = jnp.zeros((1, 2 * Dp), f32)
    b1 = b1.at[:, :D].set(params["b_axis1"].astype(f32))
    b1 = b1.at[:, Dp:Dp + D].set(params["b_arg1"].astype(f32))

    def pad_w2(w):    # (D, D) -> (Dp, D); padded rows are never touched (h pad cols are 0)
        return jnp.zeros((Dp, D), f32).at[:D, :].set(w.astype(f32))

    return dict(
        dim=D, hidden=Dp,
        w1_sum=w1_sum.astype(compute_dtype),
        w1_diff=w1_diff.astype(compute_dtype),
        b1=b1,
        w_ax2=pad_w2(params["w_axis2"]).astype(compute_dtype),
        b_ax2=params["b_axis2"].astype(f32).reshape(1, D),
        w_ar2=pad_w2(params["w_arg2"]).astype(compute_dtype),
        b_ar2=params["b_arg2"].astype(f32).reshape(1, D),
    )


# ------------------------------ tiling heuristics ------------------------------
def _vmem_capacity():
    try:
        info = pltpu.get_tpu_info()
        cap = int(getattr(info, "vmem_capacity_bytes", 0))
        if cap > 0:
            return cap
    except Exception:
        pass
    return 64 << 20          # conservative (v7x per-TC figure)


def _pick_tiling(N, B, D, Dp, weight_bytes, vmem_cap):
    Dl = _round_up(D, 128)                     # lane-padded width as stored in VMEM
    act = 2 * 2 * N * Dl * 4                   # axis+arg input blocks, double-buffered
    outs = 2 * 2 * Dl * 4                      # two output blocks, double-buffered
    inter = (N * 2 * Dp * 4                    # h (f32)
             + N * Dp * 2                      # bf16 copy of h_ax
             + N * Dl * 4                      # scores
             + Dp * 2                          # bf16 h_mean
             + 2 * N * Dl * 4                  # cos/sin of axis
             + 10 * Dl * 4)                    # x, y, att, gate, misc temporaries
    per_row = act + outs + inter

    budget = int(vmem_cap * 0.6) - 2 * weight_bytes - (4 << 20)
    tb_max = max(8, min(1024, budget // max(per_row, 1)))
    tb_max = (tb_max // 8) * 8

    Bp8 = _round_up(B, 8)
    min_steps = 2 if Bp8 >= 16 else 1          # keep both v7x TensorCores busy
    n_steps = max(min_steps, _cdiv(Bp8, tb_max))
    TB = _round_up(_cdiv(Bp8, n_steps), 8)
    Bp = TB * n_steps

    est = 2 * weight_bytes + 2 * per_row * TB + (4 << 20)
    vmem_limit = int(min(vmem_cap * 0.9, max(est, 32 << 20)))
    return TB, Bp, n_steps, vmem_limit


# --------------------------------- wrapper -------------------------------------
def entity_intersection(axis_emb, arg_emb, params, *, batch_tile=None):
    prepped = params if "w1_sum" in params else prepare_params(params)
    N, B, D = axis_emb.shape
    assert prepped["dim"] == D
    Dp = prepped["hidden"]

    w_args = (prepped["w1_sum"], prepped["w1_diff"], prepped["b1"],
              prepped["w_ax2"], prepped["b_ax2"],
              prepped["w_ar2"], prepped["b_ar2"])
    weight_bytes = sum(int(w.size) * w.dtype.itemsize for w in w_args)

    TB, Bp, n_steps, vmem_limit = _pick_tiling(N, B, D, Dp, weight_bytes,
                                               _vmem_capacity())
    if batch_tile is not None:
        TB = max(8, (batch_tile // 8) * 8)
        n_steps = _cdiv(_round_up(B, 8), TB)
        Bp = TB * n_steps

    # Pad only the batch axis (cheap).  The feature axis stays at its logical
    # width D -- no HBM-side lane-padded copies of the activations.
    if Bp != B:
        axis_in = jnp.zeros((N, Bp, D), axis_emb.dtype).at[:, :B].set(axis_emb)
        arg_in = jnp.zeros((N, Bp, D), arg_emb.dtype).at[:, :B].set(arg_emb)
    else:
        axis_in, arg_in = axis_emb, arg_emb

    act_spec = pl.BlockSpec((N, TB, D), lambda i: (0, i, 0))
    out_spec = pl.BlockSpec((TB, D), lambda i: (i, 0))

    def make_call(single_buffer_weights):
        def wspec(shape):
            if single_buffer_weights:
                # constant index_map + single buffer: weights stay VMEM-resident
                # without a second (useless) pipeline buffer.
                return pl.BlockSpec(shape, lambda i: (0, 0),
                                    pipeline_mode=pl.Buffered(1))
            return pl.BlockSpec(shape, lambda i: (0, 0))

        return pl.pallas_call(
            _intersection_kernel,
            out_shape=(jax.ShapeDtypeStruct((Bp, D), axis_emb.dtype),
                       jax.ShapeDtypeStruct((Bp, D), arg_emb.dtype)),
            grid=(n_steps,),
            in_specs=[act_spec, act_spec,
                      wspec((D, 2 * Dp)), wspec((D, 2 * Dp)), wspec((1, 2 * Dp)),
                      wspec((Dp, D)), wspec((1, D)),
                      wspec((Dp, D)), wspec((1, D))],
            out_specs=(out_spec, out_spec),
            compiler_params=pltpu.CompilerParams(
                dimension_semantics=("parallel",),
                vmem_limit_bytes=vmem_limit),
        )

    args = (axis_in, arg_in) + w_args
    try:
        axis_out, arg_out = make_call(True)(*args)
    except Exception:
        # pl.Buffered(1) single-buffered weights unsupported -> default pipelining.
        axis_out, arg_out = make_call(False)(*args)

    if Bp != B:
        axis_out, arg_out = axis_out[:B], arg_out[:B]
    return axis_out, arg_out


# ------------------------------ parameter init ---------------------------------
def _xavier_uniform(key, fan_in, fan_out):
    bound = math.sqrt(6.0 / (fan_in + fan_out))
    return jax.random.uniform(key, (fan_in, fan_out), jnp.float32, -bound, bound)


def init_params(key, dim):
    ks = jax.random.split(key, 8)

    def bias(k, fan_in):
        b = 1.0 / math.sqrt(fan_in)
        return jax.random.uniform(k, (1, dim), jnp.float32, -b, b)

    return dict(
        w_axis1=_xavier_uniform(ks[0], 2 * dim, dim), b_axis1=bias(ks[1], 2 * dim),
        w_axis2=_xavier_uniform(ks[2], dim, dim),     b_axis2=bias(ks[3], dim),
        w_arg1=_xavier_uniform(ks[4], 2 * dim, dim),  b_arg1=bias(ks[5], 2 * dim),
        w_arg2=_xavier_uniform(ks[6], dim, dim),      b_arg2=bias(ks[7], dim),
    )


# ----------------------------- pure-JAX reference -------------------------------
def _reference(axis, arg, p):
    logits = jnp.concatenate([axis - arg, axis + arg], axis=-1)
    h_ax = jax.nn.relu(logits @ p["w_axis1"] + p["b_axis1"])
    att = jax.nn.softmax(h_ax @ p["w_axis2"] + p["b_axis2"], axis=0)
    x = jnp.sum(att * jnp.cos(axis), axis=0)
    y = jnp.sum(att * jnp.sin(axis), axis=0)
    x = jnp.where(jnp.abs(x) < 1e-3, 1e-3, x)
    ax = jnp.arctan(y / x)
    ax = jnp.where((x < 0) & ~(y < 0), ax + math.pi, ax)
    ax = jnp.where((x < 0) & (y < 0), ax - math.pi, ax)
    h_ar = jax.nn.relu(logits @ p["w_arg1"] + p["b_arg1"])
    gate = jax.nn.sigmoid(jnp.mean(h_ar, axis=0) @ p["w_arg2"] + p["b_arg2"])
    # x*x + y*y is returned only for test conditioning (how well-posed atan2 is).
    return ax, jnp.min(arg, axis=0) * gate, x * x + y * y


# ----------------------------------- main ---------------------------------------
if __name__ == "__main__":
    N, B, D = 2, 16, 32          # (num_conjuncts, batch, dim) -- small demo shapes
    key = jax.random.PRNGKey(0)
    k_axis, k_arg, k_params = jax.random.split(key, 3)

    axis_emb = jax.random.uniform(k_axis, (N, B, D), jnp.float32,
                                  minval=-math.pi, maxval=math.pi)
    arg_emb = jax.random.uniform(k_arg, (N, B, D), jnp.float32,
                                 minval=0.0, maxval=math.pi)
    params = init_params(k_params, D)
    prepped = prepare_params(params)       # one-time fold / pad / bf16 cast

    axis_out, arg_out = entity_intersection(axis_emb, arg_emb, prepped)
    jax.block_until_ready((axis_out, arg_out))

    ref_axis, ref_arg, ref_r2 = _reference(axis_emb, arg_emb, params)
    assert axis_out.shape == (B, D) and arg_out.shape == (B, D)

    # arg branch is smooth: bf16 MXU operands + f32 accumulation stay tight.
    assert jnp.allclose(arg_out, ref_arg, atol=2e-2, rtol=2e-2), (
        float(jnp.max(jnp.abs(arg_out - ref_arg))))

    # The axis output is an angle: compare modulo 2*pi (the atan2 branch cut at
    # y==0, x<0 maps +pi and -pi to the same direction), and only where the
    # attention-weighted resultant (x, y) is not near zero -- there the module's
    # own output is ill-conditioned and bf16 rounding can yield a different but
    # equally valid angle.
    diff = axis_out - ref_axis
    diff = jnp.mod(diff + math.pi, 2.0 * math.pi) - math.pi
    well_conditioned = ref_r2 > 0.04
    max_err = jnp.max(jnp.where(well_conditioned, jnp.abs(diff), 0.0))
    assert max_err < 5e-2, float(max_err)

    print("KERNEL_OK")
</pallas_src>

<mosaic_0001>
module attributes {stable_mosaic.version = 11 : i64} {
  func.func @_intersection_kernel(%arg0: i32, %arg1: memref<2x8x32xf32, #tpu.memory_space<vmem>>, %arg2: memref<2x8x32xf32, #tpu.memory_space<vmem>>, %arg3: memref<32x256xbf16, #tpu.memory_space<vmem>>, %arg4: memref<32x256xbf16, #tpu.memory_space<vmem>>, %arg5: memref<1x256xf32, #tpu.memory_space<vmem>>, %arg6: memref<128x32xbf16, #tpu.memory_space<vmem>>, %arg7: memref<1x32xf32, #tpu.memory_space<vmem>>, %arg8: memref<128x32xbf16, #tpu.memory_space<vmem>>, %arg9: memref<1x32xf32, #tpu.memory_space<vmem>>, %arg10: memref<8x32xf32, #tpu.memory_space<vmem>>, %arg11: memref<8x32xf32, #tpu.memory_space<vmem>>) attributes {dimension_semantics = [#tpu.dimension_semantics<parallel>], iteration_bounds = array<i64: 2>, scalar_prefetch = 0 : i64, scratch_operands = 0 : i64, tpu.core_type = #tpu.core_type<tc>, window_params = [{transform_indices = @transform_0, window_bounds = array<i64: 2, 8, 32>}, {transform_indices = @transform_1, window_bounds = array<i64: 2, 8, 32>}, {pipeline_mode = #tpu.pipeline_mode<synchronous>, transform_indices = @transform_2, window_bounds = array<i64: 32, 256>}, {pipeline_mode = #tpu.pipeline_mode<synchronous>, transform_indices = @transform_3, window_bounds = array<i64: 32, 256>}, {pipeline_mode = #tpu.pipeline_mode<synchronous>, transform_indices = @transform_4, window_bounds = array<i64: 1, 256>}, {pipeline_mode = #tpu.pipeline_mode<synchronous>, transform_indices = @transform_5, window_bounds = array<i64: 128, 32>}, {pipeline_mode = #tpu.pipeline_mode<synchronous>, transform_indices = @transform_6, window_bounds = array<i64: 1, 32>}, {pipeline_mode = #tpu.pipeline_mode<synchronous>, transform_indices = @transform_7, window_bounds = array<i64: 128, 32>}, {pipeline_mode = #tpu.pipeline_mode<synchronous>, transform_indices = @transform_8, window_bounds = array<i64: 1, 32>}, {transform_indices = @transform_9, window_bounds = array<i64: 8, 32>}, {transform_indices = @transform_10, window_bounds = array<i64: 8, 32>}]} {
    %c0 = arith.constant 0 : index
    %c0_0 = arith.constant 0 : index
    %c0_1 = arith.constant 0 : index
    %0 = vector.load %arg1[%c0, %c0_0, %c0_1] : memref<2x8x32xf32, #tpu.memory_space<vmem>>, vector<2x8x32xf32>
    %c0_2 = arith.constant 0 : index
    %c0_3 = arith.constant 0 : index
    %c0_4 = arith.constant 0 : index
    %1 = vector.load %arg2[%c0_2, %c0_3, %c0_4] : memref<2x8x32xf32, #tpu.memory_space<vmem>>, vector<2x8x32xf32>
    %2 = vector.shape_cast %0 : vector<2x8x32xf32> to vector<16x32xf32>
    %3 = arith.truncf %2 : vector<16x32xf32> to vector<16x32xbf16>
    %4 = vector.shape_cast %1 : vector<2x8x32xf32> to vector<16x32xf32>
    %5 = arith.truncf %4 : vector<16x32xf32> to vector<16x32xbf16>
    %c0_5 = arith.constant 0 : index
    %c0_6 = arith.constant 0 : index
    %6 = vector.load %arg3[%c0_5, %c0_6] : memref<32x256xbf16, #tpu.memory_space<vmem>>, vector<32x256xbf16>
    %cst = arith.constant dense<0.000000e+00> : vector<16x256xf32>
    %7 = tpu.matmul %3, %6, %cst {dimension_numbers = #tpu.dot_dimension_numbers<[1], [0], [0], [1], [0, 0, 1, 1], [], []>} : vector<16x32xbf16>, vector<32x256xbf16>, vector<16x256xf32> -> vector<16x256xf32>
    %c0_7 = arith.constant 0 : index
    %c0_8 = arith.constant 0 : index
    %8 = vector.load %arg4[%c0_7, %c0_8] : memref<32x256xbf16, #tpu.memory_space<vmem>>, vector<32x256xbf16>
    %cst_9 = arith.constant dense<0.000000e+00> : vector<16x256xf32>
    %9 = tpu.matmul %5, %8, %cst_9 {dimension_numbers = #tpu.dot_dimension_numbers<[1], [0], [0], [1], [0, 0, 1, 1], [], []>} : vector<16x32xbf16>, vector<32x256xbf16>, vector<16x256xf32> -> vector<16x256xf32>
    %10 = arith.addf %7, %9 : vector<16x256xf32>
    %c0_10 = arith.constant 0 : index
    %c0_11 = arith.constant 0 : index
    %11 = vector.load %arg5[%c0_10, %c0_11] : memref<1x256xf32, #tpu.memory_space<vmem>>, vector<1x256xf32>
    %12 = vector.broadcast %11 : vector<1x256xf32> to vector<16x256xf32>
    %13 = arith.addf %10, %12 : vector<16x256xf32>
    %cst_12 = arith.constant 0.000000e+00 : f32
    %14 = vector.broadcast %cst_12 : f32 to vector<16x256xf32>
    %15 = arith.maximumf %13, %14 : vector<16x256xf32>
    %16 = vector.extract_strided_slice %15 {offsets = [0, 0], sizes = [16, 128], strides = [1, 1]} : vector<16x256xf32> to vector<16x128xf32>
    %17 = arith.truncf %16 : vector<16x128xf32> to vector<16x128xbf16>
    %c0_13 = arith.constant 0 : index
    %c0_14 = arith.constant 0 : index
    %18 = vector.load %arg6[%c0_13, %c0_14] : memref<128x32xbf16, #tpu.memory_space<vmem>>, vector<128x32xbf16>
    %cst_15 = arith.constant dense<0.000000e+00> : vector<16x32xf32>
    %19 = tpu.matmul %17, %18, %cst_15 {dimension_numbers = #tpu.dot_dimension_numbers<[1], [0], [0], [1], [0, 0, 1, 1], [], []>} : vector<16x128xbf16>, vector<128x32xbf16>, vector<16x32xf32> -> vector<16x32xf32>
    %c0_16 = arith.constant 0 : index
    %c0_17 = arith.constant 0 : index
    %20 = vector.load %arg7[%c0_16, %c0_17] : memref<1x32xf32, #tpu.memory_space<vmem>>, vector<1x32xf32>
    %21 = vector.broadcast %20 : vector<1x32xf32> to vector<16x32xf32>
    %22 = arith.addf %19, %21 : vector<16x32xf32>
    %23 = vector.shape_cast %22 : vector<16x32xf32> to vector<2x8x32xf32>
    %24 = vector.extract_strided_slice %15 {offsets = [0, 128], sizes = [16, 128], strides = [1, 1]} : vector<16x256xf32> to vector<16x128xf32>
    %25 = vector.shape_cast %24 : vector<16x128xf32> to vector<2x8x128xf32>
    %cst_18 = arith.constant dense<0.000000e+00> : vector<8x128xf32>
    %26 = vector.multi_reduction <add>, %25, %cst_18 [0] : vector<2x8x128xf32> to vector<8x128xf32>
    %cst_19 = arith.constant 2.000000e+00 : f32
    %27 = vector.broadcast %cst_19 : f32 to vector<8x128xf32>
    %28 = arith.divf %26, %27 : vector<8x128xf32>
    %29 = arith.truncf %28 : vector<8x128xf32> to vector<8x128xbf16>
    %c0_20 = arith.constant 0 : index
    %c0_21 = arith.constant 0 : index
    %30 = vector.load %arg8[%c0_20, %c0_21] : memref<128x32xbf16, #tpu.memory_space<vmem>>, vector<128x32xbf16>
    %cst_22 = arith.constant dense<0.000000e+00> : vector<8x32xf32>
    %31 = tpu.matmul %29, %30, %cst_22 {dimension_numbers = #tpu.dot_dimension_numbers<[1], [0], [0], [1], [0, 0, 1, 1], [], []>} : vector<8x128xbf16>, vector<128x32xbf16>, vector<8x32xf32> -> vector<8x32xf32>
    %c0_23 = arith.constant 0 : index
    %c0_24 = arith.constant 0 : index
    %32 = vector.load %arg9[%c0_23, %c0_24] : memref<1x32xf32, #tpu.memory_space<vmem>>, vector<1x32xf32>
    %33 = vector.broadcast %32 : vector<1x32xf32> to vector<8x32xf32>
    %34 = arith.addf %31, %33 : vector<8x32xf32>
    %35 = math.absf %34 : vector<8x32xf32>
    %cst_25 = arith.constant 0.000000e+00 : f32
    %36 = vector.broadcast %cst_25 : f32 to vector<8x32xf32>
    %37 = arith.subf %36, %35 : vector<8x32xf32>
    %38 = math.exp %37 : vector<8x32xf32>
    %cst_26 = arith.constant 0.000000e+00 : f32
    %39 = vector.broadcast %cst_26 : f32 to vector<8x32xf32>
    %40 = arith.cmpf oge, %34, %39 : vector<8x32xf32>
    %cst_27 = arith.constant 1.000000e+00 : f32
    %41 = vector.broadcast %cst_27 : f32 to vector<8x32xf32>
    %42 = arith.select %40, %41, %38 : vector<8x32xi1>, vector<8x32xf32>
    %cst_28 = arith.constant 1.000000e+00 : f32
    %43 = vector.broadcast %cst_28 : f32 to vector<8x32xf32>
    %44 = arith.addf %43, %38 : vector<8x32xf32>
    %45 = arith.divf %42, %44 : vector<8x32xf32>
    %cst_29 = arith.constant dense<0x7F800000> : vector<8x32xf32>
    %46 = vector.multi_reduction <minimumf>, %1, %cst_29 [0] : vector<2x8x32xf32> to vector<8x32xf32>
    %47 = arith.mulf %46, %45 : vector<8x32xf32>
    %c0_30 = arith.constant 0 : index
    %c0_31 = arith.constant 0 : index
    %48 = vector.load %arg11[%c0_30, %c0_31] : memref<8x32xf32, #tpu.memory_space<vmem>>, vector<8x32xf32>
    tpu.vector_store %arg11[%c0_30, %c0_31], %47 {strides = array<i32>} : memref<8x32xf32, #tpu.memory_space<vmem>>, vector<8x32xf32>,
    %49 = math.cos %0 : vector<2x8x32xf32>
    %50 = math.sin %0 : vector<2x8x32xf32>
    %51 = vector.extract_strided_slice %23 {offsets = [0, 0, 0], sizes = [1, 8, 32], strides = [1, 1, 1]} : vector<2x8x32xf32> to vector<1x8x32xf32>
    %52 = vector.shape_cast %51 : vector<1x8x32xf32> to vector<8x32xf32>
    %53 = vector.extract_strided_slice %23 {offsets = [1, 0, 0], sizes = [1, 8, 32], strides = [1, 1, 1]} : vector<2x8x32xf32> to vector<1x8x32xf32>
    %54 = vector.shape_cast %53 : vector<1x8x32xf32> to vector<8x32xf32>
    %55 = arith.subf %52, %54 : vector<8x32xf32>
    %56 = math.absf %55 : vector<8x32xf32>
    %cst_32 = arith.constant 0.000000e+00 : f32
    %57 = vector.broadcast %cst_32 : f32 to vector<8x32xf32>
    %58 = arith.subf %57, %56 : vector<8x32xf32>
    %59 = math.exp %58 : vector<8x32xf32>
    %cst_33 = arith.constant 0.000000e+00 : f32
    %60 = vector.broadcast %cst_33 : f32 to vector<8x32xf32>
    %61 = arith.cmpf oge, %55, %60 : vector<8x32xf32>
    %cst_34 = arith.constant 1.000000e+00 : f32
    %62 = vector.broadcast %cst_34 : f32 to vector<8x32xf32>
    %63 = arith.select %61, %62, %59 : vector<8x32xi1>, vector<8x32xf32>
    %cst_35 = arith.constant 1.000000e+00 : f32
    %64 = vector.broadcast %cst_35 : f32 to vector<8x32xf32>
    %65 = arith.addf %64, %59 : vector<8x32xf32>
    %66 = arith.divf %63, %65 : vector<8x32xf32>
    %67 = vector.extract_strided_slice %49 {offsets = [1, 0, 0], sizes = [1, 8, 32], strides = [1, 1, 1]} : vector<2x8x32xf32> to vector<1x8x32xf32>
    %68 = vector.shape_cast %67 : vector<1x8x32xf32> to vector<8x32xf32>
    %69 = vector.extract_strided_slice %49 {offsets = [0, 0, 0], sizes = [1, 8, 32], strides = [1, 1, 1]} : vector<2x8x32xf32> to vector<1x8x32xf32>
    %70 = vector.shape_cast %69 : vector<1x8x32xf32> to vector<8x32xf32>
    %71 = vector.extract_strided_slice %49 {offsets = [1, 0, 0], sizes = [1, 8, 32], strides = [1, 1, 1]} : vector<2x8x32xf32> to vector<1x8x32xf32>
    %72 = vector.shape_cast %71 : vector<1x8x32xf32> to vector<8x32xf32>
    %73 = arith.subf %70, %72 : vector<8x32xf32>
    %74 = arith.mulf %66, %73 : vector<8x32xf32>
    %75 = arith.addf %68, %74 : vector<8x32xf32>
    %76 = vector.extract_strided_slice %50 {offsets = [1, 0, 0], sizes = [1, 8, 32], strides = [1, 1, 1]} : vector<2x8x32xf32> to vector<1x8x32xf32>
    %77 = vector.shape_cast %76 : vector<1x8x32xf32> to vector<8x32xf32>
    %78 = vector.extract_strided_slice %50 {offsets = [0, 0, 0], sizes = [1, 8, 32], strides = [1, 1, 1]} : vector<2x8x32xf32> to vector<1x8x32xf32>
    %79 = vector.shape_cast %78 : vector<1x8x32xf32> to vector<8x32xf32>
    %80 = vector.extract_strided_slice %50 {offsets = [1, 0, 0], sizes = [1, 8, 32], strides = [1, 1, 1]} : vector<2x8x32xf32> to vector<1x8x32xf32>
    %81 = vector.shape_cast %80 : vector<1x8x32xf32> to vector<8x32xf32>
    %82 = arith.subf %79, %81 : vector<8x32xf32>
    %83 = arith.mulf %66, %82 : vector<8x32xf32>
    %84 = arith.addf %77, %83 : vector<8x32xf32>
    %85 = math.absf %75 : vector<8x32xf32>
    %cst_36 = arith.constant 1.000000e-03 : f32
    %86 = vector.broadcast %cst_36 : f32 to vector<8x32xf32>
    %87 = arith.cmpf olt, %85, %86 : vector<8x32xf32>
    %cst_37 = arith.constant 1.000000e-03 : f32
    %88 = vector.broadcast %cst_37 : f32 to vector<8x32xf32>
    %89 = arith.select %87, %88, %75 : vector<8x32xi1>, vector<8x32xf32>
    %90 = arith.divf %84, %89 : vector<8x32xf32>
    %91 = math.absf %90 : vector<8x32xf32>
    %cst_38 = arith.constant 2.41421366 : f32
    %92 = vector.broadcast %cst_38 : f32 to vector<8x32xf32>
    %93 = arith.cmpf ogt, %91, %92 : vector<8x32xf32>
    %cst_39 = arith.constant 0.414213568 : f32
    %94 = vector.broadcast %cst_39 : f32 to vector<8x32xf32>
    %95 = arith.cmpf ogt, %91, %94 : vector<8x32xf32>
    %cst_40 = arith.constant dense<true> : vector<8x32xi1>
    %96 = arith.xori %93, %cst_40 : vector<8x32xi1>
    %97 = arith.andi %95, %96 : vector<8x32xi1>
    %cst_41 = arith.constant 1.000000e-30 : f32
    %98 = vector.broadcast %cst_41 : f32 to vector<8x32xf32>
    %99 = arith.addf %91, %98 : vector<8x32xf32>
    %cst_42 = arith.constant -1.000000e+00 : f32
    %100 = vector.broadcast %cst_42 : f32 to vector<8x32xf32>
    %101 = arith.divf %100, %99 : vector<8x32xf32>
    %cst_43 = arith.constant 1.000000e+00 : f32
    %102 = vector.broadcast %cst_43 : f32 to vector<8x32xf32>
    %103 = arith.subf %91, %102 : vector<8x32xf32>
    %cst_44 = arith.constant 1.000000e+00 : f32
    %104 = vector.broadcast %cst_44 : f32 to vector<8x32xf32>
    %105 = arith.addf %91, %104 : vector<8x32xf32>
    %106 = arith.divf %103, %105 : vector<8x32xf32>
    %107 = arith.select %97, %106, %91 : vector<8x32xi1>, vector<8x32xf32>
    %108 = arith.select %93, %101, %107 : vector<8x32xi1>, vector<8x32xf32>
    %cst_45 = arith.constant 0.785398185 : f32
    %cst_46 = arith.constant 0.000000e+00 : f32
    %109 = vector.broadcast %cst_45 : f32 to vector<8x32xf32>
    %110 = vector.broadcast %cst_46 : f32 to vector<8x32xf32>
    %111 = arith.select %97, %109, %110 : vector<8x32xi1>, vector<8x32xf32>
    %cst_47 = arith.constant 1.57079637 : f32
    %112 = vector.broadcast %cst_47 : f32 to vector<8x32xf32>
    %113 = arith.select %93, %112, %111 : vector<8x32xi1>, vector<8x32xf32>
    %114 = arith.mulf %108, %108 : vector<8x32xf32>
    %cst_48 = arith.constant 0.0805374458 : f32
    %115 = vector.broadcast %cst_48 : f32 to vector<8x32xf32>
    %116 = arith.mulf %115, %114 : vector<8x32xf32>
    %cst_49 = arith.constant 0.138776854 : f32
    %117 = vector.broadcast %cst_49 : f32 to vector<8x32xf32>
    %118 = arith.subf %116, %117 : vector<8x32xf32>
    %119 = arith.mulf %118, %114 : vector<8x32xf32>
    %cst_50 = arith.constant 0.199777111 : f32
    %120 = vector.broadcast %cst_50 : f32 to vector<8x32xf32>
    %121 = arith.addf %119, %120 : vector<8x32xf32>
    %122 = arith.mulf %121, %114 : vector<8x32xf32>
    %cst_51 = arith.constant 0.333329499 : f32
    %123 = vector.broadcast %cst_51 : f32 to vector<8x32xf32>
    %124 = arith.subf %122, %123 : vector<8x32xf32>
    %125 = arith.mulf %124, %114 : vector<8x32xf32>
    %126 = arith.mulf %125, %108 : vector<8x32xf32>
    %127 = arith.addf %126, %108 : vector<8x32xf32>
    %128 = arith.addf %113, %127 : vector<8x32xf32>
    %cst_52 = arith.constant 0.000000e+00 : f32
    %129 = vector.broadcast %cst_52 : f32 to vector<8x32xf32>
    %130 = arith.cmpf olt, %90, %129 : vector<8x32xf32>
    %cst_53 = arith.constant 0.000000e+00 : f32
    %131 = vector.broadcast %cst_53 : f32 to vector<8x32xf32>
    %132 = arith.subf %131, %128 : vector<8x32xf32>
    %133 = arith.select %130, %132, %128 : vector<8x32xi1>, vector<8x32xf32>
    %cst_54 = arith.constant 0.000000e+00 : f32
    %134 = vector.broadcast %cst_54 : f32 to vector<8x32xf32>
    %135 = arith.cmpf olt, %89, %134 : vector<8x32xf32>
    %cst_55 = arith.constant 0.000000e+00 : f32
    %136 = vector.broadcast %cst_55 : f32 to vector<8x32xf32>
    %137 = arith.cmpf olt, %84, %136 : vector<8x32xf32>
    %cst_56 = arith.constant dense<true> : vector<8x32xi1>
    %138 = arith.xori %137, %cst_56 : vector<8x32xi1>
    %139 = arith.andi %135, %138 : vector<8x32xi1>
    %cst_57 = arith.constant 3.14159274 : f32
    %140 = vector.broadcast %cst_57 : f32 to vector<8x32xf32>
    %141 = arith.addf %133, %140 : vector<8x32xf32>
    %142 = arith.select %139, %141, %133 : vector<8x32xi1>, vector<8x32xf32>
    %143 = arith.andi %135, %137 : vector<8x32xi1>
    %cst_58 = arith.constant 3.14159274 : f32
    %144 = vector.broadcast %cst_58 : f32 to vector<8x32xf32>
    %145 = arith.subf %142, %144 : vector<8x32xf32>
    %146 = arith.select %143, %145, %142 : vector<8x32xi1>, vector<8x32xf32>
    %c0_59 = arith.constant 0 : index
    %c0_60 = arith.constant 0 : index
    %147 = vector.load %arg10[%c0_59, %c0_60] : memref<8x32xf32, #tpu.memory_space<vmem>>, vector<8x32xf32>
    tpu.vector_store %arg10[%c0_59, %c0_60], %146 {strides = array<i32>} : memref<8x32xf32, #tpu.memory_space<vmem>>, vector<8x32xf32>,
    return
  }
  func.func @transform_0(%arg0: i32) -> (i32, i32, i32) {
    %c0_i32 = arith.constant 0 : i32
    %c0_i32_0 = arith.constant 0 : i32
    %c0_i32_1 = arith.constant 0 : i32
    return %c0_i32, %arg0, %c0_i32_0 : i32, i32, i32
  }
  func.func @transform_1(%arg0: i32) -> (i32, i32, i32) {
    %c0_i32 = arith.constant 0 : i32
    %c0_i32_0 = arith.constant 0 : i32
    %c0_i32_1 = arith.constant 0 : i32
    return %c0_i32, %arg0, %c0_i32_0 : i32, i32, i32
  }
  func.func @transform_2(%arg0: i32) -> (i32, i32) {
    %c0_i32 = arith.constant 0 : i32
    %c0_i32_0 = arith.constant 0 : i32
    %c0_i32_1 = arith.constant 0 : i32
    return %c0_i32, %c0_i32_0 : i32, i32
  }
  func.func @transform_3(%arg0: i32) -> (i32, i32) {
    %c0_i32 = arith.constant 0 : i32
    %c0_i32_0 = arith.constant 0 : i32
    %c0_i32_1 = arith.constant 0 : i32
    return %c0_i32, %c0_i32_0 : i32, i32
  }
  func.func @transform_4(%arg0: i32) -> (i32, i32) {
    %c0_i32 = arith.constant 0 : i32
    %c0_i32_0 = arith.constant 0 : i32
    %c0_i32_1 = arith.constant 0 : i32
    return %c0_i32, %c0_i32_0 : i32, i32
  }
  func.func @transform_5(%arg0: i32) -> (i32, i32) {
    %c0_i32 = arith.constant 0 : i32
    %c0_i32_0 = arith.constant 0 : i32
    %c0_i32_1 = arith.constant 0 : i32
    return %c0_i32, %c0_i32_0 : i32, i32
  }
  func.func @transform_6(%arg0: i32) -> (i32, i32) {
    %c0_i32 = arith.constant 0 : i32
    %c0_i32_0 = arith.constant 0 : i32
    %c0_i32_1 = arith.constant 0 : i32
    return %c0_i32, %c0_i32_0 : i32, i32
  }
  func.func @transform_7(%arg0: i32) -> (i32, i32) {
    %c0_i32 = arith.constant 0 : i32
    %c0_i32_0 = arith.constant 0 : i32
    %c0_i32_1 = arith.constant 0 : i32
    return %c0_i32, %c0_i32_0 : i32, i32
  }
  func.func @transform_8(%arg0: i32) -> (i32, i32) {
    %c0_i32 = arith.constant 0 : i32
    %c0_i32_0 = arith.constant 0 : i32
    %c0_i32_1 = arith.constant 0 : i32
    return %c0_i32, %c0_i32_0 : i32, i32
  }
  func.func @transform_9(%arg0: i32) -> (i32, i32) {
    %c0_i32 = arith.constant 0 : i32
    %c0_i32_0 = arith.constant 0 : i32
    return %arg0, %c0_i32 : i32, i32
  }
  func.func @transform_10(%arg0: i32) -> (i32, i32) {
    %c0_i32 = arith.constant 0 : i32
    %c0_i32_0 = arith.constant 0 : i32
    return %arg0, %c0_i32 : i32, i32
  }
}

module attributes {stable_mosaic.version = 11 : i64} {
  func.func @_intersection_kernel(%arg0: i32, %arg1: memref<2x8x32xf32, #tpu.memory_space<vmem>>, %arg2: memref<2x8x32xf32, #tpu.memory_space<vmem>>, %arg3: memref<32x256xbf16, #tpu.memory_space<vmem>>, %arg4: memref<32x256xbf16, #tpu.memory_space<vmem>>, %arg5: memref<1x256xf32, #tpu.memory_space<vmem>>, %arg6: memref<128x32xbf16, #tpu.memory_space<vmem>>, %arg7: memref<1x32xf32, #tpu.memory_space<vmem>>, %arg8: memref<128x32xbf16, #tpu.memory_space<vmem>>, %arg9: memref<1x32xf32, #tpu.memory_space<vmem>>, %arg10: memref<8x32xf32, #tpu.memory_space<vmem>>, %arg11: memref<8x32xf32, #tpu.memory_space<vmem>>) attributes {dimension_semantics = [#tpu.dimension_semantics<parallel>], iteration_bounds = array<i64: 2>, scalar_prefetch = 0 : i64, scratch_operands = 0 : i64, tpu.core_type = #tpu.core_type<tc>, window_params = [{transform_indices = @transform_0, window_bounds = array<i64: 2, 8, 32>}, {transform_indices = @transform_1, window_bounds = array<i64: 2, 8, 32>}, {pipeline_mode = #tpu.pipeline_mode<synchronous>, transform_indices = @transform_2, window_bounds = array<i64: 32, 256>}, {pipeline_mode = #tpu.pipeline_mode<synchronous>, transform_indices = @transform_3, window_bounds = array<i64: 32, 256>}, {pipeline_mode = #tpu.pipeline_mode<synchronous>, transform_indices = @transform_4, window_bounds = array<i64: 1, 256>}, {pipeline_mode = #tpu.pipeline_mode<synchronous>, transform_indices = @transform_5, window_bounds = array<i64: 128, 32>}, {pipeline_mode = #tpu.pipeline_mode<synchronous>, transform_indices = @transform_6, window_bounds = array<i64: 1, 32>}, {pipeline_mode = #tpu.pipeline_mode<synchronous>, transform_indices = @transform_7, window_bounds = array<i64: 128, 32>}, {pipeline_mode = #tpu.pipeline_mode<synchronous>, transform_indices = @transform_8, window_bounds = array<i64: 1, 32>}, {transform_indices = @transform_9, window_bounds = array<i64: 8, 32>}, {transform_indices = @transform_10, window_bounds = array<i64: 8, 32>}]} {
    %c0 = arith.constant 0 : index
    %c0_0 = arith.constant 0 : index
    %c0_1 = arith.constant 0 : index
    %0 = vector.load %arg1[%c0, %c0_0, %c0_1] : memref<2x8x32xf32, #tpu.memory_space<vmem>>, vector<2x8x32xf32>
    %c0_2 = arith.constant 0 : index
    %c0_3 = arith.constant 0 : index
    %c0_4 = arith.constant 0 : index
    %1 = vector.load %arg2[%c0_2, %c0_3, %c0_4] : memref<2x8x32xf32, #tpu.memory_space<vmem>>, vector<2x8x32xf32>
    %2 = vector.shape_cast %0 : vector<2x8x32xf32> to vector<16x32xf32>
    %3 = arith.truncf %2 : vector<16x32xf32> to vector<16x32xbf16>
    %4 = vector.shape_cast %1 : vector<2x8x32xf32> to vector<16x32xf32>
    %5 = arith.truncf %4 : vector<16x32xf32> to vector<16x32xbf16>
    %c0_5 = arith.constant 0 : index
    %c0_6 = arith.constant 0 : index
    %6 = vector.load %arg3[%c0_5, %c0_6] : memref<32x256xbf16, #tpu.memory_space<vmem>>, vector<32x256xbf16>
    %cst = arith.constant dense<0.000000e+00> : vector<16x256xf32>
    %7 = tpu.matmul %3, %6, %cst {dimension_numbers = #tpu.dot_dimension_numbers<[1], [0], [0], [1], [0, 0, 1, 1], [], []>} : vector<16x32xbf16>, vector<32x256xbf16>, vector<16x256xf32> -> vector<16x256xf32>
    %c0_7 = arith.constant 0 : index
    %c0_8 = arith.constant 0 : index
    %8 = vector.load %arg4[%c0_7, %c0_8] : memref<32x256xbf16, #tpu.memory_space<vmem>>, vector<32x256xbf16>
    %cst_9 = arith.constant dense<0.000000e+00> : vector<16x256xf32>
    %9 = tpu.matmul %5, %8, %cst_9 {dimension_numbers = #tpu.dot_dimension_numbers<[1], [0], [0], [1], [0, 0, 1, 1], [], []>} : vector<16x32xbf16>, vector<32x256xbf16>, vector<16x256xf32> -> vector<16x256xf32>
    %10 = arith.addf %7, %9 : vector<16x256xf32>
    %c0_10 = arith.constant 0 : index
    %c0_11 = arith.constant 0 : index
    %11 = vector.load %arg5[%c0_10, %c0_11] : memref<1x256xf32, #tpu.memory_space<vmem>>, vector<1x256xf32>
    %12 = vector.broadcast %11 : vector<1x256xf32> to vector<16x256xf32>
    %13 = arith.addf %10, %12 : vector<16x256xf32>
    %cst_12 = arith.constant 0.000000e+00 : f32
    %14 = vector.broadcast %cst_12 : f32 to vector<16x256xf32>
    %15 = arith.maximumf %13, %14 : vector<16x256xf32>
    %16 = vector.extract_strided_slice %15 {offsets = [0, 0], sizes = [16, 128], strides = [1, 1]} : vector<16x256xf32> to vector<16x128xf32>
    %17 = arith.truncf %16 : vector<16x128xf32> to vector<16x128xbf16>
    %c0_13 = arith.constant 0 : index
    %c0_14 = arith.constant 0 : index
    %18 = vector.load %arg6[%c0_13, %c0_14] : memref<128x32xbf16, #tpu.memory_space<vmem>>, vector<128x32xbf16>
    %cst_15 = arith.constant dense<0.000000e+00> : vector<16x32xf32>
    %19 = tpu.matmul %17, %18, %cst_15 {dimension_numbers = #tpu.dot_dimension_numbers<[1], [0], [0], [1], [0, 0, 1, 1], [], []>} : vector<16x128xbf16>, vector<128x32xbf16>, vector<16x32xf32> -> vector<16x32xf32>
    %c0_16 = arith.constant 0 : index
    %c0_17 = arith.constant 0 : index
    %20 = vector.load %arg7[%c0_16, %c0_17] : memref<1x32xf32, #tpu.memory_space<vmem>>, vector<1x32xf32>
    %21 = vector.broadcast %20 : vector<1x32xf32> to vector<16x32xf32>
    %22 = arith.addf %19, %21 : vector<16x32xf32>
    %23 = vector.shape_cast %22 : vector<16x32xf32> to vector<2x8x32xf32>
    %24 = vector.extract_strided_slice %15 {offsets = [0, 128], sizes = [16, 128], strides = [1, 1]} : vector<16x256xf32> to vector<16x128xf32>
    %25 = vector.shape_cast %24 : vector<16x128xf32> to vector<2x8x128xf32>
    %cst_18 = arith.constant dense<0.000000e+00> : vector<8x128xf32>
    %26 = vector.multi_reduction <add>, %25, %cst_18 [0] : vector<2x8x128xf32> to vector<8x128xf32>
    %cst_19 = arith.constant 2.000000e+00 : f32
    %27 = vector.broadcast %cst_19 : f32 to vector<8x128xf32>
    %28 = arith.divf %26, %27 : vector<8x128xf32>
    %29 = arith.truncf %28 : vector<8x128xf32> to vector<8x128xbf16>
    %c0_20 = arith.constant 0 : index
    %c0_21 = arith.constant 0 : index
    %30 = vector.load %arg8[%c0_20, %c0_21] : memref<128x32xbf16, #tpu.memory_space<vmem>>, vector<128x32xbf16>
    %cst_22 = arith.constant dense<0.000000e+00> : vector<8x32xf32>
    %31 = tpu.matmul %29, %30, %cst_22 {dimension_numbers = #tpu.dot_dimension_numbers<[1], [0], [0], [1], [0, 0, 1, 1], [], []>} : vector<8x128xbf16>, vector<128x32xbf16>, vector<8x32xf32> -> vector<8x32xf32>
    %c0_23 = arith.constant 0 : index
    %c0_24 = arith.constant 0 : index
    %32 = vector.load %arg9[%c0_23, %c0_24] : memref<1x32xf32, #tpu.memory_space<vmem>>, vector<1x32xf32>
    %33 = vector.broadcast %32 : vector<1x32xf32> to vector<8x32xf32>
    %34 = arith.addf %31, %33 : vector<8x32xf32>
    %35 = math.absf %34 : vector<8x32xf32>
    %cst_25 = arith.constant 0.000000e+00 : f32
    %36 = vector.broadcast %cst_25 : f32 to vector<8x32xf32>
    %37 = arith.subf %36, %35 : vector<8x32xf32>
    %38 = math.exp %37 : vector<8x32xf32>
    %cst_26 = arith.constant 0.000000e+00 : f32
    %39 = vector.broadcast %cst_26 : f32 to vector<8x32xf32>
    %40 = arith.cmpf oge, %34, %39 : vector<8x32xf32>
    %cst_27 = arith.constant 1.000000e+00 : f32
    %41 = vector.broadcast %cst_27 : f32 to vector<8x32xf32>
    %42 = arith.select %40, %41, %38 : vector<8x32xi1>, vector<8x32xf32>
    %cst_28 = arith.constant 1.000000e+00 : f32
    %43 = vector.broadcast %cst_28 : f32 to vector<8x32xf32>
    %44 = arith.addf %43, %38 : vector<8x32xf32>
    %45 = arith.divf %42, %44 : vector<8x32xf32>
    %cst_29 = arith.constant dense<0x7F800000> : vector<8x32xf32>
    %46 = vector.multi_reduction <minimumf>, %1, %cst_29 [0] : vector<2x8x32xf32> to vector<8x32xf32>
    %47 = arith.mulf %46, %45 : vector<8x32xf32>
    %c0_30 = arith.constant 0 : index
    %c0_31 = arith.constant 0 : index
    %48 = vector.load %arg11[%c0_30, %c0_31] : memref<8x32xf32, #tpu.memory_space<vmem>>, vector<8x32xf32>
    tpu.vector_store %arg11[%c0_30, %c0_31], %47 {strides = array<i32>} : memref<8x32xf32, #tpu.memory_space<vmem>>, vector<8x32xf32>,
    %49 = math.cos %0 : vector<2x8x32xf32>
    %50 = math.sin %0 : vector<2x8x32xf32>
    %51 = vector.extract_strided_slice %23 {offsets = [0, 0, 0], sizes = [1, 8, 32], strides = [1, 1, 1]} : vector<2x8x32xf32> to vector<1x8x32xf32>
    %52 = vector.shape_cast %51 : vector<1x8x32xf32> to vector<8x32xf32>
    %53 = vector.extract_strided_slice %23 {offsets = [1, 0, 0], sizes = [1, 8, 32], strides = [1, 1, 1]} : vector<2x8x32xf32> to vector<1x8x32xf32>
    %54 = vector.shape_cast %53 : vector<1x8x32xf32> to vector<8x32xf32>
    %55 = arith.subf %52, %54 : vector<8x32xf32>
    %56 = math.absf %55 : vector<8x32xf32>
    %cst_32 = arith.constant 0.000000e+00 : f32
    %57 = vector.broadcast %cst_32 : f32 to vector<8x32xf32>
    %58 = arith.subf %57, %56 : vector<8x32xf32>
    %59 = math.exp %58 : vector<8x32xf32>
    %cst_33 = arith.constant 0.000000e+00 : f32
    %60 = vector.broadcast %cst_33 : f32 to vector<8x32xf32>
    %61 = arith.cmpf oge, %55, %60 : vector<8x32xf32>
    %cst_34 = arith.constant 1.000000e+00 : f32
    %62 = vector.broadcast %cst_34 : f32 to vector<8x32xf32>
    %63 = arith.select %61, %62, %59 : vector<8x32xi1>, vector<8x32xf32>
    %cst_35 = arith.constant 1.000000e+00 : f32
    %64 = vector.broadcast %cst_35 : f32 to vector<8x32xf32>
    %65 = arith.addf %64, %59 : vector<8x32xf32>
    %66 = arith.divf %63, %65 : vector<8x32xf32>
    %67 = vector.extract_strided_slice %49 {offsets = [1, 0, 0], sizes = [1, 8, 32], strides = [1, 1, 1]} : vector<2x8x32xf32> to vector<1x8x32xf32>
    %68 = vector.shape_cast %67 : vector<1x8x32xf32> to vector<8x32xf32>
    %69 = vector.extract_strided_slice %49 {offsets = [0, 0, 0], sizes = [1, 8, 32], strides = [1, 1, 1]} : vector<2x8x32xf32> to vector<1x8x32xf32>
    %70 = vector.shape_cast %69 : vector<1x8x32xf32> to vector<8x32xf32>
    %71 = vector.extract_strided_slice %49 {offsets = [1, 0, 0], sizes = [1, 8, 32], strides = [1, 1, 1]} : vector<2x8x32xf32> to vector<1x8x32xf32>
    %72 = vector.shape_cast %71 : vector<1x8x32xf32> to vector<8x32xf32>
    %73 = arith.subf %70, %72 : vector<8x32xf32>
    %74 = arith.mulf %66, %73 : vector<8x32xf32>
    %75 = arith.addf %68, %74 : vector<8x32xf32>
    %76 = vector.extract_strided_slice %50 {offsets = [1, 0, 0], sizes = [1, 8, 32], strides = [1, 1, 1]} : vector<2x8x32xf32> to vector<1x8x32xf32>
    %77 = vector.shape_cast %76 : vector<1x8x32xf32> to vector<8x32xf32>
    %78 = vector.extract_strided_slice %50 {offsets = [0, 0, 0], sizes = [1, 8, 32], strides = [1, 1, 1]} : vector<2x8x32xf32> to vector<1x8x32xf32>
    %79 = vector.shape_cast %78 : vector<1x8x32xf32> to vector<8x32xf32>
    %80 = vector.extract_strided_slice %50 {offsets = [1, 0, 0], sizes = [1, 8, 32], strides = [1, 1, 1]} : vector<2x8x32xf32> to vector<1x8x32xf32>
    %81 = vector.shape_cast %80 : vector<1x8x32xf32> to vector<8x32xf32>
    %82 = arith.subf %79, %81 : vector<8x32xf32>
    %83 = arith.mulf %66, %82 : vector<8x32xf32>
    %84 = arith.addf %77, %83 : vector<8x32xf32>
    %85 = math.absf %75 : vector<8x32xf32>
    %cst_36 = arith.constant 1.000000e-03 : f32
    %86 = vector.broadcast %cst_36 : f32 to vector<8x32xf32>
    %87 = arith.cmpf olt, %85, %86 : vector<8x32xf32>
    %cst_37 = arith.constant 1.000000e-03 : f32
    %88 = vector.broadcast %cst_37 : f32 to vector<8x32xf32>
    %89 = arith.select %87, %88, %75 : vector<8x32xi1>, vector<8x32xf32>
    %90 = arith.divf %84, %89 : vector<8x32xf32>
    %91 = math.absf %90 : vector<8x32xf32>
    %cst_38 = arith.constant 2.41421366 : f32
    %92 = vector.broadcast %cst_38 : f32 to vector<8x32xf32>
    %93 = arith.cmpf ogt, %91, %92 : vector<8x32xf32>
    %cst_39 = arith.constant 0.414213568 : f32
    %94 = vector.broadcast %cst_39 : f32 to vector<8x32xf32>
    %95 = arith.cmpf ogt, %91, %94 : vector<8x32xf32>
    %cst_40 = arith.constant dense<true> : vector<8x32xi1>
    %96 = arith.xori %93, %cst_40 : vector<8x32xi1>
    %97 = arith.andi %95, %96 : vector<8x32xi1>
    %cst_41 = arith.constant 1.000000e-30 : f32
    %98 = vector.broadcast %cst_41 : f32 to vector<8x32xf32>
    %99 = arith.addf %91, %98 : vector<8x32xf32>
    %cst_42 = arith.constant -1.000000e+00 : f32
    %100 = vector.broadcast %cst_42 : f32 to vector<8x32xf32>
    %101 = arith.divf %100, %99 : vector<8x32xf32>
    %cst_43 = arith.constant 1.000000e+00 : f32
    %102 = vector.broadcast %cst_43 : f32 to vector<8x32xf32>
    %103 = arith.subf %91, %102 : vector<8x32xf32>
    %cst_44 = arith.constant 1.000000e+00 : f32
    %104 = vector.broadcast %cst_44 : f32 to vector<8x32xf32>
    %105 = arith.addf %91, %104 : vector<8x32xf32>
    %106 = arith.divf %103, %105 : vector<8x32xf32>
    %107 = arith.select %97, %106, %91 : vector<8x32xi1>, vector<8x32xf32>
    %108 = arith.select %93, %101, %107 : vector<8x32xi1>, vector<8x32xf32>
    %cst_45 = arith.constant 0.785398185 : f32
    %cst_46 = arith.constant 0.000000e+00 : f32
    %109 = vector.broadcast %cst_45 : f32 to vector<8x32xf32>
    %110 = vector.broadcast %cst_46 : f32 to vector<8x32xf32>
    %111 = arith.select %97, %109, %110 : vector<8x32xi1>, vector<8x32xf32>
    %cst_47 = arith.constant 1.57079637 : f32
    %112 = vector.broadcast %cst_47 : f32 to vector<8x32xf32>
    %113 = arith.select %93, %112, %111 : vector<8x32xi1>, vector<8x32xf32>
    %114 = arith.mulf %108, %108 : vector<8x32xf32>
    %cst_48 = arith.constant 0.0805374458 : f32
    %115 = vector.broadcast %cst_48 : f32 to vector<8x32xf32>
    %116 = arith.mulf %115, %114 : vector<8x32xf32>
    %cst_49 = arith.constant 0.138776854 : f32
    %117 = vector.broadcast %cst_49 : f32 to vector<8x32xf32>
    %118 = arith.subf %116, %117 : vector<8x32xf32>
    %119 = arith.mulf %118, %114 : vector<8x32xf32>
    %cst_50 = arith.constant 0.199777111 : f32
    %120 = vector.broadcast %cst_50 : f32 to vector<8x32xf32>
    %121 = arith.addf %119, %120 : vector<8x32xf32>
    %122 = arith.mulf %121, %114 : vector<8x32xf32>
    %cst_51 = arith.constant 0.333329499 : f32
    %123 = vector.broadcast %cst_51 : f32 to vector<8x32xf32>
    %124 = arith.subf %122, %123 : vector<8x32xf32>
    %125 = arith.mulf %124, %114 : vector<8x32xf32>
    %126 = arith.mulf %125, %108 : vector<8x32xf32>
    %127 = arith.addf %126, %108 : vector<8x32xf32>
    %128 = arith.addf %113, %127 : vector<8x32xf32>
    %cst_52 = arith.constant 0.000000e+00 : f32
    %129 = vector.broadcast %cst_52 : f32 to vector<8x32xf32>
    %130 = arith.cmpf olt, %90, %129 : vector<8x32xf32>
    %cst_53 = arith.constant 0.000000e+00 : f32
    %131 = vector.broadcast %cst_53 : f32 to vector<8x32xf32>
    %132 = arith.subf %131, %128 : vector<8x32xf32>
    %133 = arith.select %130, %132, %128 : vector<8x32xi1>, vector<8x32xf32>
    %cst_54 = arith.constant 0.000000e+00 : f32
    %134 = vector.broadcast %cst_54 : f32 to vector<8x32xf32>
    %135 = arith.cmpf olt, %89, %134 : vector<8x32xf32>
    %cst_55 = arith.constant 0.000000e+00 : f32
    %136 = vector.broadcast %cst_55 : f32 to vector<8x32xf32>
    %137 = arith.cmpf olt, %84, %136 : vector<8x32xf32>
    %cst_56 = arith.constant dense<true> : vector<8x32xi1>
    %138 = arith.xori %137, %cst_56 : vector<8x32xi1>
    %139 = arith.andi %135, %138 : vector<8x32xi1>
    %cst_57 = arith.constant 3.14159274 : f32
    %140 = vector.broadcast %cst_57 : f32 to vector<8x32xf32>
    %141 = arith.addf %133, %140 : vector<8x32xf32>
    %142 = arith.select %139, %141, %133 : vector<8x32xi1>, vector<8x32xf32>
    %143 = arith.andi %135, %137 : vector<8x32xi1>
    %cst_58 = arith.constant 3.14159274 : f32
    %144 = vector.broadcast %cst_58 : f32 to vector<8x32xf32>
    %145 = arith.subf %142, %144 : vector<8x32xf32>
    %146 = arith.select %143, %145, %142 : vector<8x32xi1>, vector<8x32xf32>
    %c0_59 = arith.constant 0 : index
    %c0_60 = arith.constant 0 : index
    %147 = vector.load %arg10[%c0_59, %c0_60] : memref<8x32xf32, #tpu.memory_space<vmem>>, vector<8x32xf32>
    tpu.vector_store %arg10[%c0_59, %c0_60], %146 {strides = array<i32>} : memref<8x32xf32, #tpu.memory_space<vmem>>, vector<8x32xf32>,
    return
  }
  func.func @transform_0(%arg0: i32) -> (i32, i32, i32) {
    %c0_i32 = arith.constant 0 : i32
    %c0_i32_0 = arith.constant 0 : i32
    %c0_i32_1 = arith.constant 0 : i32
    return %c0_i32, %arg0, %c0_i32_0 : i32, i32, i32
  }
  func.func @transform_1(%arg0: i32) -> (i32, i32, i32) {
    %c0_i32 = arith.constant 0 : i32
    %c0_i32_0 = arith.constant 0 : i32
    %c0_i32_1 = arith.constant 0 : i32
    return %c0_i32, %arg0, %c0_i32_0 : i32, i32, i32
  }
  func.func @transform_2(%arg0: i32) -> (i32, i32) {
    %c0_i32 = arith.constant 0 : i32
    %c0_i32_0 = arith.constant 0 : i32
    %c0_i32_1 = arith.constant 0 : i32
    return %c0_i32, %c0_i32_0 : i32, i32
  }
  func.func @transform_3(%arg0: i32) -> (i32, i32) {
    %c0_i32 = arith.constant 0 : i32
    %c0_i32_0 = arith.constant 0 : i32
    %c0_i32_1 = arith.constant 0 : i32
    return %c0_i32, %c0_i32_0 : i32, i32
  }
  func.func @transform_4(%arg0: i32) -> (i32, i32) {
    %c0_i32 = arith.constant 0 : i32
    %c0_i32_0 = arith.constant 0 : i32
    %c0_i32_1 = arith.constant 0 : i32
    return %c0_i32, %c0_i32_0 : i32, i32
  }
  func.func @transform_5(%arg0: i32) -> (i32, i32) {
    %c0_i32 = arith.constant 0 : i32
    %c0_i32_0 = arith.constant 0 : i32
    %c0_i32_1 = arith.constant 0 : i32
    return %c0_i32, %c0_i32_0 : i32, i32
  }
  func.func @transform_6(%arg0: i32) -> (i32, i32) {
    %c0_i32 = arith.constant 0 : i32
    %c0_i32_0 = arith.constant 0 : i32
    %c0_i32_1 = arith.constant 0 : i32
    return %c0_i32, %c0_i32_0 : i32, i32
  }
  func.func @transform_7(%arg0: i32) -> (i32, i32) {
    %c0_i32 = arith.constant 0 : i32
    %c0_i32_0 = arith.constant 0 : i32
    %c0_i32_1 = arith.constant 0 : i32
    return %c0_i32, %c0_i32_0 : i32, i32
  }
  func.func @transform_8(%arg0: i32) -> (i32, i32) {
    %c0_i32 = arith.constant 0 : i32
    %c0_i32_0 = arith.constant 0 : i32
    %c0_i32_1 = arith.constant 0 : i32
    return %c0_i32, %c0_i32_0 : i32, i32
  }
  func.func @transform_9(%arg0: i32) -> (i32, i32) {
    %c0_i32 = arith.constant 0 : i32
    %c0_i32_0 = arith.constant 0 : i32
    return %arg0, %c0_i32 : i32, i32
  }
  func.func @transform_10(%arg0: i32) -> (i32, i32) {
    %c0_i32 = arith.constant 0 : i32
    %c0_i32_0 = arith.constant 0 : i32
    return %arg0, %c0_i32 : i32, i32
  }
}

</mosaic_0001>

<llo_original>
// kernel: tpu_custom_call.1
$region0: #{tpu_custom_call.1}
  #allocation0 [shape = 'u32[]', space=smem, size = 0x4, offset = 0x4, fixed_abs, tag = 'smem constant byte address 0x4 - core index']
  #allocation1 [shape = 'u32[72,128]{1,0:T(1,128)}', space=vmem, size = 0x9000, scoped, tag = 'internal scratch']
  %s0 = inlined_call_operand.vmem [shape: f32[2,16,32], index: 0, kind: input, shape index: {}]
  %s1 = inlined_call_operand.vmem [shape: f32[2,16,32], index: 1, kind: input, shape index: {}]
  %s2 = inlined_call_operand.vmem [shape: bf16[32,256], index: 2, kind: input, shape index: {}]
  %s3 = inlined_call_operand.vmem [shape: bf16[32,256], index: 3, kind: input, shape index: {}]
  %s4 = inlined_call_operand.vmem [shape: f32[1,256], index: 4, kind: input, shape index: {}]
  %s5 = inlined_call_operand.vmem [shape: bf16[128,32], index: 5, kind: input, shape index: {}]
  %s6 = inlined_call_operand.vmem [shape: f32[1,32], index: 6, kind: input, shape index: {}]
  %s7 = inlined_call_operand.vmem [shape: bf16[128,32], index: 7, kind: input, shape index: {}]
  %s8 = inlined_call_operand.vmem [shape: f32[1,32], index: 8, kind: input, shape index: {}]
  %s9 = inlined_call_operand.hbm [shape: f32[16,32], index: 9, kind: output, shape index: {0}]
  %s10 = inlined_call_operand.hbm [shape: f32[16,32], index: 10, kind: output, shape index: {1}]
  %11 = xla_tuple %s9, %s10
  %s12 = sld [smem:[#allocation0]]
  $region153: #{tpu_custom_call.1} parent=0
    _
  %s14 = ssub.s32 1, %s12
  %s15 = scalar_select 0, %s14, %s12
  $region1: #{tpu_custom_call.1} parent=0
    #allocation2 [shape = 'u8[16384]{0}', space=vmem, size = 0x4000, scoped, tag = 'input window, operand 0']
    #allocation3 [shape = 'u8[16384]{0}', space=vmem, size = 0x4000, scoped, tag = 'input window, operand 1']
    #allocation4 [shape = 'u8[8192]{0}', space=vmem, size = 0x2000, scoped, tag = 'output window, operand 0']
    #allocation5 [shape = 's32[2]{0}', space=sflag, size = 0x8, scoped, tag = 'scoped memory for tpu_custom_call.1']
    #allocation6 [shape = 'u8[8192]{0}', space=vmem, size = 0x2000, scoped, tag = 'output window, operand 1']
    #allocation7 [shape = 's32[2]{0}', space=sflag, size = 0x8, scoped, tag = 'scoped memory for tpu_custom_call.1']
    %16 = vsyncpa [#allocation5], 0
    %s17 = scalar_lea.sflag [#allocation5], 1
    %18 = vsyncpa %s17, 0
    %19 = vsyncpa [#allocation7], 0
    %s20 = scalar_lea.sflag [#allocation7], 1
    %21 = vsyncpa %s20, 0
    loop: start=0, step=1, limit=4
    $region2: #{tpu_custom_call.1} parent=1 // loop_pre_header
      _
    $region3: #{tpu_custom_call.1} parent=1 // loop_header
      %s23 = sphi 0, %s27
      %p24 = scmp.ge.s32.totalorder %s23, 4
      %s33 = sphi 0, %s35
      %s36 = sphi 0, %s33
      %s37 = sphi 0, %s36
      %s53 = sphi 0, %s37
      %s59 = sphi 0, %s61
      %s62 = sphi 0, %s59
      %s63 = sphi 0, %s62
      %s79 = sphi 0, %s63
      %s83 = sphi 0, %s83
      %s85 = sphi 0, %s83
      %s86 = sphi 0, %s85
      %s100 = sphi 0, %s86
      %s104 = sphi 0, %s104
      %s106 = sphi 0, %s104
      %s107 = sphi 0, %s106
      %s121 = sphi 0, %s107
      %s125 = sphi 0, %s125
      %s127 = sphi 0, %s125
      %s128 = sphi 0, %s127
      %s142 = sphi 0, %s128
      %s146 = sphi 0, %s146
      %s148 = sphi 0, %s146
      %s149 = sphi 0, %s148
      %s163 = sphi 0, %s149
      %s167 = sphi 0, %s167
      %s169 = sphi 0, %s167
      %s170 = sphi 0, %s169
      %s184 = sphi 0, %s170
      %s188 = sphi 0, %s188
      %s190 = sphi 0, %s188
      %s191 = sphi 0, %s190
      %s205 = sphi 0, %s191
      %s209 = sphi 0, %s209
      %s211 = sphi 0, %s209
      %s212 = sphi 0, %s211
      %s226 = sphi 0, %s212
      %s232 = sphi 0, %s234
      %s235 = sphi 0, %s232
      %s236 = sphi 0, %s235
      %s252 = sphi 0, %s236
      %s258 = sphi 0, %s260
      %s261 = sphi 0, %s258
      %s262 = sphi 0, %s261
      %s278 = sphi 0, %s262
    $region4: #{tpu_custom_call.1} parent=1 // loop_header_branch
      %26 = sbr.rel (%p24) target = $region8
    $region5: #{tpu_custom_call.1} parent=1 // loop_body
      %s28 = ssub.s32 %s23, 1
      %s29 = ssub.s32 %s23, 2
      %s30 = sadd.s32 %s23, 1
      %s31 = ssub.s32 %s23, %s30
      %p32 = scmp.eq.s32.totalorder %s31, 0
      %s34 = sadd.s32 %s33, 1
      %s35 = scalar_select %p32, %s33, %s34
      %p38 = pneg %p32
      %p39 = scmp.eq.s32.totalorder %s23, 1
      %p40 = por %p38, %p39
      %p41 = scmp.ne.s32.totalorder %s33, %s36
      %p42 = scmp.eq.s32.totalorder %s23, 0
      %p43 = por %p41, %p42
      %p44 = scmp.ne.s32.totalorder %s33, %s36
      %p45 = scmp.eq.s32.totalorder %s28, 1
      %p46 = por %p44, %p45
      %p47 = scmp.ne.s32.totalorder %s36, %s37
      %p48 = scmp.eq.s32.totalorder %s28, 0
      %p49 = por %p47, %p48
      %p50 = scmp.ne.s32.totalorder %s36, %s37
      %p51 = scmp.eq.s32.totalorder %s29, 1
      %p52 = por %p50, %p51
      %p54 = scmp.ne.s32.totalorder %s37, %s53
      %p55 = scmp.eq.s32.totalorder %s29, 0
      %p56 = por %p54, %p55
      %s57 = ssub.s32 %s23, %s30
      %p58 = scmp.eq.s32.totalorder %s57, 0
      %s60 = sadd.s32 %s59, 1
      %s61 = scalar_select %p58, %s59, %s60
      %p64 = pneg %p58
      %p65 = scmp.eq.s32.totalorder %s23, 1
      %p66 = por %p64, %p65
      %p67 = scmp.ne.s32.totalorder %s59, %s62
      %p68 = scmp.eq.s32.totalorder %s23, 0
      %p69 = por %p67, %p68
      %p70 = scmp.ne.s32.totalorder %s59, %s62
      %p71 = scmp.eq.s32.totalorder %s28, 1
      %p72 = por %p70, %p71
      %p73 = scmp.ne.s32.totalorder %s62, %s63
      %p74 = scmp.eq.s32.totalorder %s28, 0
      %p75 = por %p73, %p74
      %p76 = scmp.ne.s32.totalorder %s62, %s63
      %p77 = scmp.eq.s32.totalorder %s29, 1
      %p78 = por %p76, %p77
      %p80 = scmp.ne.s32.totalorder %s63, %s79
      %p81 = scmp.eq.s32.totalorder %s29, 0
      %p82 = por %p80, %p81
      %s84 = sadd.s32 %s83, 1
      %p87 = scmp.eq.s32.totalorder %s23, 1
      %p88 = scmp.ne.s32.totalorder %s83, %s85
      %p89 = scmp.eq.s32.totalorder %s23, 0
      %p90 = por %p88, %p89
      %p91 = scmp.ne.s32.totalorder %s83, %s85
      %p92 = scmp.eq.s32.totalorder %s28, 1
      %p93 = por %p91, %p92
      %p94 = scmp.ne.s32.totalorder %s85, %s86
      %p95 = scmp.eq.s32.totalorder %s28, 0
      %p96 = por %p94, %p95
      %p97 = scmp.ne.s32.totalorder %s85, %s86
      %p98 = scmp.eq.s32.totalorder %s29, 1
      %p99 = por %p97, %p98
      %p101 = scmp.ne.s32.totalorder %s86, %s100
      %p102 = scmp.eq.s32.totalorder %s29, 0
      %p103 = por %p101, %p102
      %s105 = sadd.s32 %s104, 1
      %p108 = scmp.eq.s32.totalorder %s23, 1
      %p109 = scmp.ne.s32.totalorder %s104, %s106
      %p110 = scmp.eq.s32.totalorder %s23, 0
      %p111 = por %p109, %p110
      %p112 = scmp.ne.s32.totalorder %s104, %s106
      %p113 = scmp.eq.s32.totalorder %s28, 1
      %p114 = por %p112, %p113
      %p115 = scmp.ne.s32.totalorder %s106, %s107
      %p116 = scmp.eq.s32.totalorder %s28, 0
      %p117 = por %p115, %p116
      %p118 = scmp.ne.s32.totalorder %s106, %s107
      %p119 = scmp.eq.s32.totalorder %s29, 1
      %p120 = por %p118, %p119
      %p122 = scmp.ne.s32.totalorder %s107, %s121
      %p123 = scmp.eq.s32.totalorder %s29, 0
      %p124 = por %p122, %p123
      %s126 = sadd.s32 %s125, 1
      %p129 = scmp.eq.s32.totalorder %s23, 1
      %p130 = scmp.ne.s32.totalorder %s125, %s127
      %p131 = scmp.eq.s32.totalorder %s23, 0
      %p132 = por %p130, %p131
      %p133 = scmp.ne.s32.totalorder %s125, %s127
      %p134 = scmp.eq.s32.totalorder %s28, 1
      %p135 = por %p133, %p134
      %p136 = scmp.ne.s32.totalorder %s127, %s128
      %p137 = scmp.eq.s32.totalorder %s28, 0
      %p138 = por %p136, %p137
      %p139 = scmp.ne.s32.totalorder %s127, %s128
      %p140 = scmp.eq.s32.totalorder %s29, 1
      %p141 = por %p139, %p140
      %p143 = scmp.ne.s32.totalorder %s128, %s142
      %p144 = scmp.eq.s32.totalorder %s29, 0
      %p145 = por %p143, %p144
      %s147 = sadd.s32 %s146, 1
      %p150 = scmp.eq.s32.totalorder %s23, 1
      %p151 = scmp.ne.s32.totalorder %s146, %s148
      %p152 = scmp.eq.s32.totalorder %s23, 0
      %p153 = por %p151, %p152
      %p154 = scmp.ne.s32.totalorder %s146, %s148
      %p155 = scmp.eq.s32.totalorder %s28, 1
      %p156 = por %p154, %p155
      %p157 = scmp.ne.s32.totalorder %s148, %s149
      %p158 = scmp.eq.s32.totalorder %s28, 0
      %p159 = por %p157, %p158
      %p160 = scmp.ne.s32.totalorder %s148, %s149
      %p161 = scmp.eq.s32.totalorder %s29, 1
      %p162 = por %p160, %p161
      %p164 = scmp.ne.s32.totalorder %s149, %s163
      %p165 = scmp.eq.s32.totalorder %s29, 0
      %p166 = por %p164, %p165
      %s168 = sadd.s32 %s167, 1
      %p171 = scmp.eq.s32.totalorder %s23, 1
      %p172 = scmp.ne.s32.totalorder %s167, %s169
      %p173 = scmp.eq.s32.totalorder %s23, 0
      %p174 = por %p172, %p173
      %p175 = scmp.ne.s32.totalorder %s167, %s169
      %p176 = scmp.eq.s32.totalorder %s28, 1
      %p177 = por %p175, %p176
      %p178 = scmp.ne.s32.totalorder %s169, %s170
      %p179 = scmp.eq.s32.totalorder %s28, 0
      %p180 = por %p178, %p179
      %p181 = scmp.ne.s32.totalorder %s169, %s170
      %p182 = scmp.eq.s32.totalorder %s29, 1
      %p183 = por %p181, %p182
      %p185 = scmp.ne.s32.totalorder %s170, %s184
      %p186 = scmp.eq.s32.totalorder %s29, 0
      %p187 = por %p185, %p186
      %s189 = sadd.s32 %s188, 1
      %p192 = scmp.eq.s32.totalorder %s23, 1
      %p193 = scmp.ne.s32.totalorder %s188, %s190
      %p194 = scmp.eq.s32.totalorder %s23, 0
      %p195 = por %p193, %p194
      %p196 = scmp.ne.s32.totalorder %s188, %s190
      %p197 = scmp.eq.s32.totalorder %s28, 1
      %p198 = por %p196, %p197
      %p199 = scmp.ne.s32.totalorder %s190, %s191
      %p200 = scmp.eq.s32.totalorder %s28, 0
      %p201 = por %p199, %p200
      %p202 = scmp.ne.s32.totalorder %s190, %s191
      %p203 = scmp.eq.s32.totalorder %s29, 1
      %p204 = por %p202, %p203
      %p206 = scmp.ne.s32.totalorder %s191, %s205
      %p207 = scmp.eq.s32.totalorder %s29, 0
      %p208 = por %p206, %p207
      %s210 = sadd.s32 %s209, 1
      %p213 = scmp.eq.s32.totalorder %s23, 1
      %p214 = scmp.ne.s32.totalorder %s209, %s211
      %p215 = scmp.eq.s32.totalorder %s23, 0
      %p216 = por %p214, %p215
      %p217 = scmp.ne.s32.totalorder %s209, %s211
      %p218 = scmp.eq.s32.totalorder %s28, 1
      %p219 = por %p217, %p218
      %p220 = scmp.ne.s32.totalorder %s211, %s212
      %p221 = scmp.eq.s32.totalorder %s28, 0
      %p222 = por %p220, %p221
      %p223 = scmp.ne.s32.totalorder %s211, %s212
      %p224 = scmp.eq.s32.totalorder %s29, 1
      %p225 = por %p223, %p224
      %p227 = scmp.ne.s32.totalorder %s212, %s226
      %p228 = scmp.eq.s32.totalorder %s29, 0
      %p229 = por %p227, %p228
      %s230 = ssub.s32 %s23, %s30
      %p231 = scmp.eq.s32.totalorder %s230, 0
      %s233 = sadd.s32 %s232, 1
      %s234 = scalar_select %p231, %s232, %s233
      %p237 = pneg %p231
      %p238 = scmp.eq.s32.totalorder %s23, 1
      %p239 = por %p237, %p238
      %p240 = scmp.ne.s32.totalorder %s232, %s235
      %p241 = scmp.eq.s32.totalorder %s23, 0
      %p242 = por %p240, %p241
      %p243 = scmp.ne.s32.totalorder %s232, %s235
      %p244 = scmp.eq.s32.totalorder %s28, 1
      %p245 = por %p243, %p244
      %p246 = scmp.ne.s32.totalorder %s235, %s236
      %p247 = scmp.eq.s32.totalorder %s28, 0
      %p248 = por %p246, %p247
      %p249 = scmp.ne.s32.totalorder %s235, %s236
      %p250 = scmp.eq.s32.totalorder %s29, 1
      %p251 = por %p249, %p250
      %p253 = scmp.ne.s32.totalorder %s236, %s252
      %p254 = scmp.eq.s32.totalorder %s29, 0
      %p255 = por %p253, %p254
      %s256 = ssub.s32 %s23, %s30
      %p257 = scmp.eq.s32.totalorder %s256, 0
      %s259 = sadd.s32 %s258, 1
      %s260 = scalar_select %p257, %s258, %s259
      %p263 = pneg %p257
      %p264 = scmp.eq.s32.totalorder %s23, 1
      %p265 = por %p263, %p264
      %p266 = scmp.ne.s32.totalorder %s258, %s261
      %p267 = scmp.eq.s32.totalorder %s23, 0
      %p268 = por %p266, %p267
      %p269 = scmp.ne.s32.totalorder %s258, %s261
      %p270 = scmp.eq.s32.totalorder %s28, 1
      %p271 = por %p269, %p270
      %p272 = scmp.ne.s32.totalorder %s261, %s262
      %p273 = scmp.eq.s32.totalorder %s28, 0
      %p274 = por %p272, %p273
      %p275 = scmp.ne.s32.totalorder %s261, %s262
      %p276 = scmp.eq.s32.totalorder %s29, 1
      %p277 = por %p275, %p276
      %p279 = scmp.ne.s32.totalorder %s262, %s278
      %p280 = scmp.eq.s32.totalorder %s29, 0
      %p281 = por %p279, %p280
      %p282 = scmp.le.s32.totalorder 1, %s23
      %p283 = scmp.lt.s32.totalorder %s23, 3
      %p284 = pnand %p282, %p283
      %p285 = pneg %p284
      // Predicated region
      $region9: #{tpu_custom_call.1} parent=5 // pred_check
        _
      $region10: #{tpu_custom_call.1} parent=5 // pred_check_branch
        %287 = sbr.rel (%p284) target = $region12
      $region11: #{tpu_custom_call.1} parent=5 // pred_region
        %s288 = ssub.s32 %s23, 1
        // Predicated region
        $region13: #{tpu_custom_call.1} parent=11 // pred_check
          %p289 = pneg %p96
        $region14: #{tpu_custom_call.1} parent=11 // pred_check_branch
          %291 = sbr.rel (%p289) target = $region16
        $region15: #{tpu_custom_call.1} parent=11 // pred_region
          _
        $region16: #{tpu_custom_call.1} parent=11 // pred_fallthru
          _
        // Predicated region
        $region17: #{tpu_custom_call.1} parent=11 // pred_check
          %p292 = pneg %p117
        $region18: #{tpu_custom_call.1} parent=11 // pred_check_branch
          %294 = sbr.rel (%p292) target = $region20
        $region19: #{tpu_custom_call.1} parent=11 // pred_region
          _
        $region20: #{tpu_custom_call.1} parent=11 // pred_fallthru
          _
        // Predicated region
        $region21: #{tpu_custom_call.1} parent=11 // pred_check
          %p295 = pneg %p138
        $region22: #{tpu_custom_call.1} parent=11 // pred_check_branch
          %297 = sbr.rel (%p295) target = $region24
        $region23: #{tpu_custom_call.1} parent=11 // pred_region
          _
        $region24: #{tpu_custom_call.1} parent=11 // pred_fallthru
          _
        // Predicated region
        $region25: #{tpu_custom_call.1} parent=11 // pred_check
          %p298 = pneg %p159
        $region26: #{tpu_custom_call.1} parent=11 // pred_check_branch
          %300 = sbr.rel (%p298) target = $region28
        $region27: #{tpu_custom_call.1} parent=11 // pred_region
          _
        $region28: #{tpu_custom_call.1} parent=11 // pred_fallthru
          _
        // Predicated region
        $region29: #{tpu_custom_call.1} parent=11 // pred_check
          %p301 = pneg %p180
        $region30: #{tpu_custom_call.1} parent=11 // pred_check_branch
          %303 = sbr.rel (%p301) target = $region32
        $region31: #{tpu_custom_call.1} parent=11 // pred_region
          _
        $region32: #{tpu_custom_call.1} parent=11 // pred_fallthru
          _
        // Predicated region
        $region33: #{tpu_custom_call.1} parent=11 // pred_check
          %p304 = pneg %p201
        $region34: #{tpu_custom_call.1} parent=11 // pred_check_branch
          %306 = sbr.rel (%p304) target = $region36
        $region35: #{tpu_custom_call.1} parent=11 // pred_region
          _
        $region36: #{tpu_custom_call.1} parent=11 // pred_fallthru
          _
        // Predicated region
        $region37: #{tpu_custom_call.1} parent=11 // pred_check
          %p307 = pneg %p222
        $region38: #{tpu_custom_call.1} parent=11 // pred_check_branch
          %309 = sbr.rel (%p307) target = $region40
        $region39: #{tpu_custom_call.1} parent=11 // pred_region
          _
        $region40: #{tpu_custom_call.1} parent=11 // pred_fallthru
          _
      $region12: #{tpu_custom_call.1} parent=5 // pred_fallthru
        _
      %p310 = scmp.lt.s32.totalorder %s23, 2
      // Predicated region
      $region41: #{tpu_custom_call.1} parent=5 // pred_check
        %p311 = pneg %p310
      $region42: #{tpu_custom_call.1} parent=5 // pred_check_branch
        %313 = sbr.rel (%p311) target = $region44
      $region43: #{tpu_custom_call.1} parent=5 // pred_region
        // Predicated region
        $region45: #{tpu_custom_call.1} parent=43 // pred_check
          %p314 = pneg %p43
        $region46: #{tpu_custom_call.1} parent=43 // pred_check_branch
          %316 = sbr.rel (%p314) target = $region48
        $region47: #{tpu_custom_call.1} parent=43 // pred_region
          %s317 = sand.u32 %s33, 1
          %s318 = sand.u32 %s33, 1
          %s319 = smul.addr %s318, 16
          %s320 = scalar_lea.vmem [#allocation2], %s319
          %s321 = smul.addr %s23, 8
          %s322 = scalar_lea.vmem %s0, %s321
          // Predicated region
          $region49: #{tpu_custom_call.1} parent=47 // pred_check
            _
          $region50: #{tpu_custom_call.1} parent=47 // pred_check_branch
            %324 = sbr.rel (0) target = $region52
          $region51: #{tpu_custom_call.1} parent=47 // pred_region
            // Predicated region
            $region53: #{tpu_custom_call.1} parent=51 // pred_check
              _
            $region54: #{tpu_custom_call.1} parent=51 // pred_check_branch
              %326 = sbr.rel (0) target = $region56
            $region55: #{tpu_custom_call.1} parent=51 // pred_region
              // Predicated region
              $region68: #{tpu_custom_call.1} parent=55 // pred_check
                _
              $region69: #{tpu_custom_call.1} parent=55 // pred_check_branch
                %344 = sbr.rel (0) target = $region71
              $region70: #{tpu_custom_call.1} parent=55 // pred_region
                loop: start=0, step=1, limit=1
                $region72: #{tpu_custom_call.1} parent=70 // loop_pre_header
                  _
                $region73: #{tpu_custom_call.1} parent=70 // loop_header
                  %s346 = sphi 0, %s350
                  %p347 = scmp.ge.s32.totalorder %s346, 1
                  %s351 = sphi %s322, %s322
                  %s352 = sphi %s320, %s320
                $region74: #{tpu_custom_call.1} parent=70 // loop_header_branch
                  %349 = sbr.rel (%p347) target = $region78
                $region75: #{tpu_custom_call.1} parent=70 // loop_body
                  %v353 = vld [vmem:[%s351] sm:$0xff]
                  %354 = vst [vmem:[%s352] sm:$0xff] %v353
                  %v355 = vld [vmem:[%s351 + $0x10] sm:$0xff]
                  %356 = vst [vmem:[%s352 + $0x8] sm:$0xff] %v355
                $region76: #{tpu_custom_call.1} parent=70 // loop_footer
                  %s350 = sadd.s32 1, %s346
                $region77: #{tpu_custom_call.1} parent=70 // loop_footer_branch
                  %345 = sbr.rel target = $region73
                $region78: #{tpu_custom_call.1} parent=70 // loop_exit
                  _
              $region71: #{tpu_custom_call.1} parent=55 // pred_fallthru
                _
              // Predicated region
              $region79: #{tpu_custom_call.1} parent=55 // pred_check
                _
              $region80: #{tpu_custom_call.1} parent=55 // pred_check_branch
                %358 = sbr.rel target = $region82
              $region81: #{tpu_custom_call.1} parent=55 // pred_region
                _
              $region82: #{tpu_custom_call.1} parent=55 // pred_fallthru
                _
            $region56: #{tpu_custom_call.1} parent=51 // pred_fallthru
              _
            // Predicated region
            $region57: #{tpu_custom_call.1} parent=51 // pred_check
              _
            $region58: #{tpu_custom_call.1} parent=51 // pred_check_branch
              %328 = sbr.rel target = $region60
            $region59: #{tpu_custom_call.1} parent=51 // pred_region
              %s330 = ssub.s32 256, 1
              loop: start=0, step=1, limit=1
              $region61: #{tpu_custom_call.1} parent=59 // loop_pre_header
                _
              $region62: #{tpu_custom_call.1} parent=59 // loop_header
                %s332 = sphi 0, %s336
                %p333 = scmp.ge.s32.totalorder %s332, 1
                %s337 = sphi %s322, %s322
                %s338 = sphi %s320, %s320
              $region63: #{tpu_custom_call.1} parent=59 // loop_header_branch
                %335 = sbr.rel (%p333) target = $region67
              $region64: #{tpu_custom_call.1} parent=59 // loop_body
                %v339 = vld [vmem:[%s337] sm:%s330]
                %340 = vst [vmem:[%s338] sm:%s330] %v339
                %v341 = vld [vmem:[%s337 + $0x10] sm:%s330]
                %342 = vst [vmem:[%s338 + $0x8] sm:%s330] %v341
              $region65: #{tpu_custom_call.1} parent=59 // loop_footer
                %s336 = sadd.s32 1, %s332
              $region66: #{tpu_custom_call.1} parent=59 // loop_footer_branch
                %331 = sbr.rel target = $region62
              $region67: #{tpu_custom_call.1} parent=59 // loop_exit
                _
            $region60: #{tpu_custom_call.1} parent=51 // pred_fallthru
              _
          $region52: #{tpu_custom_call.1} parent=47 // pred_fallthru
            _
          %359 = vnop
        $region48: #{tpu_custom_call.1} parent=43 // pred_fallthru
          _
        // Predicated region
        $region83: #{tpu_custom_call.1} parent=43 // pred_check
          %p360 = pneg %p69
        $region84: #{tpu_custom_call.1} parent=43 // pred_check_branch
          %362 = sbr.rel (%p360) target = $region86
        $region85: #{tpu_custom_call.1} parent=43 // pred_region
          %s363 = sand.u32 %s59, 1
          %s364 = sand.u32 %s59, 1
          %s365 = smul.addr %s364, 16
          %s366 = scalar_lea.vmem [#allocation3], %s365
          %s367 = smul.addr %s23, 8
          %s368 = scalar_lea.vmem %s1, %s367
          // Predicated region
          $region87: #{tpu_custom_call.1} parent=85 // pred_check
            _
          $region88: #{tpu_custom_call.1} parent=85 // pred_check_branch
            %370 = sbr.rel (0) target = $region90
          $region89: #{tpu_custom_call.1} parent=85 // pred_region
            // Predicated region
            $region91: #{tpu_custom_call.1} parent=89 // pred_check
              _
            $region92: #{tpu_custom_call.1} parent=89 // pred_check_branch
              %372 = sbr.rel (0) target = $region94
            $region93: #{tpu_custom_call.1} parent=89 // pred_region
              // Predicated region
              $region106: #{tpu_custom_call.1} parent=93 // pred_check
                _
              $region107: #{tpu_custom_call.1} parent=93 // pred_check_branch
                %390 = sbr.rel (0) target = $region109
              $region108: #{tpu_custom_call.1} parent=93 // pred_region
                loop: start=0, step=1, limit=1
                $region110: #{tpu_custom_call.1} parent=108 // loop_pre_header
                  _
                $region111: #{tpu_custom_call.1} parent=108 // loop_header
                  %s392 = sphi 0, %s396
                  %p393 = scmp.ge.s32.totalorder %s392, 1
                  %s397 = sphi %s368, %s368
                  %s398 = sphi %s366, %s366
                $region112: #{tpu_custom_call.1} parent=108 // loop_header_branch
                  %395 = sbr.rel (%p393) target = $region116
                $region113: #{tpu_custom_call.1} parent=108 // loop_body
                  %v399 = vld [vmem:[%s397] sm:$0xff]
                  %400 = vst [vmem:[%s398] sm:$0xff] %v399
                  %v401 = vld [vmem:[%s397 + $0x10] sm:$0xff]
                  %402 = vst [vmem:[%s398 + $0x8] sm:$0xff] %v401
                $region114: #{tpu_custom_call.1} parent=108 // loop_footer
                  %s396 = sadd.s32 1, %s392
                $region115: #{tpu_custom_call.1} parent=108 // loop_footer_branch
                  %391 = sbr.rel target = $region111
                $region116: #{tpu_custom_call.1} parent=108 // loop_exit
                  _
              $region109: #{tpu_custom_call.1} parent=93 // pred_fallthru
                _
              // Predicated region
              $region117: #{tpu_custom_call.1} parent=93 // pred_check
                _
              $region118: #{tpu_custom_call.1} parent=93 // pred_check_branch
                %404 = sbr.rel target = $region120
              $region119: #{tpu_custom_call.1} parent=93 // pred_region
                _
              $region120: #{tpu_custom_call.1} parent=93 // pred_fallthru
                _
            $region94: #{tpu_custom_call.1} parent=89 // pred_fallthru
              _
            // Predicated region
            $region95: #{tpu_custom_call.1} parent=89 // pred_check
              _
            $region96: #{tpu_custom_call.1} parent=89 // pred_check_branch
              %374 = sbr.rel target = $region98
            $region97: #{tpu_custom_call.1} parent=89 // pred_region
              %s376 = ssub.s32 256, 1
              loop: start=0, step=1, limit=1
              $region99: #{tpu_custom_call.1} parent=97 // loop_pre_header
                _
              $region100: #{tpu_custom_call.1} parent=97 // loop_header
                %s378 = sphi 0, %s382
                %p379 = scmp.ge.s32.totalorder %s378, 1
                %s383 = sphi %s368, %s368
                %s384 = sphi %s366, %s366
              $region101: #{tpu_custom_call.1} parent=97 // loop_header_branch
                %381 = sbr.rel (%p379) target = $region105
              $region102: #{tpu_custom_call.1} parent=97 // loop_body
                %v385 = vld [vmem:[%s383] sm:%s376]
                %386 = vst [vmem:[%s384] sm:%s376] %v385
                %v387 = vld [vmem:[%s383 + $0x10] sm:%s376]
                %388 = vst [vmem:[%s384 + $0x8] sm:%s376] %v387
              $region103: #{tpu_custom_call.1} parent=97 // loop_footer
                %s382 = sadd.s32 1, %s378
              $region104: #{tpu_custom_call.1} parent=97 // loop_footer_branch
                %377 = sbr.rel target = $region100
              $region105: #{tpu_custom_call.1} parent=97 // loop_exit
                _
            $region98: #{tpu_custom_call.1} parent=89 // pred_fallthru
              _
          $region90: #{tpu_custom_call.1} parent=85 // pred_fallthru
            _
          %405 = vnop
        $region86: #{tpu_custom_call.1} parent=43 // pred_fallthru
          _
      $region44: #{tpu_custom_call.1} parent=5 // pred_fallthru
        _
      %p406 = scmp.le.s32.totalorder 1, %s23
      %p407 = scmp.lt.s32.totalorder %s23, 3
      %p408 = pnand %p406, %p407
      %p409 = pneg %p408
      // Predicated region
      $region121: #{tpu_custom_call.1} parent=5 // pred_check
        _
      $region122: #{tpu_custom_call.1} parent=5 // pred_check_branch
        %411 = sbr.rel (%p408) target = $region124
      $region123: #{tpu_custom_call.1} parent=5 // pred_region
        %s412 = ssub.s32 %s23, 1
        %s413 = sand.u32 %s36, 1
        %s414 = sand.u32 %s36, 1
        %s415 = smul.addr %s414, 16
        %s416 = scalar_lea.vmem [#allocation2], %s415
        // Predicated region
        $region125: #{tpu_custom_call.1} parent=123 // pred_check
          %p417 = pneg %p49
        $region126: #{tpu_custom_call.1} parent=123 // pred_check_branch
          %419 = sbr.rel (%p417) target = $region128
        $region127: #{tpu_custom_call.1} parent=123 // pred_region
          _
        $region128: #{tpu_custom_call.1} parent=123 // pred_fallthru
          _
        %s420 = sand.u32 %s62, 1
        %s421 = sand.u32 %s62, 1
        %s422 = smul.addr %s421, 16
        %s423 = scalar_lea.vmem [#allocation3], %s422
        // Predicated region
        $region129: #{tpu_custom_call.1} parent=123 // pred_check
          %p424 = pneg %p75
        $region130: #{tpu_custom_call.1} parent=123 // pred_check_branch
          %426 = sbr.rel (%p424) target = $region132
        $region131: #{tpu_custom_call.1} parent=123 // pred_region
          _
        $region132: #{tpu_custom_call.1} parent=123 // pred_fallthru
          _
        %s427 = sand.u32 %s36, 1
        %s428 = sand.u32 %s36, 1
        %s429 = smul.addr %s428, 16
        %s430 = scalar_lea.vmem [#allocation2], %s429
        %p431 = pneg %p49
        %p432 = pneg %p46
        %s433 = sand.u32 %s62, 1
        %s434 = sand.u32 %s62, 1
        %s435 = smul.addr %s434, 16
        %s436 = scalar_lea.vmem [#allocation3], %s435
        %p437 = pneg %p75
        %p438 = pneg %p72
        %p439 = pneg %p96
        %p440 = pneg %p93
        %p441 = pneg %p117
        %p442 = pneg %p114
        %p443 = pneg %p138
        %p444 = pneg %p135
        %p445 = pneg %p159
        %p446 = pneg %p156
        %p447 = pneg %p180
        %p448 = pneg %p177
        %p449 = pneg %p201
        %p450 = pneg %p198
        %p451 = pneg %p222
        %p452 = pneg %p219
        %p453 = pneg %p248
        %p454 = pneg %p245
        %s455 = sand.u32 %s235, 1
        %s456 = scalar_lea.sflag [#allocation5], %s455
        %s457 = sand.u32 %s235, 1
        %s458 = smul.addr %s457, 8
        %s459 = scalar_lea.vmem [#allocation4], %s458
        %p460 = pneg %p274
        %p461 = pneg %p271
        %s462 = sand.u32 %s261, 1
        %s463 = scalar_lea.sflag [#allocation7], %s462
        %s464 = sand.u32 %s261, 1
        %s465 = smul.addr %s464, 8
        %s466 = scalar_lea.vmem [#allocation6], %s465
        %v468 = vld [vmem:[%s416] sm:$0xff]
        %v469 = vld [vmem:[%s416 + $0x8] sm:$0xff]
        %v470 = vld [vmem:[%s423] sm:$0xff]
        %v471 = vld [vmem:[%s423 + $0x8] sm:$0xff]
        %v472 = vpack.c.bf16 %v469, %v468
        %v473 = vpack.c.bf16 %v471, %v470
        %v474 = vld [vmem:[%s2] sm:$0xff]
        %v475 = vld [vmem:[%s2 + $0x8] sm:$0xff]
        %v476 = vld [vmem:[%s2 + $0x10] sm:$0xff]
        %v477 = vld [vmem:[%s2 + $0x18] sm:$0xff]
        %v478 = vld [vmem:[%s3] sm:$0xff]
        %v479 = vld [vmem:[%s3 + $0x8] sm:$0xff]
        %v480 = vld [vmem:[%s3 + $0x10] sm:$0xff]
        %v481 = vld [vmem:[%s3 + $0x18] sm:$0xff]
        %v486 = vunpack.c.l.b16 %v478
        %v487 = vunpack.c.h.b16 %v478
        %v488 = vunpack.c.l.b16 %v479
        %v489 = vunpack.c.h.b16 %v479
        %v490 = vunpack.c.l.b16 %v480
        %v491 = vunpack.c.h.b16 %v480
        %v492 = vunpack.c.l.b16 %v481
        %v493 = vunpack.c.h.b16 %v481
        %v494 = vpack.c.b16 %v488, %v486
        %v495 = vpack.c.b16 %v489, %v487
        %v496 = vpack.c.b16 %v492, %v490
        %v497 = vpack.c.b16 %v493, %v491
        %vm502 = vcmask 261120
        %v504 = vsel %vm502, %v473, 0
        %506 = vmatpush.bf16.msra.mxu0 0
        %507 = vmatpush.bf16.msra.mxu0 0
        %508 = vmatpush.bf16.msra.mxu0 0
        %509 = vmatpush.bf16.msra.mxu0 0
        %510 = vmatpush.bf16.msra.mxu0 0
        %511 = vmatpush.bf16.msra.mxu0 0
        %512 = vmatpush.bf16.msra.mxu0 %v496
        %513 = vmatpush.bf16.msra.mxu0 %v494
        %514 = vmatmul.bf16.gmra.mxu0 %v504
        %v515 = vpop.f32.mrf.mxu0
        %v516 = vadd.f32 0.0, %v515
        %v517 = vpop.f32.mrf.mxu0
        %v518 = vadd.f32 0.0, %v517
        %519 = vdwg.mxu0
        %520 = vmatpush.bf16.msra.mxu0 0
        %521 = vmatpush.bf16.msra.mxu0 0
        %522 = vmatpush.bf16.msra.mxu0 0
        %523 = vmatpush.bf16.msra.mxu0 0
        %524 = vmatpush.bf16.msra.mxu0 0
        %525 = vmatpush.bf16.msra.mxu0 0
        %526 = vmatpush.bf16.msra.mxu0 %v497
        %527 = vmatpush.bf16.msra.mxu0 %v495
        %528 = vmatmul.bf16.gmra.mxu0 %v504
        %v529 = vpop.f32.mrf.mxu0
        %v530 = vadd.f32 0.0, %v529
        %v531 = vpop.f32.mrf.mxu0
        %v532 = vadd.f32 0.0, %v531
        %533 = vdwg.mxu0
        %v538 = vunpack.c.l.b16 %v474
        %v539 = vunpack.c.h.b16 %v474
        %v540 = vunpack.c.l.b16 %v475
        %v541 = vunpack.c.h.b16 %v475
        %v542 = vunpack.c.l.b16 %v476
        %v543 = vunpack.c.h.b16 %v476
        %v544 = vunpack.c.l.b16 %v477
        %v545 = vunpack.c.h.b16 %v477
        %v546 = vpack.c.b16 %v540, %v538
        %v547 = vpack.c.b16 %v541, %v539
        %v548 = vpack.c.b16 %v544, %v542
        %v549 = vpack.c.b16 %v545, %v543
        %v555 = vsel %vm502, %v472, 0
        %557 = vmatpush.bf16.msra.mxu0 0
        %558 = vmatpush.bf16.msra.mxu0 0
        %559 = vmatpush.bf16.msra.mxu0 0
        %560 = vmatpush.bf16.msra.mxu0 0
        %561 = vmatpush.bf16.msra.mxu0 0
        %562 = vmatpush.bf16.msra.mxu0 0
        %563 = vmatpush.bf16.msra.mxu0 %v548
        %564 = vmatpush.bf16.msra.mxu0 %v546
        %565 = vmatmul.bf16.gmra.mxu0 %v555
        %v566 = vpop.f32.mrf.mxu0
        %v567 = vadd.f32 %v516, %v566
        %v568 = vpop.f32.mrf.mxu0
        %v569 = vadd.f32 %v518, %v568
        %570 = vdwg.mxu0
        %571 = vmatpush.bf16.msra.mxu0 0
        %572 = vmatpush.bf16.msra.mxu0 0
        %573 = vmatpush.bf16.msra.mxu0 0
        %574 = vmatpush.bf16.msra.mxu0 0
        %575 = vmatpush.bf16.msra.mxu0 0
        %576 = vmatpush.bf16.msra.mxu0 0
        %577 = vmatpush.bf16.msra.mxu0 %v549
        %578 = vmatpush.bf16.msra.mxu0 %v547
        %579 = vmatmul.bf16.gmra.mxu0 %v555
        %v580 = vpop.f32.mrf.mxu0
        %v581 = vadd.f32 %v530, %v580
        %v582 = vpop.f32.mrf.mxu0
        %v583 = vadd.f32 %v532, %v582
        %584 = vdwg.mxu0
        %v585 = vld [vmem:[%s4] sm:$0x3]
        %v587 = vperm.slane %v585, 0
        %v588 = vperm.slane %v585, 1
        %v591 = vadd.f32 %v567, %v587
        %v592 = vadd.f32 %v581, %v588
        %v593 = vadd.f32 %v569, %v587
        %v594 = vadd.f32 %v583, %v588
        %v595 = vmax.f32 %v591, 0.0
        %v596 = vmax.f32 %v592, 0.0
        %v597 = vmax.f32 %v593, 0.0
        %v598 = vmax.f32 %v594, 0.0
        %v599 = vpack.c.bf16 %v597, %v595
        %v600 = vld [vmem:[%s5] sm:$0xf]
        %v601 = vld [vmem:[%s5 + $0x4] sm:$0xf]
        %v602 = vld [vmem:[%s5 + $0x8] sm:$0xf]
        %v603 = vld [vmem:[%s5 + $0xc] sm:$0xf]
        %v604 = vld [vmem:[%s5 + $0x10] sm:$0xf]
        %v605 = vld [vmem:[%s5 + $0x14] sm:$0xf]
        %v606 = vld [vmem:[%s5 + $0x18] sm:$0xf]
        %v607 = vld [vmem:[%s5 + $0x1c] sm:$0xf]
        %v608 = vld [vmem:[%s5 + $0x20] sm:$0xf]
        %v609 = vld [vmem:[%s5 + $0x24] sm:$0xf]
        %v610 = vld [vmem:[%s5 + $0x28] sm:$0xf]
        %v611 = vld [vmem:[%s5 + $0x2c] sm:$0xf]
        %v612 = vld [vmem:[%s5 + $0x30] sm:$0xf]
        %v613 = vld [vmem:[%s5 + $0x34] sm:$0xf]
        %v614 = vld [vmem:[%s5 + $0x38] sm:$0xf]
        %v615 = vld [vmem:[%s5 + $0x3c] sm:$0xf]
        %v616 = vld [vmem:[%s6] sm:$0x1]
        %v618 = vperm.slane %v616, 0
        %v636 = vunpack.c.l.b16 %v600
        %v637 = vunpack.c.l.b16 %v601
        %v638 = vunpack.c.l.b16 %v602
        %v639 = vunpack.c.l.b16 %v603
        %v640 = vunpack.c.l.b16 %v604
        %v641 = vunpack.c.l.b16 %v605
        %v642 = vunpack.c.l.b16 %v606
        %v643 = vunpack.c.l.b16 %v607
        %v644 = vunpack.c.l.b16 %v608
        %v645 = vunpack.c.l.b16 %v609
        %v646 = vunpack.c.l.b16 %v610
        %v647 = vunpack.c.l.b16 %v611
        %v648 = vunpack.c.l.b16 %v612
        %v649 = vunpack.c.l.b16 %v613
        %v650 = vunpack.c.l.b16 %v614
        %v651 = vunpack.c.l.b16 %v615
        %v652 = vpack.c.b16 %v637, %v636
        %v653 = vpack.c.b16 %v639, %v638
        %v654 = vpack.c.b16 %v641, %v640
        %v655 = vpack.c.b16 %v643, %v642
        %v656 = vpack.c.b16 %v645, %v644
        %v657 = vpack.c.b16 %v647, %v646
        %v658 = vpack.c.b16 %v649, %v648
        %v659 = vpack.c.b16 %v651, %v650
        %668 = vmatpush.bf16.msra.mxu0 %v659
        %669 = vmatpush.bf16.msra.mxu0 %v658
        %670 = vmatpush.bf16.msra.mxu0 %v657
        %671 = vmatpush.bf16.msra.mxu0 %v656
        %672 = vmatpush.bf16.msra.mxu0 %v655
        %673 = vmatpush.bf16.msra.mxu0 %v654
        %674 = vmatpush.bf16.msra.mxu0 %v653
        %675 = vmatpush.bf16.msra.mxu0 %v652
        %676 = vmatmul.bf16.gmra.mxu0 %v599
        %v677 = vpop.f32.mrf.mxu0
        %v678 = vadd.f32 %v618, %v677
        %v679 = vpop.f32.mrf.mxu0
        %v680 = vadd.f32 %v618, %v679
        %681 = vdwg.mxu0
        %v682 = vadd.f32 %v596, %v598
        %v683 = vrcp.pop 2.0
        %v684 = vmul.f32 2.0, %v683
        %v685 = vsub.f32 1.0, %v684
        %v686 = vmul.f32 %v683, %v685
        %v687 = vadd.f32 %v683, %v686
        %vm688 = vweird.f32 %v683
        %v689 = vsel %vm688, %v683, %v687
        %v690 = vmul.f32 %v682, %v689
        %v691 = vpack.c.bf16 %v690, %v690
        %v692 = vld [vmem:[%s7] sm:$0xf]
        %v693 = vld [vmem:[%s7 + $0x4] sm:$0xf]
        %v694 = vld [vmem:[%s7 + $0x8] sm:$0xf]
        %v695 = vld [vmem:[%s7 + $0xc] sm:$0xf]
        %v696 = vld [vmem:[%s7 + $0x10] sm:$0xf]
        %v697 = vld [vmem:[%s7 + $0x14] sm:$0xf]
        %v698 = vld [vmem:[%s7 + $0x18] sm:$0xf]
        %v699 = vld [vmem:[%s7 + $0x1c] sm:$0xf]
        %v700 = vld [vmem:[%s7 + $0x20] sm:$0xf]
        %v701 = vld [vmem:[%s7 + $0x24] sm:$0xf]
        %v702 = vld [vmem:[%s7 + $0x28] sm:$0xf]
        %v703 = vld [vmem:[%s7 + $0x2c] sm:$0xf]
        %v704 = vld [vmem:[%s7 + $0x30] sm:$0xf]
        %v705 = vld [vmem:[%s7 + $0x34] sm:$0xf]
        %v706 = vld [vmem:[%s7 + $0x38] sm:$0xf]
        %v707 = vld [vmem:[%s7 + $0x3c] sm:$0xf]
        %v708 = vld [vmem:[%s8] sm:$0x1]
        %v710 = vperm.slane %v708, 0
        %v728 = vunpack.c.l.b16 %v692
        %v729 = vunpack.c.l.b16 %v693
        %v730 = vunpack.c.l.b16 %v694
        %v731 = vunpack.c.l.b16 %v695
        %v732 = vunpack.c.l.b16 %v696
        %v733 = vunpack.c.l.b16 %v697
        %v734 = vunpack.c.l.b16 %v698
        %v735 = vunpack.c.l.b16 %v699
        %v736 = vunpack.c.l.b16 %v700
        %v737 = vunpack.c.l.b16 %v701
        %v738 = vunpack.c.l.b16 %v702
        %v739 = vunpack.c.l.b16 %v703
        %v740 = vunpack.c.l.b16 %v704
        %v741 = vunpack.c.l.b16 %v705
        %v742 = vunpack.c.l.b16 %v706
        %v743 = vunpack.c.l.b16 %v707
        %v744 = vpack.c.b16 %v729, %v728
        %v745 = vpack.c.b16 %v731, %v730
        %v746 = vpack.c.b16 %v733, %v732
        %v747 = vpack.c.b16 %v735, %v734
        %v748 = vpack.c.b16 %v737, %v736
        %v749 = vpack.c.b16 %v739, %v738
        %v750 = vpack.c.b16 %v741, %v740
        %v751 = vpack.c.b16 %v743, %v742
        %760 = vmatpush.bf16.msra.mxu0 %v751
        %761 = vmatpush.bf16.msra.mxu0 %v750
        %762 = vmatpush.bf16.msra.mxu0 %v749
        %763 = vmatpush.bf16.msra.mxu0 %v748
        %764 = vmatpush.bf16.msra.mxu0 %v747
        %765 = vmatpush.bf16.msra.mxu0 %v746
        %766 = vmatpush.bf16.msra.mxu0 %v745
        %767 = vmatpush.bf16.msra.mxu0 %v744
        %768 = vmatmul.bf16.gmra.mxu0 %v691
        %v769 = vpop.f32.mrf.mxu0
        %v770 = vadd.f32 %v710, %v769
        %v771 = vpop.f32.mrf.mxu0
        %772 = vdwg.mxu0
        %v773 = vand.u32 2147483647, %v770
        %v774 = vsub.f32 0.0, %v773
        %v775 = vmul.f32 %v774, 1.442695
        %v776 = vpow.pop %v775
        %vm777 = vcmp.ge.f32.partialorder %v770, 0.0
        %v778 = vsel %vm777, 1.0, %v776
        %v779 = vadd.f32 %v776, 1.0
        %v780 = vrcp.pop %v779
        %v781 = vmul.f32 %v779, %v780
        %v782 = vsub.f32 1.0, %v781
        %v783 = vmul.f32 %v780, %v782
        %v784 = vadd.f32 %v780, %v783
        %vm785 = vweird.f32 %v779
        %vm786 = vweird.f32 %v780
        %vm787 = vmor %vm785, %vm786
        %v788 = vsel %vm787, %v780, %v784
        %v789 = vand.u32 2147483647, %v779
        %vm790 = vcmp.eq.f32.partialorder %v789, 8.507059e+37
        %v791 = vand.u32 %v779, 2147483648
        %v792 = vor.u32 1.1754944e-38, %v791
        %v793 = vsel %vm790, %v792, %v788
        %v794 = vmul.f32 %v778, %v793
        %v795 = vsel %vm502, %v470, inf
        %v796 = vsel %vm502, %v471, inf
        %v797 = vmin.f32 %v795, %v796
        %v798 = vmul.f32 %v797, %v794
        %799 = vst.msk [vmem:[%s466] sm:$0xff] %vm502, %v798
        %v800 = vand.u32 2147483647, %v468
        %vm801 = vcmp.le.f32.partialorder %v800, 0.7853982
        %vm802 = vcmp.lt.s32.totalorder %v468, 0
        %v803 = vand.u32 %v468, 2139095040
        %v804 = vshrl.u32 %v803, 23
        %v805 = vsub.s32 %v804, 127
        %v806 = vand.u32 2147483647, %v468
        %v807 = vand.u32 %v806, 8388607
        %v808 = vor.u32 %v807, 8388608
        %v809 = vsub.s32 0, %v808
        %v810 = vadd.s32 %v805, 1
        %vm811 = vcmp.gt.s32.totalorder %v810, 0
        %v812 = vsel %vm811, %v810, 0
        %v813 = vshrl.u32 %v812, 5
        %v814 = vand.u32 %v812, 31
        %v815 = vsub.s32 32, %v814
        %v816 = vshrl.u32 683565275, %v815
        %v817 = vshll.u32 683565275, %v814
        %v818 = vshrl.u32 2475754826, %v815
        %v819 = vor.u32 %v817, %v818
        %v820 = vshll.u32 2475754826, %v814
        %v821 = vshrl.u32 2131351028, %v815
        %v822 = vor.u32 %v820, %v821
        %v823 = vshll.u32 2131351028, %v814
        %v824 = vshrl.u32 2102212464, %v815
        %v825 = vor.u32 %v823, %v824
        %v826 = vshll.u32 2102212464, %v814
        %v827 = vshrl.u32 920167782, %v815
        %v828 = vor.u32 %v826, %v827
        %v829 = vshll.u32 920167782, %v814
        %v830 = vshrl.u32 1326507024, %v815
        %v831 = vor.u32 %v829, %v830
        %vm832 = vcmp.lt.s32.totalorder %v813, 1
        %vm833 = vcmp.lt.s32.totalorder %v813, 2
        %vm834 = vcmp.lt.s32.totalorder %v813, 3
        %vm835 = vcmp.lt.s32.totalorder %v813, 4
        %v836 = vsel %vm832, %v816, %v819
        %v837 = vsel %vm835, %v825, 2102212464
        %v838 = vsel %vm834, %v822, %v837
        %v839 = vsel %vm833, %v836, %v838
        %v840 = vsel %vm832, %v819, %v822
        %v841 = vsel %vm835, %v828, 920167782
        %v842 = vsel %vm834, %v825, %v841
        %v843 = vsel %vm833, %v840, %v842
        %v844 = vsel %vm832, %v822, %v825
        %v845 = vsel %vm835, %v831, 1326507024
        %v846 = vsel %vm834, %v828, %v845
        %v847 = vsel %vm833, %v844, %v846
        %v848 = vshll.u32 %v808, 8
        %v849 = vand.u32 %v848, 65535
        %v850 = vshrl.u32 %v848, 16
        %v851 = vand.u32 %v847, 65535
        %v852 = vshrl.u32 %v847, 16
        %v853 = vmul.u32 %v849, %v851
        %v854 = vmul.u32 %v849, %v852
        %v855 = vmul.u32 %v850, %v851
        %v856 = vmul.u32 %v850, %v852
        %v857 = vshll.u32 %v854, 16
        %v858 = vshrl.u32 %v854, 16
        %v859 = vshll.u32 %v855, 16
        %v860 = vshrl.u32 %v855, 16
        %vm861 = vc.u32 %v853, %v857
        %v862 = vsel %vm861, 1, 0
        %v863 = vadd.s32 %v853, %v857
        %v864 = vadd.s32 %v856, %v862
        %vm865 = vc.u32 %v863, %v859
        %v866 = vsel %vm865, 1, 0
        %v867 = vadd.s32 %v863, %v859
        %v868 = vadd.s32 %v864, %v866
        %v869 = vadd.s32 %v868, %v858
        %v870 = vadd.s32 %v869, %v860
        %v871 = vand.u32 %v848, 65535
        %v872 = vshrl.u32 %v848, 16
        %v873 = vand.u32 %v843, 65535
        %v874 = vshrl.u32 %v843, 16
        %v875 = vmul.u32 %v871, %v873
        %v876 = vmul.u32 %v871, %v874
        %v877 = vmul.u32 %v872, %v873
        %v878 = vmul.u32 %v872, %v874
        %v879 = vshll.u32 %v876, 16
        %v880 = vshrl.u32 %v876, 16
        %v881 = vshll.u32 %v877, 16
        %v882 = vshrl.u32 %v877, 16
        %vm883 = vc.u32 %v875, %v879
        %v884 = vsel %vm883, 1, 0
        %v885 = vadd.s32 %v875, %v879
        %v886 = vadd.s32 %v878, %v884
        %vm887 = vc.u32 %v885, %v881
        %v888 = vsel %vm887, 1, 0
        %v889 = vadd.s32 %v885, %v881
        %v890 = vadd.s32 %v886, %v888
        %v891 = vadd.s32 %v890, %v880
        %v892 = vadd.s32 %v891, %v882
        %v893 = vmul.u32 %v848, %v839
        %v894 = vadd.s32 %v870, %v889
        %vm895 = vc.u32 %v870, %v889
        %v896 = vadd.s32 %v892, 1
        %v897 = vsel %vm895, %v896, %v892
        %v898 = vadd.s32 %v893, %v897
        %v899 = vadd.s32 %v898, 536870912
        %v900 = vshrl.u32 %v899, 30
        %v901 = vshll.u32 %v900, 30
        %v902 = vsub.s32 %v898, %v901
        %vm903 = vcmp.lt.s32.totalorder %v902, 0
        %v904 = vsub.s32 0, %v902
        %v905 = vsel %vm903, %v904, %v902
        %v906 = vclz %v905
        %v907 = vsub.s32 %v906, 2
        %vm908 = vcmp.gt.s32.totalorder 0, %v907
        %v909 = vsel %vm908, 0, %v907
        %v910 = vsub.s32 32, %v909
        %v911 = vshll.u32 %v902, %v909
        %v912 = vshrl.u32 %v894, %v910
        %v913 = vor.u32 %v911, %v912
        %v914 = vsub.s32 4294967266, %v909
        %v915 = vadd.s32 %v914, 127
        %v916 = vshll.u32 %v915, 23
        %v917 = vor.u32 4788187, %v916
        %v918 = vand.u32 2147483647, %v917
        %v920 = vcvt.s32.f32 %v913
        %v921 = vmul.f32 %v920, %v918
        %v922 = vxor.u32 %v921, 2147483648
        %v923 = vsel %vm802, %v922, %v921
        %v924 = vsub.s32 4, %v900
        %v925 = vsel %vm802, %v924, %v900
        %v926 = vsel %vm801, %v468, %v923
        %v927 = vsel %vm801, 0, %v925
        %v928 = vmul.f32 %v926, %v926
        %v929 = vmul.f32 %v928, -0.001358992
        %v930 = vadd.f32 %v929, 0.041655596
        %v931 = vmul.f32 %v928, %v930
        %v932 = vadd.f32 %v931, -0.4999988
        %v933 = vmul.f32 %v928, %v932
        %v934 = vadd.f32 1.0, %v933
        %v935 = vmul.f32 %v926, %v926
        %v936 = vmul.f32 %v935, -0.00019511016
        %v937 = vadd.f32 %v936, 0.008332121
        %v938 = vmul.f32 %v935, %v937
        %v939 = vadd.f32 %v938, -0.16666654
        %v940 = vmul.f32 %v935, %v939
        %v941 = vadd.f32 %v940, 1.0
        %v942 = vmul.f32 %v941, %v926
        %vm943 = vweird.f32 %v468
        %v944 = vand.u32 %v927, 3
        %vm945 = vcmp.lt.s32.totalorder %v944, 2
        %vm946 = vcmp.eq.s32.totalorder %v944, 0
        %v947 = vxor.u32 %v942, 2147483648
        %v948 = vsel %vm946, %v934, %v947
        %vm949 = vcmp.eq.s32.totalorder %v944, 2
        %v950 = vxor.u32 %v934, 2147483648
        %v951 = vsel %vm949, %v950, %v942
        %v952 = vsel %vm945, %v948, %v951
        %v953 = vsel %vm943, nan, %v952
        %v954 = vand.u32 2147483647, %v469
        %vm955 = vcmp.le.f32.partialorder %v954, 0.7853982
        %vm956 = vcmp.lt.s32.totalorder %v469, 0
        %v957 = vand.u32 %v469, 2139095040
        %v958 = vshrl.u32 %v957, 23
        %v959 = vsub.s32 %v958, 127
        %v960 = vand.u32 2147483647, %v469
        %v961 = vand.u32 %v960, 8388607
        %v962 = vor.u32 %v961, 8388608
        %v963 = vsub.s32 0, %v962
        %v964 = vadd.s32 %v959, 1
        %vm965 = vcmp.gt.s32.totalorder %v964, 0
        %v966 = vsel %vm965, %v964, 0
        %v967 = vshrl.u32 %v966, 5
        %v968 = vand.u32 %v966, 31
        %v969 = vsub.s32 32, %v968
        %v970 = vshrl.u32 683565275, %v969
        %v971 = vshll.u32 683565275, %v968
        %v972 = vshrl.u32 2475754826, %v969
        %v973 = vor.u32 %v971, %v972
        %v974 = vshll.u32 2475754826, %v968
        %v975 = vshrl.u32 2131351028, %v969
        %v976 = vor.u32 %v974, %v975
        %v977 = vshll.u32 2131351028, %v968
        %v978 = vshrl.u32 2102212464, %v969
        %v979 = vor.u32 %v977, %v978
        %v980 = vshll.u32 2102212464, %v968
        %v981 = vshrl.u32 920167782, %v969
        %v982 = vor.u32 %v980, %v981
        %v983 = vshll.u32 920167782, %v968
        %v984 = vshrl.u32 1326507024, %v969
        %v985 = vor.u32 %v983, %v984
        %vm986 = vcmp.lt.s32.totalorder %v967, 1
        %vm987 = vcmp.lt.s32.totalorder %v967, 2
        %vm988 = vcmp.lt.s32.totalorder %v967, 3
        %vm989 = vcmp.lt.s32.totalorder %v967, 4
        %v990 = vsel %vm986, %v970, %v973
        %v991 = vsel %vm989, %v979, 2102212464
        %v992 = vsel %vm988, %v976, %v991
        %v993 = vsel %vm987, %v990, %v992
        %v994 = vsel %vm986, %v973, %v976
        %v995 = vsel %vm989, %v982, 920167782
        %v996 = vsel %vm988, %v979, %v995
        %v997 = vsel %vm987, %v994, %v996
        %v998 = vsel %vm986, %v976, %v979
        %v999 = vsel %vm989, %v985, 1326507024
        %v1000 = vsel %vm988, %v982, %v999
        %v1001 = vsel %vm987, %v998, %v1000
        %v1002 = vshll.u32 %v962, 8
        %v1003 = vand.u32 %v1002, 65535
        %v1004 = vshrl.u32 %v1002, 16
        %v1005 = vand.u32 %v1001, 65535
        %v1006 = vshrl.u32 %v1001, 16
        %v1007 = vmul.u32 %v1003, %v1005
        %v1008 = vmul.u32 %v1003, %v1006
        %v1009 = vmul.u32 %v1004, %v1005
        %v1010 = vmul.u32 %v1004, %v1006
        %v1011 = vshll.u32 %v1008, 16
        %v1012 = vshrl.u32 %v1008, 16
        %v1013 = vshll.u32 %v1009, 16
        %v1014 = vshrl.u32 %v1009, 16
        %vm1015 = vc.u32 %v1007, %v1011
        %v1016 = vsel %vm1015, 1, 0
        %v1017 = vadd.s32 %v1007, %v1011
        %v1018 = vadd.s32 %v1010, %v1016
        %vm1019 = vc.u32 %v1017, %v1013
        %v1020 = vsel %vm1019, 1, 0
        %v1021 = vadd.s32 %v1017, %v1013
        %v1022 = vadd.s32 %v1018, %v1020
        %v1023 = vadd.s32 %v1022, %v1012
        %v1024 = vadd.s32 %v1023, %v1014
        %v1025 = vand.u32 %v1002, 65535
        %v1026 = vshrl.u32 %v1002, 16
        %v1027 = vand.u32 %v997, 65535
        %v1028 = vshrl.u32 %v997, 16
        %v1029 = vmul.u32 %v1025, %v1027
        %v1030 = vmul.u32 %v1025, %v1028
        %v1031 = vmul.u32 %v1026, %v1027
        %v1032 = vmul.u32 %v1026, %v1028
        %v1033 = vshll.u32 %v1030, 16
        %v1034 = vshrl.u32 %v1030, 16
        %v1035 = vshll.u32 %v1031, 16
        %v1036 = vshrl.u32 %v1031, 16
        %vm1037 = vc.u32 %v1029, %v1033
        %v1038 = vsel %vm1037, 1, 0
        %v1039 = vadd.s32 %v1029, %v1033
        %v1040 = vadd.s32 %v1032, %v1038
        %vm1041 = vc.u32 %v1039, %v1035
        %v1042 = vsel %vm1041, 1, 0
        %v1043 = vadd.s32 %v1039, %v1035
        %v1044 = vadd.s32 %v1040, %v1042
        %v1045 = vadd.s32 %v1044, %v1034
        %v1046 = vadd.s32 %v1045, %v1036
        %v1047 = vmul.u32 %v1002, %v993
        %v1048 = vadd.s32 %v1024, %v1043
        %vm1049 = vc.u32 %v1024, %v1043
        %v1050 = vadd.s32 %v1046, 1
        %v1051 = vsel %vm1049, %v1050, %v1046
        %v1052 = vadd.s32 %v1047, %v1051
        %v1053 = vadd.s32 %v1052, 536870912
        %v1054 = vshrl.u32 %v1053, 30
        %v1055 = vshll.u32 %v1054, 30
        %v1056 = vsub.s32 %v1052, %v1055
        %vm1057 = vcmp.lt.s32.totalorder %v1056, 0
        %v1058 = vsub.s32 0, %v1056
        %v1059 = vsel %vm1057, %v1058, %v1056
        %v1060 = vclz %v1059
        %v1061 = vsub.s32 %v1060, 2
        %vm1062 = vcmp.gt.s32.totalorder 0, %v1061
        %v1063 = vsel %vm1062, 0, %v1061
        %v1064 = vsub.s32 32, %v1063
        %v1065 = vshll.u32 %v1056, %v1063
        %v1066 = vshrl.u32 %v1048, %v1064
        %v1067 = vor.u32 %v1065, %v1066
        %v1068 = vsub.s32 4294967266, %v1063
        %v1069 = vadd.s32 %v1068, 127
        %v1070 = vshll.u32 %v1069, 23
        %v1071 = vor.u32 4788187, %v1070
        %v1072 = vand.u32 2147483647, %v1071
        %v1074 = vcvt.s32.f32 %v1067
        %v1075 = vmul.f32 %v1074, %v1072
        %v1076 = vxor.u32 %v1075, 2147483648
        %v1077 = vsel %vm956, %v1076, %v1075
        %v1078 = vsub.s32 4, %v1054
        %v1079 = vsel %vm956, %v1078, %v1054
        %v1080 = vsel %vm955, %v469, %v1077
        %v1081 = vsel %vm955, 0, %v1079
        %v1082 = vmul.f32 %v1080, %v1080
        %v1083 = vmul.f32 %v1082, -0.001358992
        %v1084 = vadd.f32 %v1083, 0.041655596
        %v1085 = vmul.f32 %v1082, %v1084
        %v1086 = vadd.f32 %v1085, -0.4999988
        %v1087 = vmul.f32 %v1082, %v1086
        %v1088 = vadd.f32 1.0, %v1087
        %v1089 = vmul.f32 %v1080, %v1080
        %v1090 = vmul.f32 %v1089, -0.00019511016
        %v1091 = vadd.f32 %v1090, 0.008332121
        %v1092 = vmul.f32 %v1089, %v1091
        %v1093 = vadd.f32 %v1092, -0.16666654
        %v1094 = vmul.f32 %v1089, %v1093
        %v1095 = vadd.f32 %v1094, 1.0
        %v1096 = vmul.f32 %v1095, %v1080
        %vm1097 = vweird.f32 %v469
        %v1098 = vand.u32 %v1081, 3
        %vm1099 = vcmp.lt.s32.totalorder %v1098, 2
        %vm1100 = vcmp.eq.s32.totalorder %v1098, 0
        %v1101 = vxor.u32 %v1096, 2147483648
        %v1102 = vsel %vm1100, %v1088, %v1101
        %vm1103 = vcmp.eq.s32.totalorder %v1098, 2
        %v1104 = vxor.u32 %v1088, 2147483648
        %v1105 = vsel %vm1103, %v1104, %v1096
        %v1106 = vsel %vm1099, %v1102, %v1105
        %v1107 = vsel %vm1097, nan, %v1106
        %v1108 = vand.u32 2147483647, %v468
        %vm1109 = vcmp.le.f32.partialorder %v1108, 0.7853982
        %vm1110 = vcmp.lt.s32.totalorder %v468, 0
        %v1111 = vand.u32 %v468, 2139095040
        %v1112 = vshrl.u32 %v1111, 23
        %v1113 = vsub.s32 %v1112, 127
        %v1114 = vand.u32 2147483647, %v468
        %v1115 = vand.u32 %v1114, 8388607
        %v1116 = vor.u32 %v1115, 8388608
        %v1117 = vsub.s32 0, %v1116
        %v1118 = vadd.s32 %v1113, 1
        %vm1119 = vcmp.gt.s32.totalorder %v1118, 0
        %v1120 = vsel %vm1119, %v1118, 0
        %v1121 = vshrl.u32 %v1120, 5
        %v1122 = vand.u32 %v1120, 31
        %v1123 = vsub.s32 32, %v1122
        %v1124 = vshrl.u32 683565275, %v1123
        %v1125 = vshll.u32 683565275, %v1122
        %v1126 = vshrl.u32 2475754826, %v1123
        %v1127 = vor.u32 %v1125, %v1126
        %v1128 = vshll.u32 2475754826, %v1122
        %v1129 = vshrl.u32 2131351028, %v1123
        %v1130 = vor.u32 %v1128, %v1129
        %v1131 = vshll.u32 2131351028, %v1122
        %v1132 = vshrl.u32 2102212464, %v1123
        %v1133 = vor.u32 %v1131, %v1132
        %v1134 = vshll.u32 2102212464, %v1122
        %v1135 = vshrl.u32 920167782, %v1123
        %v1136 = vor.u32 %v1134, %v1135
        %v1137 = vshll.u32 920167782, %v1122
        %v1138 = vshrl.u32 1326507024, %v1123
        %v1139 = vor.u32 %v1137, %v1138
        %vm1140 = vcmp.lt.s32.totalorder %v1121, 1
        %vm1141 = vcmp.lt.s32.totalorder %v1121, 2
        %vm1142 = vcmp.lt.s32.totalorder %v1121, 3
        %vm1143 = vcmp.lt.s32.totalorder %v1121, 4
        %v1144 = vsel %vm1140, %v1124, %v1127
        %v1145 = vsel %vm1143, %v1133, 2102212464
        %v1146 = vsel %vm1142, %v1130, %v1145
        %v1147 = vsel %vm1141, %v1144, %v1146
        %v1148 = vsel %vm1140, %v1127, %v1130
        %v1149 = vsel %vm1143, %v1136, 920167782
        %v1150 = vsel %vm1142, %v1133, %v1149
        %v1151 = vsel %vm1141, %v1148, %v1150
        %v1152 = vsel %vm1140, %v1130, %v1133
        %v1153 = vsel %vm1143, %v1139, 1326507024
        %v1154 = vsel %vm1142, %v1136, %v1153
        %v1155 = vsel %vm1141, %v1152, %v1154
        %v1156 = vshll.u32 %v1116, 8
        %v1157 = vand.u32 %v1156, 65535
        %v1158 = vshrl.u32 %v1156, 16
        %v1159 = vand.u32 %v1155, 65535
        %v1160 = vshrl.u32 %v1155, 16
        %v1161 = vmul.u32 %v1157, %v1159
        %v1162 = vmul.u32 %v1157, %v1160
        %v1163 = vmul.u32 %v1158, %v1159
        %v1164 = vmul.u32 %v1158, %v1160
        %v1165 = vshll.u32 %v1162, 16
        %v1166 = vshrl.u32 %v1162, 16
        %v1167 = vshll.u32 %v1163, 16
        %v1168 = vshrl.u32 %v1163, 16
        %vm1169 = vc.u32 %v1161, %v1165
        %v1170 = vsel %vm1169, 1, 0
        %v1171 = vadd.s32 %v1161, %v1165
        %v1172 = vadd.s32 %v1164, %v1170
        %vm1173 = vc.u32 %v1171, %v1167
        %v1174 = vsel %vm1173, 1, 0
        %v1175 = vadd.s32 %v1171, %v1167
        %v1176 = vadd.s32 %v1172, %v1174
        %v1177 = vadd.s32 %v1176, %v1166
        %v1178 = vadd.s32 %v1177, %v1168
        %v1179 = vand.u32 %v1156, 65535
        %v1180 = vshrl.u32 %v1156, 16
        %v1181 = vand.u32 %v1151, 65535
        %v1182 = vshrl.u32 %v1151, 16
        %v1183 = vmul.u32 %v1179, %v1181
        %v1184 = vmul.u32 %v1179, %v1182
        %v1185 = vmul.u32 %v1180, %v1181
        %v1186 = vmul.u32 %v1180, %v1182
        %v1187 = vshll.u32 %v1184, 16
        %v1188 = vshrl.u32 %v1184, 16
        %v1189 = vshll.u32 %v1185, 16
        %v1190 = vshrl.u32 %v1185, 16
        %vm1191 = vc.u32 %v1183, %v1187
        %v1192 = vsel %vm1191, 1, 0
        %v1193 = vadd.s32 %v1183, %v1187
        %v1194 = vadd.s32 %v1186, %v1192
        %vm1195 = vc.u32 %v1193, %v1189
        %v1196 = vsel %vm1195, 1, 0
        %v1197 = vadd.s32 %v1193, %v1189
        %v1198 = vadd.s32 %v1194, %v1196
        %v1199 = vadd.s32 %v1198, %v1188
        %v1200 = vadd.s32 %v1199, %v1190
        %v1201 = vmul.u32 %v1156, %v1147
        %v1202 = vadd.s32 %v1178, %v1197
        %vm1203 = vc.u32 %v1178, %v1197
        %v1204 = vadd.s32 %v1200, 1
        %v1205 = vsel %vm1203, %v1204, %v1200
        %v1206 = vadd.s32 %v1201, %v1205
        %v1207 = vadd.s32 %v1206, 536870912
        %v1208 = vshrl.u32 %v1207, 30
        %v1209 = vshll.u32 %v1208, 30
        %v1210 = vsub.s32 %v1206, %v1209
        %vm1211 = vcmp.lt.s32.totalorder %v1210, 0
        %v1212 = vsub.s32 0, %v1210
        %v1213 = vsel %vm1211, %v1212, %v1210
        %v1214 = vclz %v1213
        %v1215 = vsub.s32 %v1214, 2
        %vm1216 = vcmp.gt.s32.totalorder 0, %v1215
        %v1217 = vsel %vm1216, 0, %v1215
        %v1218 = vsub.s32 32, %v1217
        %v1219 = vshll.u32 %v1210, %v1217
        %v1220 = vshrl.u32 %v1202, %v1218
        %v1221 = vor.u32 %v1219, %v1220
        %v1222 = vsub.s32 4294967266, %v1217
        %v1223 = vadd.s32 %v1222, 127
        %v1224 = vshll.u32 %v1223, 23
        %v1225 = vor.u32 4788187, %v1224
        %v1226 = vand.u32 2147483647, %v1225
        %v1228 = vcvt.s32.f32 %v1221
        %v1229 = vmul.f32 %v1228, %v1226
        %v1230 = vxor.u32 %v1229, 2147483648
        %v1231 = vsel %vm1110, %v1230, %v1229
        %v1232 = vsub.s32 4, %v1208
        %v1233 = vsel %vm1110, %v1232, %v1208
        %v1234 = vsel %vm1109, %v468, %v1231
        %v1235 = vsel %vm1109, 0, %v1233
        %v1236 = vmul.f32 %v1234, %v1234
        %v1237 = vmul.f32 %v1236, -0.001358992
        %v1238 = vadd.f32 %v1237, 0.041655596
        %v1239 = vmul.f32 %v1236, %v1238
        %v1240 = vadd.f32 %v1239, -0.4999988
        %v1241 = vmul.f32 %v1236, %v1240
        %v1242 = vadd.f32 1.0, %v1241
        %v1243 = vmul.f32 %v1234, %v1234
        %v1244 = vmul.f32 %v1243, -0.00019511016
        %v1245 = vadd.f32 %v1244, 0.008332121
        %v1246 = vmul.f32 %v1243, %v1245
        %v1247 = vadd.f32 %v1246, -0.16666654
        %v1248 = vmul.f32 %v1243, %v1247
        %v1249 = vadd.f32 %v1248, 1.0
        %v1250 = vmul.f32 %v1249, %v1234
        %vm1251 = vweird.f32 %v468
        %v1252 = vadd.s32 %v1235, 3
        %v1253 = vand.u32 %v1252, 3
        %vm1254 = vcmp.lt.s32.totalorder %v1253, 2
        %vm1255 = vcmp.eq.s32.totalorder %v1253, 0
        %v1256 = vxor.u32 %v1250, 2147483648
        %v1257 = vsel %vm1255, %v1242, %v1256
        %vm1258 = vcmp.eq.s32.totalorder %v1253, 2
        %v1259 = vxor.u32 %v1242, 2147483648
        %v1260 = vsel %vm1258, %v1259, %v1250
        %v1261 = vsel %vm1254, %v1257, %v1260
        %v1262 = vsel %vm1251, nan, %v1261
        %v1263 = vand.u32 2147483647, %v469
        %vm1264 = vcmp.le.f32.partialorder %v1263, 0.7853982
        %vm1265 = vcmp.lt.s32.totalorder %v469, 0
        %v1266 = vand.u32 %v469, 2139095040
        %v1267 = vshrl.u32 %v1266, 23
        %v1268 = vsub.s32 %v1267, 127
        %v1269 = vand.u32 2147483647, %v469
        %v1270 = vand.u32 %v1269, 8388607
        %v1271 = vor.u32 %v1270, 8388608
        %v1272 = vsub.s32 0, %v1271
        %v1273 = vadd.s32 %v1268, 1
        %vm1274 = vcmp.gt.s32.totalorder %v1273, 0
        %v1275 = vsel %vm1274, %v1273, 0
        %v1276 = vshrl.u32 %v1275, 5
        %v1277 = vand.u32 %v1275, 31
        %v1278 = vsub.s32 32, %v1277
        %v1279 = vshrl.u32 683565275, %v1278
        %v1280 = vshll.u32 683565275, %v1277
        %v1281 = vshrl.u32 2475754826, %v1278
        %v1282 = vor.u32 %v1280, %v1281
        %v1283 = vshll.u32 2475754826, %v1277
        %v1284 = vshrl.u32 2131351028, %v1278
        %v1285 = vor.u32 %v1283, %v1284
        %v1286 = vshll.u32 2131351028, %v1277
        %v1287 = vshrl.u32 2102212464, %v1278
        %v1288 = vor.u32 %v1286, %v1287
        %v1289 = vshll.u32 2102212464, %v1277
        %v1290 = vshrl.u32 920167782, %v1278
        %v1291 = vor.u32 %v1289, %v1290
        %v1292 = vshll.u32 920167782, %v1277
        %v1293 = vshrl.u32 1326507024, %v1278
        %v1294 = vor.u32 %v1292, %v1293
        %vm1295 = vcmp.lt.s32.totalorder %v1276, 1
        %vm1296 = vcmp.lt.s32.totalorder %v1276, 2
        %vm1297 = vcmp.lt.s32.totalorder %v1276, 3
        %vm1298 = vcmp.lt.s32.totalorder %v1276, 4
        %v1299 = vsel %vm1295, %v1279, %v1282
        %v1300 = vsel %vm1298, %v1288, 2102212464
        %v1301 = vsel %vm1297, %v1285, %v1300
        %v1302 = vsel %vm1296, %v1299, %v1301
        %v1303 = vsel %vm1295, %v1282, %v1285
        %v1304 = vsel %vm1298, %v1291, 920167782
        %v1305 = vsel %vm1297, %v1288, %v1304
        %v1306 = vsel %vm1296, %v1303, %v1305
        %v1307 = vsel %vm1295, %v1285, %v1288
        %v1308 = vsel %vm1298, %v1294, 1326507024
        %v1309 = vsel %vm1297, %v1291, %v1308
        %v1310 = vsel %vm1296, %v1307, %v1309
        %v1311 = vshll.u32 %v1271, 8
        %v1312 = vand.u32 %v1311, 65535
        %v1313 = vshrl.u32 %v1311, 16
        %v1314 = vand.u32 %v1310, 65535
        %v1315 = vshrl.u32 %v1310, 16
        %v1316 = vmul.u32 %v1312, %v1314
        %v1317 = vmul.u32 %v1312, %v1315
        %v1318 = vmul.u32 %v1313, %v1314
        %v1319 = vmul.u32 %v1313, %v1315
        %v1320 = vshll.u32 %v1317, 16
        %v1321 = vshrl.u32 %v1317, 16
        %v1322 = vshll.u32 %v1318, 16
        %v1323 = vshrl.u32 %v1318, 16
        %vm1324 = vc.u32 %v1316, %v1320
        %v1325 = vsel %vm1324, 1, 0
        %v1326 = vadd.s32 %v1316, %v1320
        %v1327 = vadd.s32 %v1319, %v1325
        %vm1328 = vc.u32 %v1326, %v1322
        %v1329 = vsel %vm1328, 1, 0
        %v1330 = vadd.s32 %v1326, %v1322
        %v1331 = vadd.s32 %v1327, %v1329
        %v1332 = vadd.s32 %v1331, %v1321
        %v1333 = vadd.s32 %v1332, %v1323
        %v1334 = vand.u32 %v1311, 65535
        %v1335 = vshrl.u32 %v1311, 16
        %v1336 = vand.u32 %v1306, 65535
        %v1337 = vshrl.u32 %v1306, 16
        %v1338 = vmul.u32 %v1334, %v1336
        %v1339 = vmul.u32 %v1334, %v1337
        %v1340 = vmul.u32 %v1335, %v1336
        %v1341 = vmul.u32 %v1335, %v1337
        %v1342 = vshll.u32 %v1339, 16
        %v1343 = vshrl.u32 %v1339, 16
        %v1344 = vshll.u32 %v1340, 16
        %v1345 = vshrl.u32 %v1340, 16
        %vm1346 = vc.u32 %v1338, %v1342
        %v1347 = vsel %vm1346, 1, 0
        %v1348 = vadd.s32 %v1338, %v1342
        %v1349 = vadd.s32 %v1341, %v1347
        %vm1350 = vc.u32 %v1348, %v1344
        %v1351 = vsel %vm1350, 1, 0
        %v1352 = vadd.s32 %v1348, %v1344
        %v1353 = vadd.s32 %v1349, %v1351
        %v1354 = vadd.s32 %v1353, %v1343
        %v1355 = vadd.s32 %v1354, %v1345
        %v1356 = vmul.u32 %v1311, %v1302
        %v1357 = vadd.s32 %v1333, %v1352
        %vm1358 = vc.u32 %v1333, %v1352
        %v1359 = vadd.s32 %v1355, 1
        %v1360 = vsel %vm1358, %v1359, %v1355
        %v1361 = vadd.s32 %v1356, %v1360
        %v1362 = vadd.s32 %v1361, 536870912
        %v1363 = vshrl.u32 %v1362, 30
        %v1364 = vshll.u32 %v1363, 30
        %v1365 = vsub.s32 %v1361, %v1364
        %vm1366 = vcmp.lt.s32.totalorder %v1365, 0
        %v1367 = vsub.s32 0, %v1365
        %v1368 = vsel %vm1366, %v1367, %v1365
        %v1369 = vclz %v1368
        %v1370 = vsub.s32 %v1369, 2
        %vm1371 = vcmp.gt.s32.totalorder 0, %v1370
        %v1372 = vsel %vm1371, 0, %v1370
        %v1373 = vsub.s32 32, %v1372
        %v1374 = vshll.u32 %v1365, %v1372
        %v1375 = vshrl.u32 %v1357, %v1373
        %v1376 = vor.u32 %v1374, %v1375
        %v1377 = vsub.s32 4294967266, %v1372
        %v1378 = vadd.s32 %v1377, 127
        %v1379 = vshll.u32 %v1378, 23
        %v1380 = vor.u32 4788187, %v1379
        %v1381 = vand.u32 2147483647, %v1380
        %v1383 = vcvt.s32.f32 %v1376
        %v1384 = vmul.f32 %v1383, %v1381
        %v1385 = vxor.u32 %v1384, 2147483648
        %v1386 = vsel %vm1265, %v1385, %v1384
        %v1387 = vsub.s32 4, %v1363
        %v1388 = vsel %vm1265, %v1387, %v1363
        %v1389 = vsel %vm1264, %v469, %v1386
        %v1390 = vsel %vm1264, 0, %v1388
        %v1391 = vmul.f32 %v1389, %v1389
        %v1392 = vmul.f32 %v1391, -0.001358992
        %v1393 = vadd.f32 %v1392, 0.041655596
        %v1394 = vmul.f32 %v1391, %v1393
        %v1395 = vadd.f32 %v1394, -0.4999988
        %v1396 = vmul.f32 %v1391, %v1395
        %v1397 = vadd.f32 1.0, %v1396
        %v1398 = vmul.f32 %v1389, %v1389
        %v1399 = vmul.f32 %v1398, -0.00019511016
        %v1400 = vadd.f32 %v1399, 0.008332121
        %v1401 = vmul.f32 %v1398, %v1400
        %v1402 = vadd.f32 %v1401, -0.16666654
        %v1403 = vmul.f32 %v1398, %v1402
        %v1404 = vadd.f32 %v1403, 1.0
        %v1405 = vmul.f32 %v1404, %v1389
        %vm1406 = vweird.f32 %v469
        %v1407 = vadd.s32 %v1390, 3
        %v1408 = vand.u32 %v1407, 3
        %vm1409 = vcmp.lt.s32.totalorder %v1408, 2
        %vm1410 = vcmp.eq.s32.totalorder %v1408, 0
        %v1411 = vxor.u32 %v1405, 2147483648
        %v1412 = vsel %vm1410, %v1397, %v1411
        %vm1413 = vcmp.eq.s32.totalorder %v1408, 2
        %v1414 = vxor.u32 %v1397, 2147483648
        %v1415 = vsel %vm1413, %v1414, %v1405
        %v1416 = vsel %vm1409, %v1412, %v1415
        %v1417 = vsel %vm1406, nan, %v1416
        %v1418 = vsub.f32 %v678, %v680
        %v1419 = vand.u32 2147483647, %v1418
        %v1420 = vsub.f32 0.0, %v1419
        %v1421 = vmul.f32 %v1420, 1.442695
        %v1422 = vpow.pop %v1421
        %vm1423 = vcmp.ge.f32.partialorder %v1418, 0.0
        %v1424 = vsel %vm1423, 1.0, %v1422
        %v1425 = vadd.f32 %v1422, 1.0
        %v1426 = vrcp.pop %v1425
        %v1427 = vmul.f32 %v1425, %v1426
        %v1428 = vsub.f32 1.0, %v1427
        %v1429 = vmul.f32 %v1426, %v1428
        %v1430 = vadd.f32 %v1426, %v1429
        %vm1431 = vweird.f32 %v1425
        %vm1432 = vweird.f32 %v1426
        %vm1433 = vmor %vm1431, %vm1432
        %v1434 = vsel %vm1433, %v1426, %v1430
        %v1435 = vand.u32 2147483647, %v1425
        %vm1436 = vcmp.eq.f32.partialorder %v1435, 8.507059e+37
        %v1437 = vand.u32 %v1425, 2147483648
        %v1438 = vor.u32 1.1754944e-38, %v1437
        %v1439 = vsel %vm1436, %v1438, %v1434
        %v1440 = vmul.f32 %v1424, %v1439
        %v1441 = vsub.f32 %v953, %v1107
        %v1442 = vmul.f32 %v1440, %v1441
        %v1443 = vadd.f32 %v1107, %v1442
        %v1444 = vsub.f32 %v1262, %v1417
        %v1445 = vmul.f32 %v1440, %v1444
        %v1446 = vadd.f32 %v1417, %v1445
        %v1447 = vand.u32 2147483647, %v1443
        %vm1448 = vcmp.lt.f32.partialorder %v1447, 0.001
        %v1449 = vsel %vm1448, 0.001, %v1443
        %v1450 = vrcp.pop %v1449
        %v1451 = vmul.f32 %v1449, %v1450
        %v1452 = vsub.f32 1.0, %v1451
        %v1453 = vmul.f32 %v1450, %v1452
        %v1454 = vadd.f32 %v1450, %v1453
        %vm1455 = vweird.f32 %v1449
        %vm1456 = vweird.f32 %v1450
        %vm1457 = vmor %vm1455, %vm1456
        %v1458 = vsel %vm1457, %v1450, %v1454
        %v1459 = vand.u32 2147483647, %v1449
        %vm1460 = vcmp.eq.f32.partialorder %v1459, 8.507059e+37
        %v1461 = vand.u32 %v1449, 2147483648
        %v1462 = vor.u32 1.1754944e-38, %v1461
        %v1463 = vsel %vm1460, %v1462, %v1458
        %v1464 = vmul.f32 %v1446, %v1463
        %v1465 = vand.u32 2147483647, %v1464
        %vm1466 = vcmp.gt.f32.partialorder %v1465, 2.4142137
        %vm1467 = vcmp.gt.f32.partialorder %v1465, 0.41421357
        %vm1468 = vmxor %vm1466, 1
        %vm1469 = vmand %vm1467, %vm1468
        %v1470 = vadd.f32 %v1465, 1e-30
        %v1471 = vrcp.pop %v1470
        %v1472 = vmul.f32 %v1470, %v1471
        %v1473 = vsub.f32 1.0, %v1472
        %v1474 = vmul.f32 %v1471, %v1473
        %v1475 = vadd.f32 %v1471, %v1474
        %vm1476 = vweird.f32 %v1470
        %vm1477 = vweird.f32 %v1471
        %vm1478 = vmor %vm1476, %vm1477
        %v1479 = vsel %vm1478, %v1471, %v1475
        %v1480 = vand.u32 2147483647, %v1470
        %vm1481 = vcmp.eq.f32.partialorder %v1480, 8.507059e+37
        %v1482 = vand.u32 %v1470, 2147483648
        %v1483 = vor.u32 1.1754944e-38, %v1482
        %v1484 = vsel %vm1481, %v1483, %v1479
        %v1485 = vmul.f32 -1.0, %v1484
        %v1486 = vsub.f32 %v1465, 1.0
        %v1487 = vadd.f32 %v1465, 1.0
        %v1488 = vrcp.pop %v1487
        %v1489 = vmul.f32 %v1487, %v1488
        %v1490 = vsub.f32 1.0, %v1489
        %v1491 = vmul.f32 %v1488, %v1490
        %v1492 = vadd.f32 %v1488, %v1491
        %vm1493 = vweird.f32 %v1487
        %vm1494 = vweird.f32 %v1488
        %vm1495 = vmor %vm1493, %vm1494
        %v1496 = vsel %vm1495, %v1488, %v1492
        %v1497 = vand.u32 2147483647, %v1487
        %vm1498 = vcmp.eq.f32.partialorder %v1497, 8.507059e+37
        %v1499 = vand.u32 %v1487, 2147483648
        %v1500 = vor.u32 1.1754944e-38, %v1499
        %v1501 = vsel %vm1498, %v1500, %v1496
        %v1502 = vmul.f32 %v1486, %v1501
        %v1503 = vsel %vm1469, %v1502, %v1465
        %v1504 = vsel %vm1466, %v1485, %v1503
        %v1505 = vsel %vm1469, 0.7853982, 0.0
        %v1506 = vsel %vm1466, 1.5707964, %v1505
        %v1507 = vmul.f32 %v1504, %v1504
        %v1508 = vmul.f32 %v1507, 0.080537446
        %v1509 = vsub.f32 %v1508, 0.13877685
        %v1510 = vmul.f32 %v1509, %v1507
        %v1511 = vadd.f32 %v1510, 0.19977711
        %v1512 = vmul.f32 %v1511, %v1507
        %v1513 = vsub.f32 %v1512, 0.3333295
        %v1514 = vmul.f32 %v1513, %v1507
        %v1515 = vmul.f32 %v1514, %v1504
        %v1516 = vadd.f32 %v1515, %v1504
        %v1517 = vadd.f32 %v1506, %v1516
        %vm1518 = vcmp.lt.f32.partialorder %v1464, 0.0
        %v1519 = vsub.f32 0.0, %v1517
        %v1520 = vsel %vm1518, %v1519, %v1517
        %vm1521 = vcmp.lt.f32.partialorder %v1449, 0.0
        %vm1522 = vcmp.lt.f32.partialorder %v1446, 0.0
        %vm1523 = vmxor %vm1522, 1
        %vm1524 = vmand %vm1521, %vm1523
        %v1525 = vadd.f32 %v1520, 3.1415927
        %v1526 = vsel %vm1524, %v1525, %v1520
        %vm1527 = vmand %vm1521, %vm1522
        %v1528 = vsub.f32 %v1526, 3.1415927
        %v1529 = vsel %vm1527, %v1528, %v1526
        %1530 = vst.msk [vmem:[%s459] sm:$0xff] %vm502, %v1529
        %s1531 = sand.u32 %s235, 1
        %s1532 = scalar_lea.sflag [#allocation5], %s1531
        %s1533 = sand.u32 %s235, 1
        %s1534 = smul.addr %s1533, 8
        %s1535 = scalar_lea.vmem [#allocation4], %s1534
        %s1536 = sand.u32 %s261, 1
        %s1537 = scalar_lea.sflag [#allocation7], %s1536
        %s1538 = sand.u32 %s261, 1
        %s1539 = smul.addr %s1538, 8
        %s1540 = scalar_lea.vmem [#allocation6], %s1539
        // Predicated region
        $region133: #{tpu_custom_call.1} parent=123 // pred_check
          %p1541 = pneg %p245
        $region134: #{tpu_custom_call.1} parent=123 // pred_check_branch
          %1543 = sbr.rel (%p1541) target = $region136
        $region135: #{tpu_custom_call.1} parent=123 // pred_region
          %1545 = vsyncadd %s1532, 0
          %s1546 = smul.addr %s28, 8
          %s1547 = scalar_lea.hbm %s9, %s1546
          %s1549 = sshll.u32 %s1535, 4
          %s1550 = int_to_ptr.vmem [resolvable:$true] %s1549
          %s1551 = sshll.u32 %s1547, 4
          %s1552 = int_to_ptr.hbm [resolvable:$true] %s1551
          %1554 = dma.vmem_to_hbm [thread:$0]  %s1550, 128, %s1552, %s1532
        $region136: #{tpu_custom_call.1} parent=123 // pred_fallthru
          _
        // Predicated region
        $region137: #{tpu_custom_call.1} parent=123 // pred_check
          %p1555 = pneg %p271
        $region138: #{tpu_custom_call.1} parent=123 // pred_check_branch
          %1557 = sbr.rel (%p1555) target = $region140
        $region139: #{tpu_custom_call.1} parent=123 // pred_region
          %1559 = vsyncadd %s1537, 0
          %s1560 = smul.addr %s28, 8
          %s1561 = scalar_lea.hbm %s10, %s1560
          %s1563 = sshll.u32 %s1540, 4
          %s1564 = int_to_ptr.vmem [resolvable:$true] %s1563
          %s1565 = sshll.u32 %s1561, 4
          %s1566 = int_to_ptr.hbm [resolvable:$true] %s1565
          %1568 = dma.vmem_to_hbm [thread:$0]  %s1564, 128, %s1566, %s1537
        $region140: #{tpu_custom_call.1} parent=123 // pred_fallthru
          _
      $region124: #{tpu_custom_call.1} parent=5 // pred_fallthru
        _
      %p1569 = scmp.le.s32.totalorder 2, %s23
      // Predicated region
      $region141: #{tpu_custom_call.1} parent=5 // pred_check
        %p1570 = pneg %p1569
      $region142: #{tpu_custom_call.1} parent=5 // pred_check_branch
        %1572 = sbr.rel (%p1570) target = $region144
      $region143: #{tpu_custom_call.1} parent=5 // pred_region
        %s1573 = ssub.s32 %s23, 2
        // Predicated region
        $region145: #{tpu_custom_call.1} parent=143 // pred_check
          %p1574 = pneg %p251
        $region146: #{tpu_custom_call.1} parent=143 // pred_check_branch
          %1576 = sbr.rel (%p1574) target = $region148
        $region147: #{tpu_custom_call.1} parent=143 // pred_region
          %s1577 = sand.u32 %s236, 1
          %s1578 = scalar_lea.sflag [#allocation5], %s1577
          %s1579 = sand.u32 %s236, 1
          %s1580 = smul.addr %s1579, 8
          %s1581 = scalar_lea.vmem [#allocation4], %s1580
          %1583 = dma.done %s1578, 128
        $region148: #{tpu_custom_call.1} parent=143 // pred_fallthru
          _
        // Predicated region
        $region149: #{tpu_custom_call.1} parent=143 // pred_check
          %p1584 = pneg %p277
        $region150: #{tpu_custom_call.1} parent=143 // pred_check_branch
          %1586 = sbr.rel (%p1584) target = $region152
        $region151: #{tpu_custom_call.1} parent=143 // pred_region
          %s1587 = sand.u32 %s262, 1
          %s1588 = scalar_lea.sflag [#allocation7], %s1587
          %s1589 = sand.u32 %s262, 1
          %s1590 = smul.addr %s1589, 8
          %s1591 = scalar_lea.vmem [#allocation6], %s1590
          %1593 = dma.done %s1588, 128
        $region152: #{tpu_custom_call.1} parent=143 // pred_fallthru
          _
      $region144: #{tpu_custom_call.1} parent=5 // pred_fallthru
        _
    $region6: #{tpu_custom_call.1} parent=1 // loop_footer
      %s27 = sadd.s32 1, %s23
    $region7: #{tpu_custom_call.1} parent=1 // loop_footer_branch
      %22 = sbr.rel target = $region3
    $region8: #{tpu_custom_call.1} parent=1 // loop_exit
      _
    %1594 = vsyncpa [#allocation5], 1
    %s1595 = scalar_lea.sflag [#allocation5], 1
    %1596 = vsyncpa %s1595, 1
    %1597 = vsyncpa [#allocation7], 1
    %s1598 = scalar_lea.sflag [#allocation7], 1
    %1599 = vsyncpa %s1598, 1

// kernel: tpu_custom_call.1
$region0: #{tpu_custom_call.1}
  #allocation0 [shape = 'u32[]', space=smem, size = 0x4, offset = 0x4, fixed_abs, tag = 'smem constant byte address 0x4 - core index']
  #allocation1 [shape = 'u32[72,128]{1,0:T(1,128)}', space=vmem, size = 0x9000, scoped, tag = 'internal scratch']
  %s0 = inlined_call_operand.vmem [shape: f32[2,16,32], index: 0, kind: input, shape index: {}]
  %s1 = inlined_call_operand.vmem [shape: f32[2,16,32], index: 1, kind: input, shape index: {}]
  %s2 = inlined_call_operand.vmem [shape: bf16[32,256], index: 2, kind: input, shape index: {}]
  %s3 = inlined_call_operand.vmem [shape: bf16[32,256], index: 3, kind: input, shape index: {}]
  %s4 = inlined_call_operand.vmem [shape: f32[1,256], index: 4, kind: input, shape index: {}]
  %s5 = inlined_call_operand.vmem [shape: bf16[128,32], index: 5, kind: input, shape index: {}]
  %s6 = inlined_call_operand.vmem [shape: f32[1,32], index: 6, kind: input, shape index: {}]
  %s7 = inlined_call_operand.vmem [shape: bf16[128,32], index: 7, kind: input, shape index: {}]
  %s8 = inlined_call_operand.vmem [shape: f32[1,32], index: 8, kind: input, shape index: {}]
  %s9 = inlined_call_operand.hbm [shape: f32[16,32], index: 9, kind: output, shape index: {0}]
  %s10 = inlined_call_operand.hbm [shape: f32[16,32], index: 10, kind: output, shape index: {1}]
  %11 = xla_tuple %s9, %s10
  %s12 = sld [smem:[#allocation0]]
  $region153: #{tpu_custom_call.1} parent=0
    _
  %s14 = ssub.s32 1, %s12
  %s15 = scalar_select 0, %s14, %s12
  $region1: #{tpu_custom_call.1} parent=0
    #allocation2 [shape = 'u8[16384]{0}', space=vmem, size = 0x4000, scoped, tag = 'input window, operand 0']
    #allocation3 [shape = 'u8[16384]{0}', space=vmem, size = 0x4000, scoped, tag = 'input window, operand 1']
    #allocation4 [shape = 'u8[8192]{0}', space=vmem, size = 0x2000, scoped, tag = 'output window, operand 0']
    #allocation5 [shape = 's32[2]{0}', space=sflag, size = 0x8, scoped, tag = 'scoped memory for tpu_custom_call.1']
    #allocation6 [shape = 'u8[8192]{0}', space=vmem, size = 0x2000, scoped, tag = 'output window, operand 1']
    #allocation7 [shape = 's32[2]{0}', space=sflag, size = 0x8, scoped, tag = 'scoped memory for tpu_custom_call.1']
    %16 = vsyncpa [#allocation5], 0
    %s17 = scalar_lea.sflag [#allocation5], 1
    %18 = vsyncpa %s17, 0
    %19 = vsyncpa [#allocation7], 0
    %s20 = scalar_lea.sflag [#allocation7], 1
    %21 = vsyncpa %s20, 0
    loop: start=0, step=1, limit=4
    $region2: #{tpu_custom_call.1} parent=1 // loop_pre_header
      _
    $region3: #{tpu_custom_call.1} parent=1 // loop_header
      %s23 = sphi 0, %s27
      %p24 = scmp.ge.s32.totalorder %s23, 4
      %s33 = sphi 0, %s35
      %s36 = sphi 0, %s33
      %s37 = sphi 0, %s36
      %s53 = sphi 0, %s37
      %s59 = sphi 0, %s61
      %s62 = sphi 0, %s59
      %s63 = sphi 0, %s62
      %s79 = sphi 0, %s63
      %s83 = sphi 0, %s83
      %s85 = sphi 0, %s83
      %s86 = sphi 0, %s85
      %s100 = sphi 0, %s86
      %s104 = sphi 0, %s104
      %s106 = sphi 0, %s104
      %s107 = sphi 0, %s106
      %s121 = sphi 0, %s107
      %s125 = sphi 0, %s125
      %s127 = sphi 0, %s125
      %s128 = sphi 0, %s127
      %s142 = sphi 0, %s128
      %s146 = sphi 0, %s146
      %s148 = sphi 0, %s146
      %s149 = sphi 0, %s148
      %s163 = sphi 0, %s149
      %s167 = sphi 0, %s167
      %s169 = sphi 0, %s167
      %s170 = sphi 0, %s169
      %s184 = sphi 0, %s170
      %s188 = sphi 0, %s188
      %s190 = sphi 0, %s188
      %s191 = sphi 0, %s190
      %s205 = sphi 0, %s191
      %s209 = sphi 0, %s209
      %s211 = sphi 0, %s209
      %s212 = sphi 0, %s211
      %s226 = sphi 0, %s212
      %s232 = sphi 0, %s234
      %s235 = sphi 0, %s232
      %s236 = sphi 0, %s235
      %s252 = sphi 0, %s236
      %s258 = sphi 0, %s260
      %s261 = sphi 0, %s258
      %s262 = sphi 0, %s261
      %s278 = sphi 0, %s262
    $region4: #{tpu_custom_call.1} parent=1 // loop_header_branch
      %26 = sbr.rel (%p24) target = $region8
    $region5: #{tpu_custom_call.1} parent=1 // loop_body
      %s28 = ssub.s32 %s23, 1
      %s29 = ssub.s32 %s23, 2
      %s30 = sadd.s32 %s23, 1
      %s31 = ssub.s32 %s23, %s30
      %p32 = scmp.eq.s32.totalorder %s31, 0
      %s34 = sadd.s32 %s33, 1
      %s35 = scalar_select %p32, %s33, %s34
      %p38 = pneg %p32
      %p39 = scmp.eq.s32.totalorder %s23, 1
      %p40 = por %p38, %p39
      %p41 = scmp.ne.s32.totalorder %s33, %s36
      %p42 = scmp.eq.s32.totalorder %s23, 0
      %p43 = por %p41, %p42
      %p44 = scmp.ne.s32.totalorder %s33, %s36
      %p45 = scmp.eq.s32.totalorder %s28, 1
      %p46 = por %p44, %p45
      %p47 = scmp.ne.s32.totalorder %s36, %s37
      %p48 = scmp.eq.s32.totalorder %s28, 0
      %p49 = por %p47, %p48
      %p50 = scmp.ne.s32.totalorder %s36, %s37
      %p51 = scmp.eq.s32.totalorder %s29, 1
      %p52 = por %p50, %p51
      %p54 = scmp.ne.s32.totalorder %s37, %s53
      %p55 = scmp.eq.s32.totalorder %s29, 0
      %p56 = por %p54, %p55
      %s57 = ssub.s32 %s23, %s30
      %p58 = scmp.eq.s32.totalorder %s57, 0
      %s60 = sadd.s32 %s59, 1
      %s61 = scalar_select %p58, %s59, %s60
      %p64 = pneg %p58
      %p65 = scmp.eq.s32.totalorder %s23, 1
      %p66 = por %p64, %p65
      %p67 = scmp.ne.s32.totalorder %s59, %s62
      %p68 = scmp.eq.s32.totalorder %s23, 0
      %p69 = por %p67, %p68
      %p70 = scmp.ne.s32.totalorder %s59, %s62
      %p71 = scmp.eq.s32.totalorder %s28, 1
      %p72 = por %p70, %p71
      %p73 = scmp.ne.s32.totalorder %s62, %s63
      %p74 = scmp.eq.s32.totalorder %s28, 0
      %p75 = por %p73, %p74
      %p76 = scmp.ne.s32.totalorder %s62, %s63
      %p77 = scmp.eq.s32.totalorder %s29, 1
      %p78 = por %p76, %p77
      %p80 = scmp.ne.s32.totalorder %s63, %s79
      %p81 = scmp.eq.s32.totalorder %s29, 0
      %p82 = por %p80, %p81
      %s84 = sadd.s32 %s83, 1
      %p87 = scmp.eq.s32.totalorder %s23, 1
      %p88 = scmp.ne.s32.totalorder %s83, %s85
      %p89 = scmp.eq.s32.totalorder %s23, 0
      %p90 = por %p88, %p89
      %p91 = scmp.ne.s32.totalorder %s83, %s85
      %p92 = scmp.eq.s32.totalorder %s28, 1
      %p93 = por %p91, %p92
      %p94 = scmp.ne.s32.totalorder %s85, %s86
      %p95 = scmp.eq.s32.totalorder %s28, 0
      %p96 = por %p94, %p95
      %p97 = scmp.ne.s32.totalorder %s85, %s86
      %p98 = scmp.eq.s32.totalorder %s29, 1
      %p99 = por %p97, %p98
      %p101 = scmp.ne.s32.totalorder %s86, %s100
      %p102 = scmp.eq.s32.totalorder %s29, 0
      %p103 = por %p101, %p102
      %s105 = sadd.s32 %s104, 1
      %p108 = scmp.eq.s32.totalorder %s23, 1
      %p109 = scmp.ne.s32.totalorder %s104, %s106
      %p110 = scmp.eq.s32.totalorder %s23, 0
      %p111 = por %p109, %p110
      %p112 = scmp.ne.s32.totalorder %s104, %s106
      %p113 = scmp.eq.s32.totalorder %s28, 1
      %p114 = por %p112, %p113
      %p115 = scmp.ne.s32.totalorder %s106, %s107
      %p116 = scmp.eq.s32.totalorder %s28, 0
      %p117 = por %p115, %p116
      %p118 = scmp.ne.s32.totalorder %s106, %s107
      %p119 = scmp.eq.s32.totalorder %s29, 1
      %p120 = por %p118, %p119
      %p122 = scmp.ne.s32.totalorder %s107, %s121
      %p123 = scmp.eq.s32.totalorder %s29, 0
      %p124 = por %p122, %p123
      %s126 = sadd.s32 %s125, 1
      %p129 = scmp.eq.s32.totalorder %s23, 1
      %p130 = scmp.ne.s32.totalorder %s125, %s127
      %p131 = scmp.eq.s32.totalorder %s23, 0
      %p132 = por %p130, %p131
      %p133 = scmp.ne.s32.totalorder %s125, %s127
      %p134 = scmp.eq.s32.totalorder %s28, 1
      %p135 = por %p133, %p134
      %p136 = scmp.ne.s32.totalorder %s127, %s128
      %p137 = scmp.eq.s32.totalorder %s28, 0
      %p138 = por %p136, %p137
      %p139 = scmp.ne.s32.totalorder %s127, %s128
      %p140 = scmp.eq.s32.totalorder %s29, 1
      %p141 = por %p139, %p140
      %p143 = scmp.ne.s32.totalorder %s128, %s142
      %p144 = scmp.eq.s32.totalorder %s29, 0
      %p145 = por %p143, %p144
      %s147 = sadd.s32 %s146, 1
      %p150 = scmp.eq.s32.totalorder %s23, 1
      %p151 = scmp.ne.s32.totalorder %s146, %s148
      %p152 = scmp.eq.s32.totalorder %s23, 0
      %p153 = por %p151, %p152
      %p154 = scmp.ne.s32.totalorder %s146, %s148
      %p155 = scmp.eq.s32.totalorder %s28, 1
      %p156 = por %p154, %p155
      %p157 = scmp.ne.s32.totalorder %s148, %s149
      %p158 = scmp.eq.s32.totalorder %s28, 0
      %p159 = por %p157, %p158
      %p160 = scmp.ne.s32.totalorder %s148, %s149
      %p161 = scmp.eq.s32.totalorder %s29, 1
      %p162 = por %p160, %p161
      %p164 = scmp.ne.s32.totalorder %s149, %s163
      %p165 = scmp.eq.s32.totalorder %s29, 0
      %p166 = por %p164, %p165
      %s168 = sadd.s32 %s167, 1
      %p171 = scmp.eq.s32.totalorder %s23, 1
      %p172 = scmp.ne.s32.totalorder %s167, %s169
      %p173 = scmp.eq.s32.totalorder %s23, 0
      %p174 = por %p172, %p173
      %p175 = scmp.ne.s32.totalorder %s167, %s169
      %p176 = scmp.eq.s32.totalorder %s28, 1
      %p177 = por %p175, %p176
      %p178 = scmp.ne.s32.totalorder %s169, %s170
      %p179 = scmp.eq.s32.totalorder %s28, 0
      %p180 = por %p178, %p179
      %p181 = scmp.ne.s32.totalorder %s169, %s170
      %p182 = scmp.eq.s32.totalorder %s29, 1
      %p183 = por %p181, %p182
      %p185 = scmp.ne.s32.totalorder %s170, %s184
      %p186 = scmp.eq.s32.totalorder %s29, 0
      %p187 = por %p185, %p186
      %s189 = sadd.s32 %s188, 1
      %p192 = scmp.eq.s32.totalorder %s23, 1
      %p193 = scmp.ne.s32.totalorder %s188, %s190
      %p194 = scmp.eq.s32.totalorder %s23, 0
      %p195 = por %p193, %p194
      %p196 = scmp.ne.s32.totalorder %s188, %s190
      %p197 = scmp.eq.s32.totalorder %s28, 1
      %p198 = por %p196, %p197
      %p199 = scmp.ne.s32.totalorder %s190, %s191
      %p200 = scmp.eq.s32.totalorder %s28, 0
      %p201 = por %p199, %p200
      %p202 = scmp.ne.s32.totalorder %s190, %s191
      %p203 = scmp.eq.s32.totalorder %s29, 1
      %p204 = por %p202, %p203
      %p206 = scmp.ne.s32.totalorder %s191, %s205
      %p207 = scmp.eq.s32.totalorder %s29, 0
      %p208 = por %p206, %p207
      %s210 = sadd.s32 %s209, 1
      %p213 = scmp.eq.s32.totalorder %s23, 1
      %p214 = scmp.ne.s32.totalorder %s209, %s211
      %p215 = scmp.eq.s32.totalorder %s23, 0
      %p216 = por %p214, %p215
      %p217 = scmp.ne.s32.totalorder %s209, %s211
      %p218 = scmp.eq.s32.totalorder %s28, 1
      %p219 = por %p217, %p218
      %p220 = scmp.ne.s32.totalorder %s211, %s212
      %p221 = scmp.eq.s32.totalorder %s28, 0
      %p222 = por %p220, %p221
      %p223 = scmp.ne.s32.totalorder %s211, %s212
      %p224 = scmp.eq.s32.totalorder %s29, 1
      %p225 = por %p223, %p224
      %p227 = scmp.ne.s32.totalorder %s212, %s226
      %p228 = scmp.eq.s32.totalorder %s29, 0
      %p229 = por %p227, %p228
      %s230 = ssub.s32 %s23, %s30
      %p231 = scmp.eq.s32.totalorder %s230, 0
      %s233 = sadd.s32 %s232, 1
      %s234 = scalar_select %p231, %s232, %s233
      %p237 = pneg %p231
      %p238 = scmp.eq.s32.totalorder %s23, 1
      %p239 = por %p237, %p238
      %p240 = scmp.ne.s32.totalorder %s232, %s235
      %p241 = scmp.eq.s32.totalorder %s23, 0
      %p242 = por %p240, %p241
      %p243 = scmp.ne.s32.totalorder %s232, %s235
      %p244 = scmp.eq.s32.totalorder %s28, 1
      %p245 = por %p243, %p244
      %p246 = scmp.ne.s32.totalorder %s235, %s236
      %p247 = scmp.eq.s32.totalorder %s28, 0
      %p248 = por %p246, %p247
      %p249 = scmp.ne.s32.totalorder %s235, %s236
      %p250 = scmp.eq.s32.totalorder %s29, 1
      %p251 = por %p249, %p250
      %p253 = scmp.ne.s32.totalorder %s236, %s252
      %p254 = scmp.eq.s32.totalorder %s29, 0
      %p255 = por %p253, %p254
      %s256 = ssub.s32 %s23, %s30
      %p257 = scmp.eq.s32.totalorder %s256, 0
      %s259 = sadd.s32 %s258, 1
      %s260 = scalar_select %p257, %s258, %s259
      %p263 = pneg %p257
      %p264 = scmp.eq.s32.totalorder %s23, 1
      %p265 = por %p263, %p264
      %p266 = scmp.ne.s32.totalorder %s258, %s261
      %p267 = scmp.eq.s32.totalorder %s23, 0
      %p268 = por %p266, %p267
      %p269 = scmp.ne.s32.totalorder %s258, %s261
      %p270 = scmp.eq.s32.totalorder %s28, 1
      %p271 = por %p269, %p270
      %p272 = scmp.ne.s32.totalorder %s261, %s262
      %p273 = scmp.eq.s32.totalorder %s28, 0
      %p274 = por %p272, %p273
      %p275 = scmp.ne.s32.totalorder %s261, %s262
      %p276 = scmp.eq.s32.totalorder %s29, 1
      %p277 = por %p275, %p276
      %p279 = scmp.ne.s32.totalorder %s262, %s278
      %p280 = scmp.eq.s32.totalorder %s29, 0
      %p281 = por %p279, %p280
      %p282 = scmp.le.s32.totalorder 1, %s23
      %p283 = scmp.lt.s32.totalorder %s23, 3
      %p284 = pnand %p282, %p283
      %p285 = pneg %p284
      // Predicated region
      $region9: #{tpu_custom_call.1} parent=5 // pred_check
        _
      $region10: #{tpu_custom_call.1} parent=5 // pred_check_branch
        %287 = sbr.rel (%p284) target = $region12
      $region11: #{tpu_custom_call.1} parent=5 // pred_region
        %s288 = ssub.s32 %s23, 1
        // Predicated region
        $region13: #{tpu_custom_call.1} parent=11 // pred_check
          %p289 = pneg %p96
        $region14: #{tpu_custom_call.1} parent=11 // pred_check_branch
          %291 = sbr.rel (%p289) target = $region16
        $region15: #{tpu_custom_call.1} parent=11 // pred_region
          _
        $region16: #{tpu_custom_call.1} parent=11 // pred_fallthru
          _
        // Predicated region
        $region17: #{tpu_custom_call.1} parent=11 // pred_check
          %p292 = pneg %p117
        $region18: #{tpu_custom_call.1} parent=11 // pred_check_branch
          %294 = sbr.rel (%p292) target = $region20
        $region19: #{tpu_custom_call.1} parent=11 // pred_region
          _
        $region20: #{tpu_custom_call.1} parent=11 // pred_fallthru
          _
        // Predicated region
        $region21: #{tpu_custom_call.1} parent=11 // pred_check
          %p295 = pneg %p138
        $region22: #{tpu_custom_call.1} parent=11 // pred_check_branch
          %297 = sbr.rel (%p295) target = $region24
        $region23: #{tpu_custom_call.1} parent=11 // pred_region
          _
        $region24: #{tpu_custom_call.1} parent=11 // pred_fallthru
          _
        // Predicated region
        $region25: #{tpu_custom_call.1} parent=11 // pred_check
          %p298 = pneg %p159
        $region26: #{tpu_custom_call.1} parent=11 // pred_check_branch
          %300 = sbr.rel (%p298) target = $region28
        $region27: #{tpu_custom_call.1} parent=11 // pred_region
          _
        $region28: #{tpu_custom_call.1} parent=11 // pred_fallthru
          _
        // Predicated region
        $region29: #{tpu_custom_call.1} parent=11 // pred_check
          %p301 = pneg %p180
        $region30: #{tpu_custom_call.1} parent=11 // pred_check_branch
          %303 = sbr.rel (%p301) target = $region32
        $region31: #{tpu_custom_call.1} parent=11 // pred_region
          _
        $region32: #{tpu_custom_call.1} parent=11 // pred_fallthru
          _
        // Predicated region
        $region33: #{tpu_custom_call.1} parent=11 // pred_check
          %p304 = pneg %p201
        $region34: #{tpu_custom_call.1} parent=11 // pred_check_branch
          %306 = sbr.rel (%p304) target = $region36
        $region35: #{tpu_custom_call.1} parent=11 // pred_region
          _
        $region36: #{tpu_custom_call.1} parent=11 // pred_fallthru
          _
        // Predicated region
        $region37: #{tpu_custom_call.1} parent=11 // pred_check
          %p307 = pneg %p222
        $region38: #{tpu_custom_call.1} parent=11 // pred_check_branch
          %309 = sbr.rel (%p307) target = $region40
        $region39: #{tpu_custom_call.1} parent=11 // pred_region
          _
        $region40: #{tpu_custom_call.1} parent=11 // pred_fallthru
          _
      $region12: #{tpu_custom_call.1} parent=5 // pred_fallthru
        _
      %p310 = scmp.lt.s32.totalorder %s23, 2
      // Predicated region
      $region41: #{tpu_custom_call.1} parent=5 // pred_check
        %p311 = pneg %p310
      $region42: #{tpu_custom_call.1} parent=5 // pred_check_branch
        %313 = sbr.rel (%p311) target = $region44
      $region43: #{tpu_custom_call.1} parent=5 // pred_region
        // Predicated region
        $region45: #{tpu_custom_call.1} parent=43 // pred_check
          %p314 = pneg %p43
        $region46: #{tpu_custom_call.1} parent=43 // pred_check_branch
          %316 = sbr.rel (%p314) target = $region48
        $region47: #{tpu_custom_call.1} parent=43 // pred_region
          %s317 = sand.u32 %s33, 1
          %s318 = sand.u32 %s33, 1
          %s319 = smul.addr %s318, 16
          %s320 = scalar_lea.vmem [#allocation2], %s319
          %s321 = smul.addr %s23, 8
          %s322 = scalar_lea.vmem %s0, %s321
          // Predicated region
          $region49: #{tpu_custom_call.1} parent=47 // pred_check
            _
          $region50: #{tpu_custom_call.1} parent=47 // pred_check_branch
            %324 = sbr.rel (0) target = $region52
          $region51: #{tpu_custom_call.1} parent=47 // pred_region
            // Predicated region
            $region53: #{tpu_custom_call.1} parent=51 // pred_check
              _
            $region54: #{tpu_custom_call.1} parent=51 // pred_check_branch
              %326 = sbr.rel (0) target = $region56
            $region55: #{tpu_custom_call.1} parent=51 // pred_region
              // Predicated region
              $region68: #{tpu_custom_call.1} parent=55 // pred_check
                _
              $region69: #{tpu_custom_call.1} parent=55 // pred_check_branch
                %344 = sbr.rel (0) target = $region71
              $region70: #{tpu_custom_call.1} parent=55 // pred_region
                loop: start=0, step=1, limit=1
                $region72: #{tpu_custom_call.1} parent=70 // loop_pre_header
                  _
                $region73: #{tpu_custom_call.1} parent=70 // loop_header
                  %s346 = sphi 0, %s350
                  %p347 = scmp.ge.s32.totalorder %s346, 1
                  %s351 = sphi %s322, %s322
                  %s352 = sphi %s320, %s320
                $region74: #{tpu_custom_call.1} parent=70 // loop_header_branch
                  %349 = sbr.rel (%p347) target = $region78
                $region75: #{tpu_custom_call.1} parent=70 // loop_body
                  %v353 = vld [vmem:[%s351] sm:$0xff]
                  %354 = vst [vmem:[%s352] sm:$0xff] %v353
                  %v355 = vld [vmem:[%s351 + $0x10] sm:$0xff]
                  %356 = vst [vmem:[%s352 + $0x8] sm:$0xff] %v355
                $region76: #{tpu_custom_call.1} parent=70 // loop_footer
                  %s350 = sadd.s32 1, %s346
                $region77: #{tpu_custom_call.1} parent=70 // loop_footer_branch
                  %345 = sbr.rel target = $region73
                $region78: #{tpu_custom_call.1} parent=70 // loop_exit
                  _
              $region71: #{tpu_custom_call.1} parent=55 // pred_fallthru
                _
              // Predicated region
              $region79: #{tpu_custom_call.1} parent=55 // pred_check
                _
              $region80: #{tpu_custom_call.1} parent=55 // pred_check_branch
                %358 = sbr.rel target = $region82
              $region81: #{tpu_custom_call.1} parent=55 // pred_region
                _
              $region82: #{tpu_custom_call.1} parent=55 // pred_fallthru
                _
            $region56: #{tpu_custom_call.1} parent=51 // pred_fallthru
              _
            // Predicated region
            $region57: #{tpu_custom_call.1} parent=51 // pred_check
              _
            $region58: #{tpu_custom_call.1} parent=51 // pred_check_branch
              %328 = sbr.rel target = $region60
            $region59: #{tpu_custom_call.1} parent=51 // pred_region
              %s330 = ssub.s32 256, 1
              loop: start=0, step=1, limit=1
              $region61: #{tpu_custom_call.1} parent=59 // loop_pre_header
                _
              $region62: #{tpu_custom_call.1} parent=59 // loop_header
                %s332 = sphi 0, %s336
                %p333 = scmp.ge.s32.totalorder %s332, 1
                %s337 = sphi %s322, %s322
                %s338 = sphi %s320, %s320
              $region63: #{tpu_custom_call.1} parent=59 // loop_header_branch
                %335 = sbr.rel (%p333) target = $region67
              $region64: #{tpu_custom_call.1} parent=59 // loop_body
                %v339 = vld [vmem:[%s337] sm:%s330]
                %340 = vst [vmem:[%s338] sm:%s330] %v339
                %v341 = vld [vmem:[%s337 + $0x10] sm:%s330]
                %342 = vst [vmem:[%s338 + $0x8] sm:%s330] %v341
              $region65: #{tpu_custom_call.1} parent=59 // loop_footer
                %s336 = sadd.s32 1, %s332
              $region66: #{tpu_custom_call.1} parent=59 // loop_footer_branch
                %331 = sbr.rel target = $region62
              $region67: #{tpu_custom_call.1} parent=59 // loop_exit
                _
            $region60: #{tpu_custom_call.1} parent=51 // pred_fallthru
              _
          $region52: #{tpu_custom_call.1} parent=47 // pred_fallthru
            _
          %359 = vnop
        $region48: #{tpu_custom_call.1} parent=43 // pred_fallthru
          _
        // Predicated region
        $region83: #{tpu_custom_call.1} parent=43 // pred_check
          %p360 = pneg %p69
        $region84: #{tpu_custom_call.1} parent=43 // pred_check_branch
          %362 = sbr.rel (%p360) target = $region86
        $region85: #{tpu_custom_call.1} parent=43 // pred_region
          %s363 = sand.u32 %s59, 1
          %s364 = sand.u32 %s59, 1
          %s365 = smul.addr %s364, 16
          %s366 = scalar_lea.vmem [#allocation3], %s365
          %s367 = smul.addr %s23, 8
          %s368 = scalar_lea.vmem %s1, %s367
          // Predicated region
          $region87: #{tpu_custom_call.1} parent=85 // pred_check
            _
          $region88: #{tpu_custom_call.1} parent=85 // pred_check_branch
            %370 = sbr.rel (0) target = $region90
          $region89: #{tpu_custom_call.1} parent=85 // pred_region
            // Predicated region
            $region91: #{tpu_custom_call.1} parent=89 // pred_check
              _
            $region92: #{tpu_custom_call.1} parent=89 // pred_check_branch
              %372 = sbr.rel (0) target = $region94
            $region93: #{tpu_custom_call.1} parent=89 // pred_region
              // Predicated region
              $region106: #{tpu_custom_call.1} parent=93 // pred_check
                _
              $region107: #{tpu_custom_call.1} parent=93 // pred_check_branch
                %390 = sbr.rel (0) target = $region109
              $region108: #{tpu_custom_call.1} parent=93 // pred_region
                loop: start=0, step=1, limit=1
                $region110: #{tpu_custom_call.1} parent=108 // loop_pre_header
                  _
                $region111: #{tpu_custom_call.1} parent=108 // loop_header
                  %s392 = sphi 0, %s396
                  %p393 = scmp.ge.s32.totalorder %s392, 1
                  %s397 = sphi %s368, %s368
                  %s398 = sphi %s366, %s366
                $region112: #{tpu_custom_call.1} parent=108 // loop_header_branch
                  %395 = sbr.rel (%p393) target = $region116
                $region113: #{tpu_custom_call.1} parent=108 // loop_body
                  %v399 = vld [vmem:[%s397] sm:$0xff]
                  %400 = vst [vmem:[%s398] sm:$0xff] %v399
                  %v401 = vld [vmem:[%s397 + $0x10] sm:$0xff]
                  %402 = vst [vmem:[%s398 + $0x8] sm:$0xff] %v401
                $region114: #{tpu_custom_call.1} parent=108 // loop_footer
                  %s396 = sadd.s32 1, %s392
                $region115: #{tpu_custom_call.1} parent=108 // loop_footer_branch
                  %391 = sbr.rel target = $region111
                $region116: #{tpu_custom_call.1} parent=108 // loop_exit
                  _
              $region109: #{tpu_custom_call.1} parent=93 // pred_fallthru
                _
              // Predicated region
              $region117: #{tpu_custom_call.1} parent=93 // pred_check
                _
              $region118: #{tpu_custom_call.1} parent=93 // pred_check_branch
                %404 = sbr.rel target = $region120
              $region119: #{tpu_custom_call.1} parent=93 // pred_region
                _
              $region120: #{tpu_custom_call.1} parent=93 // pred_fallthru
                _
            $region94: #{tpu_custom_call.1} parent=89 // pred_fallthru
              _
            // Predicated region
            $region95: #{tpu_custom_call.1} parent=89 // pred_check
              _
            $region96: #{tpu_custom_call.1} parent=89 // pred_check_branch
              %374 = sbr.rel target = $region98
            $region97: #{tpu_custom_call.1} parent=89 // pred_region
              %s376 = ssub.s32 256, 1
              loop: start=0, step=1, limit=1
              $region99: #{tpu_custom_call.1} parent=97 // loop_pre_header
                _
              $region100: #{tpu_custom_call.1} parent=97 // loop_header
                %s378 = sphi 0, %s382
                %p379 = scmp.ge.s32.totalorder %s378, 1
                %s383 = sphi %s368, %s368
                %s384 = sphi %s366, %s366
              $region101: #{tpu_custom_call.1} parent=97 // loop_header_branch
                %381 = sbr.rel (%p379) target = $region105
              $region102: #{tpu_custom_call.1} parent=97 // loop_body
                %v385 = vld [vmem:[%s383] sm:%s376]
                %386 = vst [vmem:[%s384] sm:%s376] %v385
                %v387 = vld [vmem:[%s383 + $0x10] sm:%s376]
                %388 = vst [vmem:[%s384 + $0x8] sm:%s376] %v387
              $region103: #{tpu_custom_call.1} parent=97 // loop_footer
                %s382 = sadd.s32 1, %s378
              $region104: #{tpu_custom_call.1} parent=97 // loop_footer_branch
                %377 = sbr.rel target = $region100
              $region105: #{tpu_custom_call.1} parent=97 // loop_exit
                _
            $region98: #{tpu_custom_call.1} parent=89 // pred_fallthru
              _
          $region90: #{tpu_custom_call.1} parent=85 // pred_fallthru
            _
          %405 = vnop
        $region86: #{tpu_custom_call.1} parent=43 // pred_fallthru
          _
      $region44: #{tpu_custom_call.1} parent=5 // pred_fallthru
        _
      %p406 = scmp.le.s32.totalorder 1, %s23
      %p407 = scmp.lt.s32.totalorder %s23, 3
      %p408 = pnand %p406, %p407
      %p409 = pneg %p408
      // Predicated region
      $region121: #{tpu_custom_call.1} parent=5 // pred_check
        _
      $region122: #{tpu_custom_call.1} parent=5 // pred_check_branch
        %411 = sbr.rel (%p408) target = $region124
      $region123: #{tpu_custom_call.1} parent=5 // pred_region
        %s412 = ssub.s32 %s23, 1
        %s413 = sand.u32 %s36, 1
        %s414 = sand.u32 %s36, 1
        %s415 = smul.addr %s414, 16
        %s416 = scalar_lea.vmem [#allocation2], %s415
        // Predicated region
        $region125: #{tpu_custom_call.1} parent=123 // pred_check
          %p417 = pneg %p49
        $region126: #{tpu_custom_call.1} parent=123 // pred_check_branch
          %419 = sbr.rel (%p417) target = $region128
        $region127: #{tpu_custom_call.1} parent=123 // pred_region
          _
        $region128: #{tpu_custom_call.1} parent=123 // pred_fallthru
          _
        %s420 = sand.u32 %s62, 1
        %s421 = sand.u32 %s62, 1
        %s422 = smul.addr %s421, 16
        %s423 = scalar_lea.vmem [#allocation3], %s422
        // Predicated region
        $region129: #{tpu_custom_call.1} parent=123 // pred_check
          %p424 = pneg %p75
        $region130: #{tpu_custom_call.1} parent=123 // pred_check_branch
          %426 = sbr.rel (%p424) target = $region132
        $region131: #{tpu_custom_call.1} parent=123 // pred_region
          _
        $region132: #{tpu_custom_call.1} parent=123 // pred_fallthru
          _
        %s427 = sand.u32 %s36, 1
        %s428 = sand.u32 %s36, 1
        %s429 = smul.addr %s428, 16
        %s430 = scalar_lea.vmem [#allocation2], %s429
        %p431 = pneg %p49
        %p432 = pneg %p46
        %s433 = sand.u32 %s62, 1
        %s434 = sand.u32 %s62, 1
        %s435 = smul.addr %s434, 16
        %s436 = scalar_lea.vmem [#allocation3], %s435
        %p437 = pneg %p75
        %p438 = pneg %p72
        %p439 = pneg %p96
        %p440 = pneg %p93
        %p441 = pneg %p117
        %p442 = pneg %p114
        %p443 = pneg %p138
        %p444 = pneg %p135
        %p445 = pneg %p159
        %p446 = pneg %p156
        %p447 = pneg %p180
        %p448 = pneg %p177
        %p449 = pneg %p201
        %p450 = pneg %p198
        %p451 = pneg %p222
        %p452 = pneg %p219
        %p453 = pneg %p248
        %p454 = pneg %p245
        %s455 = sand.u32 %s235, 1
        %s456 = scalar_lea.sflag [#allocation5], %s455
        %s457 = sand.u32 %s235, 1
        %s458 = smul.addr %s457, 8
        %s459 = scalar_lea.vmem [#allocation4], %s458
        %p460 = pneg %p274
        %p461 = pneg %p271
        %s462 = sand.u32 %s261, 1
        %s463 = scalar_lea.sflag [#allocation7], %s462
        %s464 = sand.u32 %s261, 1
        %s465 = smul.addr %s464, 8
        %s466 = scalar_lea.vmem [#allocation6], %s465
        %v468 = vld [vmem:[%s416] sm:$0xff]
        %v469 = vld [vmem:[%s416 + $0x8] sm:$0xff]
        %v470 = vld [vmem:[%s423] sm:$0xff]
        %v471 = vld [vmem:[%s423 + $0x8] sm:$0xff]
        %v472 = vpack.c.bf16 %v469, %v468
        %v473 = vpack.c.bf16 %v471, %v470
        %v474 = vld [vmem:[%s2] sm:$0xff]
        %v475 = vld [vmem:[%s2 + $0x8] sm:$0xff]
        %v476 = vld [vmem:[%s2 + $0x10] sm:$0xff]
        %v477 = vld [vmem:[%s2 + $0x18] sm:$0xff]
        %v478 = vld [vmem:[%s3] sm:$0xff]
        %v479 = vld [vmem:[%s3 + $0x8] sm:$0xff]
        %v480 = vld [vmem:[%s3 + $0x10] sm:$0xff]
        %v481 = vld [vmem:[%s3 + $0x18] sm:$0xff]
        %v486 = vunpack.c.l.b16 %v478
        %v487 = vunpack.c.h.b16 %v478
        %v488 = vunpack.c.l.b16 %v479
        %v489 = vunpack.c.h.b16 %v479
        %v490 = vunpack.c.l.b16 %v480
        %v491 = vunpack.c.h.b16 %v480
        %v492 = vunpack.c.l.b16 %v481
        %v493 = vunpack.c.h.b16 %v481
        %v494 = vpack.c.b16 %v488, %v486
        %v495 = vpack.c.b16 %v489, %v487
        %v496 = vpack.c.b16 %v492, %v490
        %v497 = vpack.c.b16 %v493, %v491
        %vm502 = vcmask 261120
        %v504 = vsel %vm502, %v473, 0
        %506 = vmatpush.bf16.msra.mxu0 0
        %507 = vmatpush.bf16.msra.mxu0 0
        %508 = vmatpush.bf16.msra.mxu0 0
        %509 = vmatpush.bf16.msra.mxu0 0
        %510 = vmatpush.bf16.msra.mxu0 0
        %511 = vmatpush.bf16.msra.mxu0 0
        %512 = vmatpush.bf16.msra.mxu0 %v496
        %513 = vmatpush.bf16.msra.mxu0 %v494
        %514 = vmatmul.bf16.gmra.mxu0 %v504
        %v515 = vpop.f32.mrf.mxu0
        %v516 = vadd.f32 0.0, %v515
        %v517 = vpop.f32.mrf.mxu0
        %v518 = vadd.f32 0.0, %v517
        %519 = vdwg.mxu0
        %520 = vmatpush.bf16.msra.mxu0 0
        %521 = vmatpush.bf16.msra.mxu0 0
        %522 = vmatpush.bf16.msra.mxu0 0
        %523 = vmatpush.bf16.msra.mxu0 0
        %524 = vmatpush.bf16.msra.mxu0 0
        %525 = vmatpush.bf16.msra.mxu0 0
        %526 = vmatpush.bf16.msra.mxu0 %v497
        %527 = vmatpush.bf16.msra.mxu0 %v495
        %528 = vmatmul.bf16.gmra.mxu0 %v504
        %v529 = vpop.f32.mrf.mxu0
        %v530 = vadd.f32 0.0, %v529
        %v531 = vpop.f32.mrf.mxu0
        %v532 = vadd.f32 0.0, %v531
        %533 = vdwg.mxu0
        %v538 = vunpack.c.l.b16 %v474
        %v539 = vunpack.c.h.b16 %v474
        %v540 = vunpack.c.l.b16 %v475
        %v541 = vunpack.c.h.b16 %v475
        %v542 = vunpack.c.l.b16 %v476
        %v543 = vunpack.c.h.b16 %v476
        %v544 = vunpack.c.l.b16 %v477
        %v545 = vunpack.c.h.b16 %v477
        %v546 = vpack.c.b16 %v540, %v538
        %v547 = vpack.c.b16 %v541, %v539
        %v548 = vpack.c.b16 %v544, %v542
        %v549 = vpack.c.b16 %v545, %v543
        %v555 = vsel %vm502, %v472, 0
        %557 = vmatpush.bf16.msra.mxu0 0
        %558 = vmatpush.bf16.msra.mxu0 0
        %559 = vmatpush.bf16.msra.mxu0 0
        %560 = vmatpush.bf16.msra.mxu0 0
        %561 = vmatpush.bf16.msra.mxu0 0
        %562 = vmatpush.bf16.msra.mxu0 0
        %563 = vmatpush.bf16.msra.mxu0 %v548
        %564 = vmatpush.bf16.msra.mxu0 %v546
        %565 = vmatmul.bf16.gmra.mxu0 %v555
        %v566 = vpop.f32.mrf.mxu0
        %v567 = vadd.f32 %v516, %v566
        %v568 = vpop.f32.mrf.mxu0
        %v569 = vadd.f32 %v518, %v568
        %570 = vdwg.mxu0
        %571 = vmatpush.bf16.msra.mxu0 0
        %572 = vmatpush.bf16.msra.mxu0 0
        %573 = vmatpush.bf16.msra.mxu0 0
        %574 = vmatpush.bf16.msra.mxu0 0
        %575 = vmatpush.bf16.msra.mxu0 0
        %576 = vmatpush.bf16.msra.mxu0 0
        %577 = vmatpush.bf16.msra.mxu0 %v549
        %578 = vmatpush.bf16.msra.mxu0 %v547
        %579 = vmatmul.bf16.gmra.mxu0 %v555
        %v580 = vpop.f32.mrf.mxu0
        %v581 = vadd.f32 %v530, %v580
        %v582 = vpop.f32.mrf.mxu0
        %v583 = vadd.f32 %v532, %v582
        %584 = vdwg.mxu0
        %v585 = vld [vmem:[%s4] sm:$0x3]
        %v587 = vperm.slane %v585, 0
        %v588 = vperm.slane %v585, 1
        %v591 = vadd.f32 %v567, %v587
        %v592 = vadd.f32 %v581, %v588
        %v593 = vadd.f32 %v569, %v587
        %v594 = vadd.f32 %v583, %v588
        %v595 = vmax.f32 %v591, 0.0
        %v596 = vmax.f32 %v592, 0.0
        %v597 = vmax.f32 %v593, 0.0
        %v598 = vmax.f32 %v594, 0.0
        %v599 = vpack.c.bf16 %v597, %v595
        %v600 = vld [vmem:[%s5] sm:$0xf]
        %v601 = vld [vmem:[%s5 + $0x4] sm:$0xf]
        %v602 = vld [vmem:[%s5 + $0x8] sm:$0xf]
        %v603 = vld [vmem:[%s5 + $0xc] sm:$0xf]
        %v604 = vld [vmem:[%s5 + $0x10] sm:$0xf]
        %v605 = vld [vmem:[%s5 + $0x14] sm:$0xf]
        %v606 = vld [vmem:[%s5 + $0x18] sm:$0xf]
        %v607 = vld [vmem:[%s5 + $0x1c] sm:$0xf]
        %v608 = vld [vmem:[%s5 + $0x20] sm:$0xf]
        %v609 = vld [vmem:[%s5 + $0x24] sm:$0xf]
        %v610 = vld [vmem:[%s5 + $0x28] sm:$0xf]
        %v611 = vld [vmem:[%s5 + $0x2c] sm:$0xf]
        %v612 = vld [vmem:[%s5 + $0x30] sm:$0xf]
        %v613 = vld [vmem:[%s5 + $0x34] sm:$0xf]
        %v614 = vld [vmem:[%s5 + $0x38] sm:$0xf]
        %v615 = vld [vmem:[%s5 + $0x3c] sm:$0xf]
        %v616 = vld [vmem:[%s6] sm:$0x1]
        %v618 = vperm.slane %v616, 0
        %v636 = vunpack.c.l.b16 %v600
        %v637 = vunpack.c.l.b16 %v601
        %v638 = vunpack.c.l.b16 %v602
        %v639 = vunpack.c.l.b16 %v603
        %v640 = vunpack.c.l.b16 %v604
        %v641 = vunpack.c.l.b16 %v605
        %v642 = vunpack.c.l.b16 %v606
        %v643 = vunpack.c.l.b16 %v607
        %v644 = vunpack.c.l.b16 %v608
        %v645 = vunpack.c.l.b16 %v609
        %v646 = vunpack.c.l.b16 %v610
        %v647 = vunpack.c.l.b16 %v611
        %v648 = vunpack.c.l.b16 %v612
        %v649 = vunpack.c.l.b16 %v613
        %v650 = vunpack.c.l.b16 %v614
        %v651 = vunpack.c.l.b16 %v615
        %v652 = vpack.c.b16 %v637, %v636
        %v653 = vpack.c.b16 %v639, %v638
        %v654 = vpack.c.b16 %v641, %v640
        %v655 = vpack.c.b16 %v643, %v642
        %v656 = vpack.c.b16 %v645, %v644
        %v657 = vpack.c.b16 %v647, %v646
        %v658 = vpack.c.b16 %v649, %v648
        %v659 = vpack.c.b16 %v651, %v650
        %668 = vmatpush.bf16.msra.mxu0 %v659
        %669 = vmatpush.bf16.msra.mxu0 %v658
        %670 = vmatpush.bf16.msra.mxu0 %v657
        %671 = vmatpush.bf16.msra.mxu0 %v656
        %672 = vmatpush.bf16.msra.mxu0 %v655
        %673 = vmatpush.bf16.msra.mxu0 %v654
        %674 = vmatpush.bf16.msra.mxu0 %v653
        %675 = vmatpush.bf16.msra.mxu0 %v652
        %676 = vmatmul.bf16.gmra.mxu0 %v599
        %v677 = vpop.f32.mrf.mxu0
        %v678 = vadd.f32 %v618, %v677
        %v679 = vpop.f32.mrf.mxu0
        %v680 = vadd.f32 %v618, %v679
        %681 = vdwg.mxu0
        %v682 = vadd.f32 %v596, %v598
        %v683 = vrcp.pop 2.0
        %v684 = vmul.f32 2.0, %v683
        %v685 = vsub.f32 1.0, %v684
        %v686 = vmul.f32 %v683, %v685
        %v687 = vadd.f32 %v683, %v686
        %vm688 = vweird.f32 %v683
        %v689 = vsel %vm688, %v683, %v687
        %v690 = vmul.f32 %v682, %v689
        %v691 = vpack.c.bf16 %v690, %v690
        %v692 = vld [vmem:[%s7] sm:$0xf]
        %v693 = vld [vmem:[%s7 + $0x4] sm:$0xf]
        %v694 = vld [vmem:[%s7 + $0x8] sm:$0xf]
        %v695 = vld [vmem:[%s7 + $0xc] sm:$0xf]
        %v696 = vld [vmem:[%s7 + $0x10] sm:$0xf]
        %v697 = vld [vmem:[%s7 + $0x14] sm:$0xf]
        %v698 = vld [vmem:[%s7 + $0x18] sm:$0xf]
        %v699 = vld [vmem:[%s7 + $0x1c] sm:$0xf]
        %v700 = vld [vmem:[%s7 + $0x20] sm:$0xf]
        %v701 = vld [vmem:[%s7 + $0x24] sm:$0xf]
        %v702 = vld [vmem:[%s7 + $0x28] sm:$0xf]
        %v703 = vld [vmem:[%s7 + $0x2c] sm:$0xf]
        %v704 = vld [vmem:[%s7 + $0x30] sm:$0xf]
        %v705 = vld [vmem:[%s7 + $0x34] sm:$0xf]
        %v706 = vld [vmem:[%s7 + $0x38] sm:$0xf]
        %v707 = vld [vmem:[%s7 + $0x3c] sm:$0xf]
        %v708 = vld [vmem:[%s8] sm:$0x1]
        %v710 = vperm.slane %v708, 0
        %v728 = vunpack.c.l.b16 %v692
        %v729 = vunpack.c.l.b16 %v693
        %v730 = vunpack.c.l.b16 %v694
        %v731 = vunpack.c.l.b16 %v695
        %v732 = vunpack.c.l.b16 %v696
        %v733 = vunpack.c.l.b16 %v697
        %v734 = vunpack.c.l.b16 %v698
        %v735 = vunpack.c.l.b16 %v699
        %v736 = vunpack.c.l.b16 %v700
        %v737 = vunpack.c.l.b16 %v701
        %v738 = vunpack.c.l.b16 %v702
        %v739 = vunpack.c.l.b16 %v703
        %v740 = vunpack.c.l.b16 %v704
        %v741 = vunpack.c.l.b16 %v705
        %v742 = vunpack.c.l.b16 %v706
        %v743 = vunpack.c.l.b16 %v707
        %v744 = vpack.c.b16 %v729, %v728
        %v745 = vpack.c.b16 %v731, %v730
        %v746 = vpack.c.b16 %v733, %v732
        %v747 = vpack.c.b16 %v735, %v734
        %v748 = vpack.c.b16 %v737, %v736
        %v749 = vpack.c.b16 %v739, %v738
        %v750 = vpack.c.b16 %v741, %v740
        %v751 = vpack.c.b16 %v743, %v742
        %760 = vmatpush.bf16.msra.mxu0 %v751
        %761 = vmatpush.bf16.msra.mxu0 %v750
        %762 = vmatpush.bf16.msra.mxu0 %v749
        %763 = vmatpush.bf16.msra.mxu0 %v748
        %764 = vmatpush.bf16.msra.mxu0 %v747
        %765 = vmatpush.bf16.msra.mxu0 %v746
        %766 = vmatpush.bf16.msra.mxu0 %v745
        %767 = vmatpush.bf16.msra.mxu0 %v744
        %768 = vmatmul.bf16.gmra.mxu0 %v691
        %v769 = vpop.f32.mrf.mxu0
        %v770 = vadd.f32 %v710, %v769
        %v771 = vpop.f32.mrf.mxu0
        %772 = vdwg.mxu0
        %v773 = vand.u32 2147483647, %v770
        %v774 = vsub.f32 0.0, %v773
        %v775 = vmul.f32 %v774, 1.442695
        %v776 = vpow.pop %v775
        %vm777 = vcmp.ge.f32.partialorder %v770, 0.0
        %v778 = vsel %vm777, 1.0, %v776
        %v779 = vadd.f32 %v776, 1.0
        %v780 = vrcp.pop %v779
        %v781 = vmul.f32 %v779, %v780
        %v782 = vsub.f32 1.0, %v781
        %v783 = vmul.f32 %v780, %v782
        %v784 = vadd.f32 %v780, %v783
        %vm785 = vweird.f32 %v779
        %vm786 = vweird.f32 %v780
        %vm787 = vmor %vm785, %vm786
        %v788 = vsel %vm787, %v780, %v784
        %v789 = vand.u32 2147483647, %v779
        %vm790 = vcmp.eq.f32.partialorder %v789, 8.507059e+37
        %v791 = vand.u32 %v779, 2147483648
        %v792 = vor.u32 1.1754944e-38, %v791
        %v793 = vsel %vm790, %v792, %v788
        %v794 = vmul.f32 %v778, %v793
        %v795 = vsel %vm502, %v470, inf
        %v796 = vsel %vm502, %v471, inf
        %v797 = vmin.f32 %v795, %v796
        %v798 = vmul.f32 %v797, %v794
        %799 = vst.msk [vmem:[%s466] sm:$0xff] %vm502, %v798
        %v800 = vand.u32 2147483647, %v468
        %vm801 = vcmp.le.f32.partialorder %v800, 0.7853982
        %vm802 = vcmp.lt.s32.totalorder %v468, 0
        %v803 = vand.u32 %v468, 2139095040
        %v804 = vshrl.u32 %v803, 23
        %v805 = vsub.s32 %v804, 127
        %v806 = vand.u32 2147483647, %v468
        %v807 = vand.u32 %v806, 8388607
        %v808 = vor.u32 %v807, 8388608
        %v809 = vsub.s32 0, %v808
        %v810 = vadd.s32 %v805, 1
        %vm811 = vcmp.gt.s32.totalorder %v810, 0
        %v812 = vsel %vm811, %v810, 0
        %v813 = vshrl.u32 %v812, 5
        %v814 = vand.u32 %v812, 31
        %v815 = vsub.s32 32, %v814
        %v816 = vshrl.u32 683565275, %v815
        %v817 = vshll.u32 683565275, %v814
        %v818 = vshrl.u32 2475754826, %v815
        %v819 = vor.u32 %v817, %v818
        %v820 = vshll.u32 2475754826, %v814
        %v821 = vshrl.u32 2131351028, %v815
        %v822 = vor.u32 %v820, %v821
        %v823 = vshll.u32 2131351028, %v814
        %v824 = vshrl.u32 2102212464, %v815
        %v825 = vor.u32 %v823, %v824
        %v826 = vshll.u32 2102212464, %v814
        %v827 = vshrl.u32 920167782, %v815
        %v828 = vor.u32 %v826, %v827
        %v829 = vshll.u32 920167782, %v814
        %v830 = vshrl.u32 1326507024, %v815
        %v831 = vor.u32 %v829, %v830
        %vm832 = vcmp.lt.s32.totalorder %v813, 1
        %vm833 = vcmp.lt.s32.totalorder %v813, 2
        %vm834 = vcmp.lt.s32.totalorder %v813, 3
        %vm835 = vcmp.lt.s32.totalorder %v813, 4
        %v836 = vsel %vm832, %v816, %v819
        %v837 = vsel %vm835, %v825, 2102212464
        %v838 = vsel %vm834, %v822, %v837
        %v839 = vsel %vm833, %v836, %v838
        %v840 = vsel %vm832, %v819, %v822
        %v841 = vsel %vm835, %v828, 920167782
        %v842 = vsel %vm834, %v825, %v841
        %v843 = vsel %vm833, %v840, %v842
        %v844 = vsel %vm832, %v822, %v825
        %v845 = vsel %vm835, %v831, 1326507024
        %v846 = vsel %vm834, %v828, %v845
        %v847 = vsel %vm833, %v844, %v846
        %v848 = vshll.u32 %v808, 8
        %v849 = vand.u32 %v848, 65535
        %v850 = vshrl.u32 %v848, 16
        %v851 = vand.u32 %v847, 65535
        %v852 = vshrl.u32 %v847, 16
        %v853 = vmul.u32 %v849, %v851
        %v854 = vmul.u32 %v849, %v852
        %v855 = vmul.u32 %v850, %v851
        %v856 = vmul.u32 %v850, %v852
        %v857 = vshll.u32 %v854, 16
        %v858 = vshrl.u32 %v854, 16
        %v859 = vshll.u32 %v855, 16
        %v860 = vshrl.u32 %v855, 16
        %vm861 = vc.u32 %v853, %v857
        %v862 = vsel %vm861, 1, 0
        %v863 = vadd.s32 %v853, %v857
        %v864 = vadd.s32 %v856, %v862
        %vm865 = vc.u32 %v863, %v859
        %v866 = vsel %vm865, 1, 0
        %v867 = vadd.s32 %v863, %v859
        %v868 = vadd.s32 %v864, %v866
        %v869 = vadd.s32 %v868, %v858
        %v870 = vadd.s32 %v869, %v860
        %v871 = vand.u32 %v848, 65535
        %v872 = vshrl.u32 %v848, 16
        %v873 = vand.u32 %v843, 65535
        %v874 = vshrl.u32 %v843, 16
        %v875 = vmul.u32 %v871, %v873
        %v876 = vmul.u32 %v871, %v874
        %v877 = vmul.u32 %v872, %v873
        %v878 = vmul.u32 %v872, %v874
        %v879 = vshll.u32 %v876, 16
        %v880 = vshrl.u32 %v876, 16
        %v881 = vshll.u32 %v877, 16
        %v882 = vshrl.u32 %v877, 16
        %vm883 = vc.u32 %v875, %v879
        %v884 = vsel %vm883, 1, 0
        %v885 = vadd.s32 %v875, %v879
        %v886 = vadd.s32 %v878, %v884
        %vm887 = vc.u32 %v885, %v881
        %v888 = vsel %vm887, 1, 0
        %v889 = vadd.s32 %v885, %v881
        %v890 = vadd.s32 %v886, %v888
        %v891 = vadd.s32 %v890, %v880
        %v892 = vadd.s32 %v891, %v882
        %v893 = vmul.u32 %v848, %v839
        %v894 = vadd.s32 %v870, %v889
        %vm895 = vc.u32 %v870, %v889
        %v896 = vadd.s32 %v892, 1
        %v897 = vsel %vm895, %v896, %v892
        %v898 = vadd.s32 %v893, %v897
        %v899 = vadd.s32 %v898, 536870912
        %v900 = vshrl.u32 %v899, 30
        %v901 = vshll.u32 %v900, 30
        %v902 = vsub.s32 %v898, %v901
        %vm903 = vcmp.lt.s32.totalorder %v902, 0
        %v904 = vsub.s32 0, %v902
        %v905 = vsel %vm903, %v904, %v902
        %v906 = vclz %v905
        %v907 = vsub.s32 %v906, 2
        %vm908 = vcmp.gt.s32.totalorder 0, %v907
        %v909 = vsel %vm908, 0, %v907
        %v910 = vsub.s32 32, %v909
        %v911 = vshll.u32 %v902, %v909
        %v912 = vshrl.u32 %v894, %v910
        %v913 = vor.u32 %v911, %v912
        %v914 = vsub.s32 4294967266, %v909
        %v915 = vadd.s32 %v914, 127
        %v916 = vshll.u32 %v915, 23
        %v917 = vor.u32 4788187, %v916
        %v918 = vand.u32 2147483647, %v917
        %v920 = vcvt.s32.f32 %v913
        %v921 = vmul.f32 %v920, %v918
        %v922 = vxor.u32 %v921, 2147483648
        %v923 = vsel %vm802, %v922, %v921
        %v924 = vsub.s32 4, %v900
        %v925 = vsel %vm802, %v924, %v900
        %v926 = vsel %vm801, %v468, %v923
        %v927 = vsel %vm801, 0, %v925
        %v928 = vmul.f32 %v926, %v926
        %v929 = vmul.f32 %v928, -0.001358992
        %v930 = vadd.f32 %v929, 0.041655596
        %v931 = vmul.f32 %v928, %v930
        %v932 = vadd.f32 %v931, -0.4999988
        %v933 = vmul.f32 %v928, %v932
        %v934 = vadd.f32 1.0, %v933
        %v935 = vmul.f32 %v926, %v926
        %v936 = vmul.f32 %v935, -0.00019511016
        %v937 = vadd.f32 %v936, 0.008332121
        %v938 = vmul.f32 %v935, %v937
        %v939 = vadd.f32 %v938, -0.16666654
        %v940 = vmul.f32 %v935, %v939
        %v941 = vadd.f32 %v940, 1.0
        %v942 = vmul.f32 %v941, %v926
        %vm943 = vweird.f32 %v468
        %v944 = vand.u32 %v927, 3
        %vm945 = vcmp.lt.s32.totalorder %v944, 2
        %vm946 = vcmp.eq.s32.totalorder %v944, 0
        %v947 = vxor.u32 %v942, 2147483648
        %v948 = vsel %vm946, %v934, %v947
        %vm949 = vcmp.eq.s32.totalorder %v944, 2
        %v950 = vxor.u32 %v934, 2147483648
        %v951 = vsel %vm949, %v950, %v942
        %v952 = vsel %vm945, %v948, %v951
        %v953 = vsel %vm943, nan, %v952
        %v954 = vand.u32 2147483647, %v469
        %vm955 = vcmp.le.f32.partialorder %v954, 0.7853982
        %vm956 = vcmp.lt.s32.totalorder %v469, 0
        %v957 = vand.u32 %v469, 2139095040
        %v958 = vshrl.u32 %v957, 23
        %v959 = vsub.s32 %v958, 127
        %v960 = vand.u32 2147483647, %v469
        %v961 = vand.u32 %v960, 8388607
        %v962 = vor.u32 %v961, 8388608
        %v963 = vsub.s32 0, %v962
        %v964 = vadd.s32 %v959, 1
        %vm965 = vcmp.gt.s32.totalorder %v964, 0
        %v966 = vsel %vm965, %v964, 0
        %v967 = vshrl.u32 %v966, 5
        %v968 = vand.u32 %v966, 31
        %v969 = vsub.s32 32, %v968
        %v970 = vshrl.u32 683565275, %v969
        %v971 = vshll.u32 683565275, %v968
        %v972 = vshrl.u32 2475754826, %v969
        %v973 = vor.u32 %v971, %v972
        %v974 = vshll.u32 2475754826, %v968
        %v975 = vshrl.u32 2131351028, %v969
        %v976 = vor.u32 %v974, %v975
        %v977 = vshll.u32 2131351028, %v968
        %v978 = vshrl.u32 2102212464, %v969
        %v979 = vor.u32 %v977, %v978
        %v980 = vshll.u32 2102212464, %v968
        %v981 = vshrl.u32 920167782, %v969
        %v982 = vor.u32 %v980, %v981
        %v983 = vshll.u32 920167782, %v968
        %v984 = vshrl.u32 1326507024, %v969
        %v985 = vor.u32 %v983, %v984
        %vm986 = vcmp.lt.s32.totalorder %v967, 1
        %vm987 = vcmp.lt.s32.totalorder %v967, 2
        %vm988 = vcmp.lt.s32.totalorder %v967, 3
        %vm989 = vcmp.lt.s32.totalorder %v967, 4
        %v990 = vsel %vm986, %v970, %v973
        %v991 = vsel %vm989, %v979, 2102212464
        %v992 = vsel %vm988, %v976, %v991
        %v993 = vsel %vm987, %v990, %v992
        %v994 = vsel %vm986, %v973, %v976
        %v995 = vsel %vm989, %v982, 920167782
        %v996 = vsel %vm988, %v979, %v995
        %v997 = vsel %vm987, %v994, %v996
        %v998 = vsel %vm986, %v976, %v979
        %v999 = vsel %vm989, %v985, 1326507024
        %v1000 = vsel %vm988, %v982, %v999
        %v1001 = vsel %vm987, %v998, %v1000
        %v1002 = vshll.u32 %v962, 8
        %v1003 = vand.u32 %v1002, 65535
        %v1004 = vshrl.u32 %v1002, 16
        %v1005 = vand.u32 %v1001, 65535
        %v1006 = vshrl.u32 %v1001, 16
        %v1007 = vmul.u32 %v1003, %v1005
        %v1008 = vmul.u32 %v1003, %v1006
        %v1009 = vmul.u32 %v1004, %v1005
        %v1010 = vmul.u32 %v1004, %v1006
        %v1011 = vshll.u32 %v1008, 16
        %v1012 = vshrl.u32 %v1008, 16
        %v1013 = vshll.u32 %v1009, 16
        %v1014 = vshrl.u32 %v1009, 16
        %vm1015 = vc.u32 %v1007, %v1011
        %v1016 = vsel %vm1015, 1, 0
        %v1017 = vadd.s32 %v1007, %v1011
        %v1018 = vadd.s32 %v1010, %v1016
        %vm1019 = vc.u32 %v1017, %v1013
        %v1020 = vsel %vm1019, 1, 0
        %v1021 = vadd.s32 %v1017, %v1013
        %v1022 = vadd.s32 %v1018, %v1020
        %v1023 = vadd.s32 %v1022, %v1012
        %v1024 = vadd.s32 %v1023, %v1014
        %v1025 = vand.u32 %v1002, 65535
        %v1026 = vshrl.u32 %v1002, 16
        %v1027 = vand.u32 %v997, 65535
        %v1028 = vshrl.u32 %v997, 16
        %v1029 = vmul.u32 %v1025, %v1027
        %v1030 = vmul.u32 %v1025, %v1028
        %v1031 = vmul.u32 %v1026, %v1027
        %v1032 = vmul.u32 %v1026, %v1028
        %v1033 = vshll.u32 %v1030, 16
        %v1034 = vshrl.u32 %v1030, 16
        %v1035 = vshll.u32 %v1031, 16
        %v1036 = vshrl.u32 %v1031, 16
        %vm1037 = vc.u32 %v1029, %v1033
        %v1038 = vsel %vm1037, 1, 0
        %v1039 = vadd.s32 %v1029, %v1033
        %v1040 = vadd.s32 %v1032, %v1038
        %vm1041 = vc.u32 %v1039, %v1035
        %v1042 = vsel %vm1041, 1, 0
        %v1043 = vadd.s32 %v1039, %v1035
        %v1044 = vadd.s32 %v1040, %v1042
        %v1045 = vadd.s32 %v1044, %v1034
        %v1046 = vadd.s32 %v1045, %v1036
        %v1047 = vmul.u32 %v1002, %v993
        %v1048 = vadd.s32 %v1024, %v1043
        %vm1049 = vc.u32 %v1024, %v1043
        %v1050 = vadd.s32 %v1046, 1
        %v1051 = vsel %vm1049, %v1050, %v1046
        %v1052 = vadd.s32 %v1047, %v1051
        %v1053 = vadd.s32 %v1052, 536870912
        %v1054 = vshrl.u32 %v1053, 30
        %v1055 = vshll.u32 %v1054, 30
        %v1056 = vsub.s32 %v1052, %v1055
        %vm1057 = vcmp.lt.s32.totalorder %v1056, 0
        %v1058 = vsub.s32 0, %v1056
        %v1059 = vsel %vm1057, %v1058, %v1056
        %v1060 = vclz %v1059
        %v1061 = vsub.s32 %v1060, 2
        %vm1062 = vcmp.gt.s32.totalorder 0, %v1061
        %v1063 = vsel %vm1062, 0, %v1061
        %v1064 = vsub.s32 32, %v1063
        %v1065 = vshll.u32 %v1056, %v1063
        %v1066 = vshrl.u32 %v1048, %v1064
        %v1067 = vor.u32 %v1065, %v1066
        %v1068 = vsub.s32 4294967266, %v1063
        %v1069 = vadd.s32 %v1068, 127
        %v1070 = vshll.u32 %v1069, 23
        %v1071 = vor.u32 4788187, %v1070
        %v1072 = vand.u32 2147483647, %v1071
        %v1074 = vcvt.s32.f32 %v1067
        %v1075 = vmul.f32 %v1074, %v1072
        %v1076 = vxor.u32 %v1075, 2147483648
        %v1077 = vsel %vm956, %v1076, %v1075
        %v1078 = vsub.s32 4, %v1054
        %v1079 = vsel %vm956, %v1078, %v1054
        %v1080 = vsel %vm955, %v469, %v1077
        %v1081 = vsel %vm955, 0, %v1079
        %v1082 = vmul.f32 %v1080, %v1080
        %v1083 = vmul.f32 %v1082, -0.001358992
        %v1084 = vadd.f32 %v1083, 0.041655596
        %v1085 = vmul.f32 %v1082, %v1084
        %v1086 = vadd.f32 %v1085, -0.4999988
        %v1087 = vmul.f32 %v1082, %v1086
        %v1088 = vadd.f32 1.0, %v1087
        %v1089 = vmul.f32 %v1080, %v1080
        %v1090 = vmul.f32 %v1089, -0.00019511016
        %v1091 = vadd.f32 %v1090, 0.008332121
        %v1092 = vmul.f32 %v1089, %v1091
        %v1093 = vadd.f32 %v1092, -0.16666654
        %v1094 = vmul.f32 %v1089, %v1093
        %v1095 = vadd.f32 %v1094, 1.0
        %v1096 = vmul.f32 %v1095, %v1080
        %vm1097 = vweird.f32 %v469
        %v1098 = vand.u32 %v1081, 3
        %vm1099 = vcmp.lt.s32.totalorder %v1098, 2
        %vm1100 = vcmp.eq.s32.totalorder %v1098, 0
        %v1101 = vxor.u32 %v1096, 2147483648
        %v1102 = vsel %vm1100, %v1088, %v1101
        %vm1103 = vcmp.eq.s32.totalorder %v1098, 2
        %v1104 = vxor.u32 %v1088, 2147483648
        %v1105 = vsel %vm1103, %v1104, %v1096
        %v1106 = vsel %vm1099, %v1102, %v1105
        %v1107 = vsel %vm1097, nan, %v1106
        %v1108 = vand.u32 2147483647, %v468
        %vm1109 = vcmp.le.f32.partialorder %v1108, 0.7853982
        %vm1110 = vcmp.lt.s32.totalorder %v468, 0
        %v1111 = vand.u32 %v468, 2139095040
        %v1112 = vshrl.u32 %v1111, 23
        %v1113 = vsub.s32 %v1112, 127
        %v1114 = vand.u32 2147483647, %v468
        %v1115 = vand.u32 %v1114, 8388607
        %v1116 = vor.u32 %v1115, 8388608
        %v1117 = vsub.s32 0, %v1116
        %v1118 = vadd.s32 %v1113, 1
        %vm1119 = vcmp.gt.s32.totalorder %v1118, 0
        %v1120 = vsel %vm1119, %v1118, 0
        %v1121 = vshrl.u32 %v1120, 5
        %v1122 = vand.u32 %v1120, 31
        %v1123 = vsub.s32 32, %v1122
        %v1124 = vshrl.u32 683565275, %v1123
        %v1125 = vshll.u32 683565275, %v1122
        %v1126 = vshrl.u32 2475754826, %v1123
        %v1127 = vor.u32 %v1125, %v1126
        %v1128 = vshll.u32 2475754826, %v1122
        %v1129 = vshrl.u32 2131351028, %v1123
        %v1130 = vor.u32 %v1128, %v1129
        %v1131 = vshll.u32 2131351028, %v1122
        %v1132 = vshrl.u32 2102212464, %v1123
        %v1133 = vor.u32 %v1131, %v1132
        %v1134 = vshll.u32 2102212464, %v1122
        %v1135 = vshrl.u32 920167782, %v1123
        %v1136 = vor.u32 %v1134, %v1135
        %v1137 = vshll.u32 920167782, %v1122
        %v1138 = vshrl.u32 1326507024, %v1123
        %v1139 = vor.u32 %v1137, %v1138
        %vm1140 = vcmp.lt.s32.totalorder %v1121, 1
        %vm1141 = vcmp.lt.s32.totalorder %v1121, 2
        %vm1142 = vcmp.lt.s32.totalorder %v1121, 3
        %vm1143 = vcmp.lt.s32.totalorder %v1121, 4
        %v1144 = vsel %vm1140, %v1124, %v1127
        %v1145 = vsel %vm1143, %v1133, 2102212464
        %v1146 = vsel %vm1142, %v1130, %v1145
        %v1147 = vsel %vm1141, %v1144, %v1146
        %v1148 = vsel %vm1140, %v1127, %v1130
        %v1149 = vsel %vm1143, %v1136, 920167782
        %v1150 = vsel %vm1142, %v1133, %v1149
        %v1151 = vsel %vm1141, %v1148, %v1150
        %v1152 = vsel %vm1140, %v1130, %v1133
        %v1153 = vsel %vm1143, %v1139, 1326507024
        %v1154 = vsel %vm1142, %v1136, %v1153
        %v1155 = vsel %vm1141, %v1152, %v1154
        %v1156 = vshll.u32 %v1116, 8
        %v1157 = vand.u32 %v1156, 65535
        %v1158 = vshrl.u32 %v1156, 16
        %v1159 = vand.u32 %v1155, 65535
        %v1160 = vshrl.u32 %v1155, 16
        %v1161 = vmul.u32 %v1157, %v1159
        %v1162 = vmul.u32 %v1157, %v1160
        %v1163 = vmul.u32 %v1158, %v1159
        %v1164 = vmul.u32 %v1158, %v1160
        %v1165 = vshll.u32 %v1162, 16
        %v1166 = vshrl.u32 %v1162, 16
        %v1167 = vshll.u32 %v1163, 16
        %v1168 = vshrl.u32 %v1163, 16
        %vm1169 = vc.u32 %v1161, %v1165
        %v1170 = vsel %vm1169, 1, 0
        %v1171 = vadd.s32 %v1161, %v1165
        %v1172 = vadd.s32 %v1164, %v1170
        %vm1173 = vc.u32 %v1171, %v1167
        %v1174 = vsel %vm1173, 1, 0
        %v1175 = vadd.s32 %v1171, %v1167
        %v1176 = vadd.s32 %v1172, %v1174
        %v1177 = vadd.s32 %v1176, %v1166
        %v1178 = vadd.s32 %v1177, %v1168
        %v1179 = vand.u32 %v1156, 65535
        %v1180 = vshrl.u32 %v1156, 16
        %v1181 = vand.u32 %v1151, 65535
        %v1182 = vshrl.u32 %v1151, 16
        %v1183 = vmul.u32 %v1179, %v1181
        %v1184 = vmul.u32 %v1179, %v1182
        %v1185 = vmul.u32 %v1180, %v1181
        %v1186 = vmul.u32 %v1180, %v1182
        %v1187 = vshll.u32 %v1184, 16
        %v1188 = vshrl.u32 %v1184, 16
        %v1189 = vshll.u32 %v1185, 16
        %v1190 = vshrl.u32 %v1185, 16
        %vm1191 = vc.u32 %v1183, %v1187
        %v1192 = vsel %vm1191, 1, 0
        %v1193 = vadd.s32 %v1183, %v1187
        %v1194 = vadd.s32 %v1186, %v1192
        %vm1195 = vc.u32 %v1193, %v1189
        %v1196 = vsel %vm1195, 1, 0
        %v1197 = vadd.s32 %v1193, %v1189
        %v1198 = vadd.s32 %v1194, %v1196
        %v1199 = vadd.s32 %v1198, %v1188
        %v1200 = vadd.s32 %v1199, %v1190
        %v1201 = vmul.u32 %v1156, %v1147
        %v1202 = vadd.s32 %v1178, %v1197
        %vm1203 = vc.u32 %v1178, %v1197
        %v1204 = vadd.s32 %v1200, 1
        %v1205 = vsel %vm1203, %v1204, %v1200
        %v1206 = vadd.s32 %v1201, %v1205
        %v1207 = vadd.s32 %v1206, 536870912
        %v1208 = vshrl.u32 %v1207, 30
        %v1209 = vshll.u32 %v1208, 30
        %v1210 = vsub.s32 %v1206, %v1209
        %vm1211 = vcmp.lt.s32.totalorder %v1210, 0
        %v1212 = vsub.s32 0, %v1210
        %v1213 = vsel %vm1211, %v1212, %v1210
        %v1214 = vclz %v1213
        %v1215 = vsub.s32 %v1214, 2
        %vm1216 = vcmp.gt.s32.totalorder 0, %v1215
        %v1217 = vsel %vm1216, 0, %v1215
        %v1218 = vsub.s32 32, %v1217
        %v1219 = vshll.u32 %v1210, %v1217
        %v1220 = vshrl.u32 %v1202, %v1218
        %v1221 = vor.u32 %v1219, %v1220
        %v1222 = vsub.s32 4294967266, %v1217
        %v1223 = vadd.s32 %v1222, 127
        %v1224 = vshll.u32 %v1223, 23
        %v1225 = vor.u32 4788187, %v1224
        %v1226 = vand.u32 2147483647, %v1225
        %v1228 = vcvt.s32.f32 %v1221
        %v1229 = vmul.f32 %v1228, %v1226
        %v1230 = vxor.u32 %v1229, 2147483648
        %v1231 = vsel %vm1110, %v1230, %v1229
        %v1232 = vsub.s32 4, %v1208
        %v1233 = vsel %vm1110, %v1232, %v1208
        %v1234 = vsel %vm1109, %v468, %v1231
        %v1235 = vsel %vm1109, 0, %v1233
        %v1236 = vmul.f32 %v1234, %v1234
        %v1237 = vmul.f32 %v1236, -0.001358992
        %v1238 = vadd.f32 %v1237, 0.041655596
        %v1239 = vmul.f32 %v1236, %v1238
        %v1240 = vadd.f32 %v1239, -0.4999988
        %v1241 = vmul.f32 %v1236, %v1240
        %v1242 = vadd.f32 1.0, %v1241
        %v1243 = vmul.f32 %v1234, %v1234
        %v1244 = vmul.f32 %v1243, -0.00019511016
        %v1245 = vadd.f32 %v1244, 0.008332121
        %v1246 = vmul.f32 %v1243, %v1245
        %v1247 = vadd.f32 %v1246, -0.16666654
        %v1248 = vmul.f32 %v1243, %v1247
        %v1249 = vadd.f32 %v1248, 1.0
        %v1250 = vmul.f32 %v1249, %v1234
        %vm1251 = vweird.f32 %v468
        %v1252 = vadd.s32 %v1235, 3
        %v1253 = vand.u32 %v1252, 3
        %vm1254 = vcmp.lt.s32.totalorder %v1253, 2
        %vm1255 = vcmp.eq.s32.totalorder %v1253, 0
        %v1256 = vxor.u32 %v1250, 2147483648
        %v1257 = vsel %vm1255, %v1242, %v1256
        %vm1258 = vcmp.eq.s32.totalorder %v1253, 2
        %v1259 = vxor.u32 %v1242, 2147483648
        %v1260 = vsel %vm1258, %v1259, %v1250
        %v1261 = vsel %vm1254, %v1257, %v1260
        %v1262 = vsel %vm1251, nan, %v1261
        %v1263 = vand.u32 2147483647, %v469
        %vm1264 = vcmp.le.f32.partialorder %v1263, 0.7853982
        %vm1265 = vcmp.lt.s32.totalorder %v469, 0
        %v1266 = vand.u32 %v469, 2139095040
        %v1267 = vshrl.u32 %v1266, 23
        %v1268 = vsub.s32 %v1267, 127
        %v1269 = vand.u32 2147483647, %v469
        %v1270 = vand.u32 %v1269, 8388607
        %v1271 = vor.u32 %v1270, 8388608
        %v1272 = vsub.s32 0, %v1271
        %v1273 = vadd.s32 %v1268, 1
        %vm1274 = vcmp.gt.s32.totalorder %v1273, 0
        %v1275 = vsel %vm1274, %v1273, 0
        %v1276 = vshrl.u32 %v1275, 5
        %v1277 = vand.u32 %v1275, 31
        %v1278 = vsub.s32 32, %v1277
        %v1279 = vshrl.u32 683565275, %v1278
        %v1280 = vshll.u32 683565275, %v1277
        %v1281 = vshrl.u32 2475754826, %v1278
        %v1282 = vor.u32 %v1280, %v1281
        %v1283 = vshll.u32 2475754826, %v1277
        %v1284 = vshrl.u32 2131351028, %v1278
        %v1285 = vor.u32 %v1283, %v1284
        %v1286 = vshll.u32 2131351028, %v1277
        %v1287 = vshrl.u32 2102212464, %v1278
        %v1288 = vor.u32 %v1286, %v1287
        %v1289 = vshll.u32 2102212464, %v1277
        %v1290 = vshrl.u32 920167782, %v1278
        %v1291 = vor.u32 %v1289, %v1290
        %v1292 = vshll.u32 920167782, %v1277
        %v1293 = vshrl.u32 1326507024, %v1278
        %v1294 = vor.u32 %v1292, %v1293
        %vm1295 = vcmp.lt.s32.totalorder %v1276, 1
        %vm1296 = vcmp.lt.s32.totalorder %v1276, 2
        %vm1297 = vcmp.lt.s32.totalorder %v1276, 3
        %vm1298 = vcmp.lt.s32.totalorder %v1276, 4
        %v1299 = vsel %vm1295, %v1279, %v1282
        %v1300 = vsel %vm1298, %v1288, 2102212464
        %v1301 = vsel %vm1297, %v1285, %v1300
        %v1302 = vsel %vm1296, %v1299, %v1301
        %v1303 = vsel %vm1295, %v1282, %v1285
        %v1304 = vsel %vm1298, %v1291, 920167782
        %v1305 = vsel %vm1297, %v1288, %v1304
        %v1306 = vsel %vm1296, %v1303, %v1305
        %v1307 = vsel %vm1295, %v1285, %v1288
        %v1308 = vsel %vm1298, %v1294, 1326507024
        %v1309 = vsel %vm1297, %v1291, %v1308
        %v1310 = vsel %vm1296, %v1307, %v1309
        %v1311 = vshll.u32 %v1271, 8
        %v1312 = vand.u32 %v1311, 65535
        %v1313 = vshrl.u32 %v1311, 16
        %v1314 = vand.u32 %v1310, 65535
        %v1315 = vshrl.u32 %v1310, 16
        %v1316 = vmul.u32 %v1312, %v1314
        %v1317 = vmul.u32 %v1312, %v1315
        %v1318 = vmul.u32 %v1313, %v1314
        %v1319 = vmul.u32 %v1313, %v1315
        %v1320 = vshll.u32 %v1317, 16
        %v1321 = vshrl.u32 %v1317, 16
        %v1322 = vshll.u32 %v1318, 16
        %v1323 = vshrl.u32 %v1318, 16
        %vm1324 = vc.u32 %v1316, %v1320
        %v1325 = vsel %vm1324, 1, 0
        %v1326 = vadd.s32 %v1316, %v1320
        %v1327 = vadd.s32 %v1319, %v1325
        %vm1328 = vc.u32 %v1326, %v1322
        %v1329 = vsel %vm1328, 1, 0
        %v1330 = vadd.s32 %v1326, %v1322
        %v1331 = vadd.s32 %v1327, %v1329
        %v1332 = vadd.s32 %v1331, %v1321
        %v1333 = vadd.s32 %v1332, %v1323
        %v1334 = vand.u32 %v1311, 65535
        %v1335 = vshrl.u32 %v1311, 16
        %v1336 = vand.u32 %v1306, 65535
        %v1337 = vshrl.u32 %v1306, 16
        %v1338 = vmul.u32 %v1334, %v1336
        %v1339 = vmul.u32 %v1334, %v1337
        %v1340 = vmul.u32 %v1335, %v1336
        %v1341 = vmul.u32 %v1335, %v1337
        %v1342 = vshll.u32 %v1339, 16
        %v1343 = vshrl.u32 %v1339, 16
        %v1344 = vshll.u32 %v1340, 16
        %v1345 = vshrl.u32 %v1340, 16
        %vm1346 = vc.u32 %v1338, %v1342
        %v1347 = vsel %vm1346, 1, 0
        %v1348 = vadd.s32 %v1338, %v1342
        %v1349 = vadd.s32 %v1341, %v1347
        %vm1350 = vc.u32 %v1348, %v1344
        %v1351 = vsel %vm1350, 1, 0
        %v1352 = vadd.s32 %v1348, %v1344
        %v1353 = vadd.s32 %v1349, %v1351
        %v1354 = vadd.s32 %v1353, %v1343
        %v1355 = vadd.s32 %v1354, %v1345
        %v1356 = vmul.u32 %v1311, %v1302
        %v1357 = vadd.s32 %v1333, %v1352
        %vm1358 = vc.u32 %v1333, %v1352
        %v1359 = vadd.s32 %v1355, 1
        %v1360 = vsel %vm1358, %v1359, %v1355
        %v1361 = vadd.s32 %v1356, %v1360
        %v1362 = vadd.s32 %v1361, 536870912
        %v1363 = vshrl.u32 %v1362, 30
        %v1364 = vshll.u32 %v1363, 30
        %v1365 = vsub.s32 %v1361, %v1364
        %vm1366 = vcmp.lt.s32.totalorder %v1365, 0
        %v1367 = vsub.s32 0, %v1365
        %v1368 = vsel %vm1366, %v1367, %v1365
        %v1369 = vclz %v1368
        %v1370 = vsub.s32 %v1369, 2
        %vm1371 = vcmp.gt.s32.totalorder 0, %v1370
        %v1372 = vsel %vm1371, 0, %v1370
        %v1373 = vsub.s32 32, %v1372
        %v1374 = vshll.u32 %v1365, %v1372
        %v1375 = vshrl.u32 %v1357, %v1373
        %v1376 = vor.u32 %v1374, %v1375
        %v1377 = vsub.s32 4294967266, %v1372
        %v1378 = vadd.s32 %v1377, 127
        %v1379 = vshll.u32 %v1378, 23
        %v1380 = vor.u32 4788187, %v1379
        %v1381 = vand.u32 2147483647, %v1380
        %v1383 = vcvt.s32.f32 %v1376
        %v1384 = vmul.f32 %v1383, %v1381
        %v1385 = vxor.u32 %v1384, 2147483648
        %v1386 = vsel %vm1265, %v1385, %v1384
        %v1387 = vsub.s32 4, %v1363
        %v1388 = vsel %vm1265, %v1387, %v1363
        %v1389 = vsel %vm1264, %v469, %v1386
        %v1390 = vsel %vm1264, 0, %v1388
        %v1391 = vmul.f32 %v1389, %v1389
        %v1392 = vmul.f32 %v1391, -0.001358992
        %v1393 = vadd.f32 %v1392, 0.041655596
        %v1394 = vmul.f32 %v1391, %v1393
        %v1395 = vadd.f32 %v1394, -0.4999988
        %v1396 = vmul.f32 %v1391, %v1395
        %v1397 = vadd.f32 1.0, %v1396
        %v1398 = vmul.f32 %v1389, %v1389
        %v1399 = vmul.f32 %v1398, -0.00019511016
        %v1400 = vadd.f32 %v1399, 0.008332121
        %v1401 = vmul.f32 %v1398, %v1400
        %v1402 = vadd.f32 %v1401, -0.16666654
        %v1403 = vmul.f32 %v1398, %v1402
        %v1404 = vadd.f32 %v1403, 1.0
        %v1405 = vmul.f32 %v1404, %v1389
        %vm1406 = vweird.f32 %v469
        %v1407 = vadd.s32 %v1390, 3
        %v1408 = vand.u32 %v1407, 3
        %vm1409 = vcmp.lt.s32.totalorder %v1408, 2
        %vm1410 = vcmp.eq.s32.totalorder %v1408, 0
        %v1411 = vxor.u32 %v1405, 2147483648
        %v1412 = vsel %vm1410, %v1397, %v1411
        %vm1413 = vcmp.eq.s32.totalorder %v1408, 2
        %v1414 = vxor.u32 %v1397, 2147483648
        %v1415 = vsel %vm1413, %v1414, %v1405
        %v1416 = vsel %vm1409, %v1412, %v1415
        %v1417 = vsel %vm1406, nan, %v1416
        %v1418 = vsub.f32 %v678, %v680
        %v1419 = vand.u32 2147483647, %v1418
        %v1420 = vsub.f32 0.0, %v1419
        %v1421 = vmul.f32 %v1420, 1.442695
        %v1422 = vpow.pop %v1421
        %vm1423 = vcmp.ge.f32.partialorder %v1418, 0.0
        %v1424 = vsel %vm1423, 1.0, %v1422
        %v1425 = vadd.f32 %v1422, 1.0
        %v1426 = vrcp.pop %v1425
        %v1427 = vmul.f32 %v1425, %v1426
        %v1428 = vsub.f32 1.0, %v1427
        %v1429 = vmul.f32 %v1426, %v1428
        %v1430 = vadd.f32 %v1426, %v1429
        %vm1431 = vweird.f32 %v1425
        %vm1432 = vweird.f32 %v1426
        %vm1433 = vmor %vm1431, %vm1432
        %v1434 = vsel %vm1433, %v1426, %v1430
        %v1435 = vand.u32 2147483647, %v1425
        %vm1436 = vcmp.eq.f32.partialorder %v1435, 8.507059e+37
        %v1437 = vand.u32 %v1425, 2147483648
        %v1438 = vor.u32 1.1754944e-38, %v1437
        %v1439 = vsel %vm1436, %v1438, %v1434
        %v1440 = vmul.f32 %v1424, %v1439
        %v1441 = vsub.f32 %v953, %v1107
        %v1442 = vmul.f32 %v1440, %v1441
        %v1443 = vadd.f32 %v1107, %v1442
        %v1444 = vsub.f32 %v1262, %v1417
        %v1445 = vmul.f32 %v1440, %v1444
        %v1446 = vadd.f32 %v1417, %v1445
        %v1447 = vand.u32 2147483647, %v1443
        %vm1448 = vcmp.lt.f32.partialorder %v1447, 0.001
        %v1449 = vsel %vm1448, 0.001, %v1443
        %v1450 = vrcp.pop %v1449
        %v1451 = vmul.f32 %v1449, %v1450
        %v1452 = vsub.f32 1.0, %v1451
        %v1453 = vmul.f32 %v1450, %v1452
        %v1454 = vadd.f32 %v1450, %v1453
        %vm1455 = vweird.f32 %v1449
        %vm1456 = vweird.f32 %v1450
        %vm1457 = vmor %vm1455, %vm1456
        %v1458 = vsel %vm1457, %v1450, %v1454
        %v1459 = vand.u32 2147483647, %v1449
        %vm1460 = vcmp.eq.f32.partialorder %v1459, 8.507059e+37
        %v1461 = vand.u32 %v1449, 2147483648
        %v1462 = vor.u32 1.1754944e-38, %v1461
        %v1463 = vsel %vm1460, %v1462, %v1458
        %v1464 = vmul.f32 %v1446, %v1463
        %v1465 = vand.u32 2147483647, %v1464
        %vm1466 = vcmp.gt.f32.partialorder %v1465, 2.4142137
        %vm1467 = vcmp.gt.f32.partialorder %v1465, 0.41421357
        %vm1468 = vmxor %vm1466, 1
        %vm1469 = vmand %vm1467, %vm1468
        %v1470 = vadd.f32 %v1465, 1e-30
        %v1471 = vrcp.pop %v1470
        %v1472 = vmul.f32 %v1470, %v1471
        %v1473 = vsub.f32 1.0, %v1472
        %v1474 = vmul.f32 %v1471, %v1473
        %v1475 = vadd.f32 %v1471, %v1474
        %vm1476 = vweird.f32 %v1470
        %vm1477 = vweird.f32 %v1471
        %vm1478 = vmor %vm1476, %vm1477
        %v1479 = vsel %vm1478, %v1471, %v1475
        %v1480 = vand.u32 2147483647, %v1470
        %vm1481 = vcmp.eq.f32.partialorder %v1480, 8.507059e+37
        %v1482 = vand.u32 %v1470, 2147483648
        %v1483 = vor.u32 1.1754944e-38, %v1482
        %v1484 = vsel %vm1481, %v1483, %v1479
        %v1485 = vmul.f32 -1.0, %v1484
        %v1486 = vsub.f32 %v1465, 1.0
        %v1487 = vadd.f32 %v1465, 1.0
        %v1488 = vrcp.pop %v1487
        %v1489 = vmul.f32 %v1487, %v1488
        %v1490 = vsub.f32 1.0, %v1489
        %v1491 = vmul.f32 %v1488, %v1490
        %v1492 = vadd.f32 %v1488, %v1491
        %vm1493 = vweird.f32 %v1487
        %vm1494 = vweird.f32 %v1488
        %vm1495 = vmor %vm1493, %vm1494
        %v1496 = vsel %vm1495, %v1488, %v1492
        %v1497 = vand.u32 2147483647, %v1487
        %vm1498 = vcmp.eq.f32.partialorder %v1497, 8.507059e+37
        %v1499 = vand.u32 %v1487, 2147483648
        %v1500 = vor.u32 1.1754944e-38, %v1499
        %v1501 = vsel %vm1498, %v1500, %v1496
        %v1502 = vmul.f32 %v1486, %v1501
        %v1503 = vsel %vm1469, %v1502, %v1465
        %v1504 = vsel %vm1466, %v1485, %v1503
        %v1505 = vsel %vm1469, 0.7853982, 0.0
        %v1506 = vsel %vm1466, 1.5707964, %v1505
        %v1507 = vmul.f32 %v1504, %v1504
        %v1508 = vmul.f32 %v1507, 0.080537446
        %v1509 = vsub.f32 %v1508, 0.13877685
        %v1510 = vmul.f32 %v1509, %v1507
        %v1511 = vadd.f32 %v1510, 0.19977711
        %v1512 = vmul.f32 %v1511, %v1507
        %v1513 = vsub.f32 %v1512, 0.3333295
        %v1514 = vmul.f32 %v1513, %v1507
        %v1515 = vmul.f32 %v1514, %v1504
        %v1516 = vadd.f32 %v1515, %v1504
        %v1517 = vadd.f32 %v1506, %v1516
        %vm1518 = vcmp.lt.f32.partialorder %v1464, 0.0
        %v1519 = vsub.f32 0.0, %v1517
        %v1520 = vsel %vm1518, %v1519, %v1517
        %vm1521 = vcmp.lt.f32.partialorder %v1449, 0.0
        %vm1522 = vcmp.lt.f32.partialorder %v1446, 0.0
        %vm1523 = vmxor %vm1522, 1
        %vm1524 = vmand %vm1521, %vm1523
        %v1525 = vadd.f32 %v1520, 3.1415927
        %v1526 = vsel %vm1524, %v1525, %v1520
        %vm1527 = vmand %vm1521, %vm1522
        %v1528 = vsub.f32 %v1526, 3.1415927
        %v1529 = vsel %vm1527, %v1528, %v1526
        %1530 = vst.msk [vmem:[%s459] sm:$0xff] %vm502, %v1529
        %s1531 = sand.u32 %s235, 1
        %s1532 = scalar_lea.sflag [#allocation5], %s1531
        %s1533 = sand.u32 %s235, 1
        %s1534 = smul.addr %s1533, 8
        %s1535 = scalar_lea.vmem [#allocation4], %s1534
        %s1536 = sand.u32 %s261, 1
        %s1537 = scalar_lea.sflag [#allocation7], %s1536
        %s1538 = sand.u32 %s261, 1
        %s1539 = smul.addr %s1538, 8
        %s1540 = scalar_lea.vmem [#allocation6], %s1539
        // Predicated region
        $region133: #{tpu_custom_call.1} parent=123 // pred_check
          %p1541 = pneg %p245
        $region134: #{tpu_custom_call.1} parent=123 // pred_check_branch
          %1543 = sbr.rel (%p1541) target = $region136
        $region135: #{tpu_custom_call.1} parent=123 // pred_region
          %1545 = vsyncadd %s1532, 0
          %s1546 = smul.addr %s28, 8
          %s1547 = scalar_lea.hbm %s9, %s1546
          %s1549 = sshll.u32 %s1535, 4
          %s1550 = int_to_ptr.vmem [resolvable:$true] %s1549
          %s1551 = sshll.u32 %s1547, 4
          %s1552 = int_to_ptr.hbm [resolvable:$true] %s1551
          %1554 = dma.vmem_to_hbm [thread:$0]  %s1550, 128, %s1552, %s1532
        $region136: #{tpu_custom_call.1} parent=123 // pred_fallthru
          _
        // Predicated region
        $region137: #{tpu_custom_call.1} parent=123 // pred_check
          %p1555 = pneg %p271
        $region138: #{tpu_custom_call.1} parent=123 // pred_check_branch
          %1557 = sbr.rel (%p1555) target = $region140
        $region139: #{tpu_custom_call.1} parent=123 // pred_region
          %1559 = vsyncadd %s1537, 0
          %s1560 = smul.addr %s28, 8
          %s1561 = scalar_lea.hbm %s10, %s1560
          %s1563 = sshll.u32 %s1540, 4
          %s1564 = int_to_ptr.vmem [resolvable:$true] %s1563
          %s1565 = sshll.u32 %s1561, 4
          %s1566 = int_to_ptr.hbm [resolvable:$true] %s1565
          %1568 = dma.vmem_to_hbm [thread:$0]  %s1564, 128, %s1566, %s1537
        $region140: #{tpu_custom_call.1} parent=123 // pred_fallthru
          _
      $region124: #{tpu_custom_call.1} parent=5 // pred_fallthru
        _
      %p1569 = scmp.le.s32.totalorder 2, %s23
      // Predicated region
      $region141: #{tpu_custom_call.1} parent=5 // pred_check
        %p1570 = pneg %p1569
      $region142: #{tpu_custom_call.1} parent=5 // pred_check_branch
        %1572 = sbr.rel (%p1570) target = $region144
      $region143: #{tpu_custom_call.1} parent=5 // pred_region
        %s1573 = ssub.s32 %s23, 2
        // Predicated region
        $region145: #{tpu_custom_call.1} parent=143 // pred_check
          %p1574 = pneg %p251
        $region146: #{tpu_custom_call.1} parent=143 // pred_check_branch
          %1576 = sbr.rel (%p1574) target = $region148
        $region147: #{tpu_custom_call.1} parent=143 // pred_region
          %s1577 = sand.u32 %s236, 1
          %s1578 = scalar_lea.sflag [#allocation5], %s1577
          %s1579 = sand.u32 %s236, 1
          %s1580 = smul.addr %s1579, 8
          %s1581 = scalar_lea.vmem [#allocation4], %s1580
          %1583 = dma.done %s1578, 128
        $region148: #{tpu_custom_call.1} parent=143 // pred_fallthru
          _
        // Predicated region
        $region149: #{tpu_custom_call.1} parent=143 // pred_check
          %p1584 = pneg %p277
        $region150: #{tpu_custom_call.1} parent=143 // pred_check_branch
          %1586 = sbr.rel (%p1584) target = $region152
        $region151: #{tpu_custom_call.1} parent=143 // pred_region
          %s1587 = sand.u32 %s262, 1
          %s1588 = scalar_lea.sflag [#allocation7], %s1587
          %s1589 = sand.u32 %s262, 1
          %s1590 = smul.addr %s1589, 8
          %s1591 = scalar_lea.vmem [#allocation6], %s1590
          %1593 = dma.done %s1588, 128
        $region152: #{tpu_custom_call.1} parent=143 // pred_fallthru
          _
      $region144: #{tpu_custom_call.1} parent=5 // pred_fallthru
        _
    $region6: #{tpu_custom_call.1} parent=1 // loop_footer
      %s27 = sadd.s32 1, %s23
    $region7: #{tpu_custom_call.1} parent=1 // loop_footer_branch
      %22 = sbr.rel target = $region3
    $region8: #{tpu_custom_call.1} parent=1 // loop_exit
      _
    %1594 = vsyncpa [#allocation5], 1
    %s1595 = scalar_lea.sflag [#allocation5], 1
    %1596 = vsyncpa %s1595, 1
    %1597 = vsyncpa [#allocation7], 1
    %s1598 = scalar_lea.sflag [#allocation7], 1
    %1599 = vsyncpa %s1598, 1

</llo_original>
